<compile_context>
chip_gen: v7x
topology: tpu7x:2x2x1
jax: 0.10.0
libtpu: 0.0.40
codegen_flags: <defaults>
</compile_context>

<pallas_src>
import functools

import jax
import jax.numpy as jnp
from jax import lax
from jax.experimental import pallas as pl
from jax.experimental.pallas import tpu as pltpu

T_DROP = 12  # hard-coded `out[12:]` slice in the PyTorch module


def rnn_fc_kernel(x_ref, wih0_ref, whh0_ref, b0_ref,
                  wih1_ref, whh1_ref, b1_ref,
                  wfc_ref, bfc_ref,
                  out_ref,
                  pre_scr, seq_scr,
                  *, seq_len, batch):
    """Two-layer tanh RNN + tail-slice + Linear, entirely in VMEM.

    x_ref:    (T*B, D_in)  (sequence-major rows, lane-dense features)
    wih0_ref: (D_in, H)   whh0_ref: (H, H)   b0_ref: (1, H)  (= b_ih + b_hh)
    wih1_ref: (H, H)      whh1_ref: (H, H)   b1_ref: (1, H)
    wfc_ref:  (H, O)      bfc_ref:  (1, O)
    out_ref:  ((T-12)*B, O)
    pre_scr:  (T*B, H) scratch (hoisted input-to-hidden projection)
    seq_scr:  (T*B, H) scratch (per-layer output sequence)
    """
    T, B = seq_len, batch
    H = whh0_ref.shape[0]

    # ---------------- RNN layer 0 ----------------
    # Hoisted projection + fused bias: one batched matmul for all T steps.
    pre_scr[...] = (jnp.dot(x_ref[...], wih0_ref[...],
                            preferred_element_type=jnp.float32)
                    + b0_ref[...])

    whh0 = whh0_ref[...]                       # hoist loop-invariant load
    h = jnp.zeros((B, H), jnp.float32)         # hidden state lives in vregs
    for t in range(T):                         # fully unrolled, static offsets
        pre_t = pre_scr[pl.ds(t * B, B), :]
        h = jnp.tanh(pre_t + jnp.dot(h, whh0,
                                     preferred_element_type=jnp.float32))
        seq_scr[pl.ds(t * B, B), :] = h

    # ---------------- RNN layer 1 ----------------
    # Hoisted projection of the full layer-0 sequence (reads seq_scr, writes
    # pre_scr — distinct buffers, no in-place aliasing between layers).
    pre_scr[...] = (jnp.dot(seq_scr[...], wih1_ref[...],
                            preferred_element_type=jnp.float32)
                    + b1_ref[...])

    whh1 = whh1_ref[...]
    h = jnp.zeros((B, H), jnp.float32)
    for t in range(T):
        pre_t = pre_scr[pl.ds(t * B, B), :]
        h = jnp.tanh(pre_t + jnp.dot(h, whh1,
                                     preferred_element_type=jnp.float32))
        seq_scr[pl.ds(t * B, B), :] = h

    # ------------- out[12:] + Linear: one matmul + one store --------------
    tail = seq_scr[pl.ds(T_DROP * B, (T - T_DROP) * B), :]
    out_ref[...] = (jnp.dot(tail, wfc_ref[...],
                            preferred_element_type=jnp.float32)
                    + bfc_ref[...])


def rnn_model_forward(x, params):
    """Wrapper: whole problem (~20 KB) fits in VMEM; single grid-less pallas_call."""
    T, B, D_in = x.shape
    H = params["whh0"].shape[0]
    O = params["wfc"].shape[1]
    t_out = T - T_DROP

    x2d = x.reshape(T * B, D_in)               # lane-dense (T*B, D_in) slab

    args = (x2d,
            params["wih0"], params["whh0"], params["b0"],
            params["wih1"], params["whh1"], params["b1"],
            params["wfc"], params["bfc"])

    vmem_spec = pl.BlockSpec(memory_space=pltpu.MemorySpace.VMEM)
    out2d = pl.pallas_call(
        functools.partial(rnn_fc_kernel, seq_len=T, batch=B),
        out_shape=jax.ShapeDtypeStruct((t_out * B, O), jnp.float32),
        in_specs=[vmem_spec] * len(args),
        out_specs=vmem_spec,
        scratch_shapes=[
            pltpu.VMEM((T * B, H), jnp.float32),   # hoisted projection slab
            pltpu.VMEM((T * B, H), jnp.float32),   # per-layer output sequence
        ],
    )(*args)
    return out2d.reshape(t_out, B, O)


def make_params(key, in_dim, hidden_dim, out_dim):
    """Deterministic synthetic init mirroring the module's __init__ shapes.

    RNN weights: orthogonal scaled by sqrt(1/hidden) (as in weightInit).
    Biases / fc: PyTorch-default-style uniform(-1/sqrt(fan_in), 1/sqrt(fan_in)).
    Weights are stored pre-transposed for `x @ W`.
    """
    ks = jax.random.split(key, 10)
    gain = float(jnp.sqrt(1.0 / hidden_dim))
    ortho = jax.nn.initializers.orthogonal(scale=gain)
    bnd_h = 1.0 / jnp.sqrt(hidden_dim)

    def unif(k, shape, bnd):
        return jax.random.uniform(k, shape, jnp.float32, -bnd, bnd)

    params = {
        # layer 0
        "wih0": ortho(ks[0], (in_dim, hidden_dim), jnp.float32),
        "whh0": ortho(ks[1], (hidden_dim, hidden_dim), jnp.float32),
        "b0":   unif(ks[2], (1, hidden_dim), bnd_h) + unif(ks[3], (1, hidden_dim), bnd_h),
        # layer 1
        "wih1": ortho(ks[4], (hidden_dim, hidden_dim), jnp.float32),
        "whh1": ortho(ks[5], (hidden_dim, hidden_dim), jnp.float32),
        "b1":   unif(ks[6], (1, hidden_dim), bnd_h) + unif(ks[7], (1, hidden_dim), bnd_h),
        # fc layer (Linear(hidden, out)): weight (O, H) transposed -> (H, O)
        "wfc":  unif(ks[8], (hidden_dim, out_dim), bnd_h),
        "bfc":  unif(ks[9], (1, out_dim), bnd_h),
    }
    return params


def ref_forward(x, p):
    """Pure-JAX reference (same math as PyTorch nn.RNN tanh, 2 layers, h0=0)."""
    B = x.shape[1]
    H = p["whh0"].shape[0]
    h0 = jnp.zeros((B, H), jnp.float32)

    def scan0(h, xt):
        h = jnp.tanh(xt @ p["wih0"] + h @ p["whh0"] + p["b0"])
        return h, h

    def scan1(h, xt):
        h = jnp.tanh(xt @ p["wih1"] + h @ p["whh1"] + p["b1"])
        return h, h

    _, seq0 = lax.scan(scan0, h0, x)
    _, seq1 = lax.scan(scan1, h0, seq0)
    return seq1[T_DROP:] @ p["wfc"] + p["bfc"]


if __name__ == "__main__":
    # Small shapes implied by the forward: seq len must exceed 12 (out[12:]).
    T, B = 16, 2
    in_dim, hidden_dim, out_dim = 8, 32, 4

    key = jax.random.PRNGKey(0)
    kx, kp = jax.random.split(key)
    x = jax.random.normal(kx, (T, B, in_dim), jnp.float32)
    params = make_params(kp, in_dim, hidden_dim, out_dim)

    out = rnn_model_forward(x, params)
    out = jax.block_until_ready(out)

    ref = ref_forward(x, params)
    assert out.shape == (T - T_DROP, B, out_dim), out.shape
    assert jnp.allclose(out, ref, atol=1e-5, rtol=1e-5), (
        float(jnp.max(jnp.abs(out - ref))))
    print("KERNEL_OK")
</pallas_src>

<mosaic_0001>
module attributes {stable_mosaic.version = 11 : i64} {
  func.func @rnn_fc_kernel(%arg0: memref<32x8xf32, #tpu.memory_space<vmem>>, %arg1: memref<8x32xf32, #tpu.memory_space<vmem>>, %arg2: memref<32x32xf32, #tpu.memory_space<vmem>>, %arg3: memref<1x32xf32, #tpu.memory_space<vmem>>, %arg4: memref<32x32xf32, #tpu.memory_space<vmem>>, %arg5: memref<32x32xf32, #tpu.memory_space<vmem>>, %arg6: memref<1x32xf32, #tpu.memory_space<vmem>>, %arg7: memref<32x4xf32, #tpu.memory_space<vmem>>, %arg8: memref<1x4xf32, #tpu.memory_space<vmem>>, %arg9: memref<8x4xf32, #tpu.memory_space<vmem>>, %arg10: memref<32x32xf32, #tpu.memory_space<vmem>>, %arg11: memref<32x32xf32, #tpu.memory_space<vmem>>) attributes {dimension_semantics = [], scalar_prefetch = 0 : i64, scratch_operands = 2 : i64, tpu.core_type = #tpu.core_type<tc>} {
    %c0 = arith.constant 0 : index
    %c0_0 = arith.constant 0 : index
    %0 = vector.load %arg0[%c0, %c0_0] : memref<32x8xf32, #tpu.memory_space<vmem>>, vector<32x8xf32>
    %c0_1 = arith.constant 0 : index
    %c0_2 = arith.constant 0 : index
    %1 = vector.load %arg1[%c0_1, %c0_2] : memref<8x32xf32, #tpu.memory_space<vmem>>, vector<8x32xf32>
    %cst = arith.constant dense<0.000000e+00> : vector<32x32xf32>
    %2 = tpu.matmul %0, %1, %cst {dimension_numbers = #tpu.dot_dimension_numbers<[1], [0], [0], [1], [0, 0, 1, 1], [], []>} : vector<32x8xf32>, vector<8x32xf32>, vector<32x32xf32> -> vector<32x32xf32>
    %c0_3 = arith.constant 0 : index
    %c0_4 = arith.constant 0 : index
    %3 = vector.load %arg3[%c0_3, %c0_4] : memref<1x32xf32, #tpu.memory_space<vmem>>, vector<1x32xf32>
    %4 = vector.broadcast %3 : vector<1x32xf32> to vector<32x32xf32>
    %5 = arith.addf %2, %4 : vector<32x32xf32>
    %c0_5 = arith.constant 0 : index
    %c0_6 = arith.constant 0 : index
    %6 = vector.load %arg10[%c0_5, %c0_6] : memref<32x32xf32, #tpu.memory_space<vmem>>, vector<32x32xf32>
    tpu.vector_store %arg10[%c0_5, %c0_6], %5 {strides = array<i32>} : memref<32x32xf32, #tpu.memory_space<vmem>>, vector<32x32xf32>,
    %c0_7 = arith.constant 0 : index
    %c0_8 = arith.constant 0 : index
    %7 = vector.load %arg2[%c0_7, %c0_8] : memref<32x32xf32, #tpu.memory_space<vmem>>, vector<32x32xf32>
    %cst_9 = arith.constant 0.000000e+00 : f32
    %8 = vector.broadcast %cst_9 : f32 to vector<2x32xf32>
    %c0_10 = arith.constant 0 : index
    %c0_11 = arith.constant 0 : index
    %9 = vector.load %arg10[%c0_10, %c0_11] : memref<32x32xf32, #tpu.memory_space<vmem>>, vector<2x32xf32>
    %cst_12 = arith.constant dense<0.000000e+00> : vector<2x32xf32>
    %10 = tpu.matmul %8, %7, %cst_12 {dimension_numbers = #tpu.dot_dimension_numbers<[1], [0], [0], [1], [0, 0, 1, 1], [], []>} : vector<2x32xf32>, vector<32x32xf32>, vector<2x32xf32> -> vector<2x32xf32>
    %11 = arith.addf %9, %10 : vector<2x32xf32>
    %12 = math.tanh %11 : vector<2x32xf32>
    %c0_13 = arith.constant 0 : index
    %c0_14 = arith.constant 0 : index
    %13 = vector.load %arg11[%c0_13, %c0_14] : memref<32x32xf32, #tpu.memory_space<vmem>>, vector<2x32xf32>
    tpu.vector_store %arg11[%c0_13, %c0_14], %12 {strides = array<i32>} : memref<32x32xf32, #tpu.memory_space<vmem>>, vector<2x32xf32>,
    %c2 = arith.constant 2 : index
    %c0_15 = arith.constant 0 : index
    %14 = vector.load %arg10[%c2, %c0_15] : memref<32x32xf32, #tpu.memory_space<vmem>>, vector<2x32xf32>
    %cst_16 = arith.constant dense<0.000000e+00> : vector<2x32xf32>
    %15 = tpu.matmul %12, %7, %cst_16 {dimension_numbers = #tpu.dot_dimension_numbers<[1], [0], [0], [1], [0, 0, 1, 1], [], []>} : vector<2x32xf32>, vector<32x32xf32>, vector<2x32xf32> -> vector<2x32xf32>
    %16 = arith.addf %14, %15 : vector<2x32xf32>
    %17 = math.tanh %16 : vector<2x32xf32>
    %c2_17 = arith.constant 2 : index
    %c0_18 = arith.constant 0 : index
    %18 = vector.load %arg11[%c2_17, %c0_18] : memref<32x32xf32, #tpu.memory_space<vmem>>, vector<2x32xf32>
    tpu.vector_store %arg11[%c2_17, %c0_18], %17 {strides = array<i32>} : memref<32x32xf32, #tpu.memory_space<vmem>>, vector<2x32xf32>,
    %c4 = arith.constant 4 : index
    %c0_19 = arith.constant 0 : index
    %19 = vector.load %arg10[%c4, %c0_19] : memref<32x32xf32, #tpu.memory_space<vmem>>, vector<2x32xf32>
    %cst_20 = arith.constant dense<0.000000e+00> : vector<2x32xf32>
    %20 = tpu.matmul %17, %7, %cst_20 {dimension_numbers = #tpu.dot_dimension_numbers<[1], [0], [0], [1], [0, 0, 1, 1], [], []>} : vector<2x32xf32>, vector<32x32xf32>, vector<2x32xf32> -> vector<2x32xf32>
    %21 = arith.addf %19, %20 : vector<2x32xf32>
    %22 = math.tanh %21 : vector<2x32xf32>
    %c4_21 = arith.constant 4 : index
    %c0_22 = arith.constant 0 : index
    %23 = vector.load %arg11[%c4_21, %c0_22] : memref<32x32xf32, #tpu.memory_space<vmem>>, vector<2x32xf32>
    tpu.vector_store %arg11[%c4_21, %c0_22], %22 {strides = array<i32>} : memref<32x32xf32, #tpu.memory_space<vmem>>, vector<2x32xf32>,
    %c6 = arith.constant 6 : index
    %c0_23 = arith.constant 0 : index
    %24 = vector.load %arg10[%c6, %c0_23] : memref<32x32xf32, #tpu.memory_space<vmem>>, vector<2x32xf32>
    %cst_24 = arith.constant dense<0.000000e+00> : vector<2x32xf32>
    %25 = tpu.matmul %22, %7, %cst_24 {dimension_numbers = #tpu.dot_dimension_numbers<[1], [0], [0], [1], [0, 0, 1, 1], [], []>} : vector<2x32xf32>, vector<32x32xf32>, vector<2x32xf32> -> vector<2x32xf32>
    %26 = arith.addf %24, %25 : vector<2x32xf32>
    %27 = math.tanh %26 : vector<2x32xf32>
    %c6_25 = arith.constant 6 : index
    %c0_26 = arith.constant 0 : index
    %28 = vector.load %arg11[%c6_25, %c0_26] : memref<32x32xf32, #tpu.memory_space<vmem>>, vector<2x32xf32>
    tpu.vector_store %arg11[%c6_25, %c0_26], %27 {strides = array<i32>} : memref<32x32xf32, #tpu.memory_space<vmem>>, vector<2x32xf32>,
    %c8 = arith.constant 8 : index
    %c0_27 = arith.constant 0 : index
    %29 = vector.load %arg10[%c8, %c0_27] : memref<32x32xf32, #tpu.memory_space<vmem>>, vector<2x32xf32>
    %cst_28 = arith.constant dense<0.000000e+00> : vector<2x32xf32>
    %30 = tpu.matmul %27, %7, %cst_28 {dimension_numbers = #tpu.dot_dimension_numbers<[1], [0], [0], [1], [0, 0, 1, 1], [], []>} : vector<2x32xf32>, vector<32x32xf32>, vector<2x32xf32> -> vector<2x32xf32>
    %31 = arith.addf %29, %30 : vector<2x32xf32>
    %32 = math.tanh %31 : vector<2x32xf32>
    %c8_29 = arith.constant 8 : index
    %c0_30 = arith.constant 0 : index
    %33 = vector.load %arg11[%c8_29, %c0_30] : memref<32x32xf32, #tpu.memory_space<vmem>>, vector<2x32xf32>
    tpu.vector_store %arg11[%c8_29, %c0_30], %32 {strides = array<i32>} : memref<32x32xf32, #tpu.memory_space<vmem>>, vector<2x32xf32>,
    %c10 = arith.constant 10 : index
    %c0_31 = arith.constant 0 : index
    %34 = vector.load %arg10[%c10, %c0_31] : memref<32x32xf32, #tpu.memory_space<vmem>>, vector<2x32xf32>
    %cst_32 = arith.constant dense<0.000000e+00> : vector<2x32xf32>
    %35 = tpu.matmul %32, %7, %cst_32 {dimension_numbers = #tpu.dot_dimension_numbers<[1], [0], [0], [1], [0, 0, 1, 1], [], []>} : vector<2x32xf32>, vector<32x32xf32>, vector<2x32xf32> -> vector<2x32xf32>
    %36 = arith.addf %34, %35 : vector<2x32xf32>
    %37 = math.tanh %36 : vector<2x32xf32>
    %c10_33 = arith.constant 10 : index
    %c0_34 = arith.constant 0 : index
    %38 = vector.load %arg11[%c10_33, %c0_34] : memref<32x32xf32, #tpu.memory_space<vmem>>, vector<2x32xf32>
    tpu.vector_store %arg11[%c10_33, %c0_34], %37 {strides = array<i32>} : memref<32x32xf32, #tpu.memory_space<vmem>>, vector<2x32xf32>,
    %c12 = arith.constant 12 : index
    %c0_35 = arith.constant 0 : index
    %39 = vector.load %arg10[%c12, %c0_35] : memref<32x32xf32, #tpu.memory_space<vmem>>, vector<2x32xf32>
    %cst_36 = arith.constant dense<0.000000e+00> : vector<2x32xf32>
    %40 = tpu.matmul %37, %7, %cst_36 {dimension_numbers = #tpu.dot_dimension_numbers<[1], [0], [0], [1], [0, 0, 1, 1], [], []>} : vector<2x32xf32>, vector<32x32xf32>, vector<2x32xf32> -> vector<2x32xf32>
    %41 = arith.addf %39, %40 : vector<2x32xf32>
    %42 = math.tanh %41 : vector<2x32xf32>
    %c12_37 = arith.constant 12 : index
    %c0_38 = arith.constant 0 : index
    %43 = vector.load %arg11[%c12_37, %c0_38] : memref<32x32xf32, #tpu.memory_space<vmem>>, vector<2x32xf32>
    tpu.vector_store %arg11[%c12_37, %c0_38], %42 {strides = array<i32>} : memref<32x32xf32, #tpu.memory_space<vmem>>, vector<2x32xf32>,
    %c14 = arith.constant 14 : index
    %c0_39 = arith.constant 0 : index
    %44 = vector.load %arg10[%c14, %c0_39] : memref<32x32xf32, #tpu.memory_space<vmem>>, vector<2x32xf32>
    %cst_40 = arith.constant dense<0.000000e+00> : vector<2x32xf32>
    %45 = tpu.matmul %42, %7, %cst_40 {dimension_numbers = #tpu.dot_dimension_numbers<[1], [0], [0], [1], [0, 0, 1, 1], [], []>} : vector<2x32xf32>, vector<32x32xf32>, vector<2x32xf32> -> vector<2x32xf32>
    %46 = arith.addf %44, %45 : vector<2x32xf32>
    %47 = math.tanh %46 : vector<2x32xf32>
    %c14_41 = arith.constant 14 : index
    %c0_42 = arith.constant 0 : index
    %48 = vector.load %arg11[%c14_41, %c0_42] : memref<32x32xf32, #tpu.memory_space<vmem>>, vector<2x32xf32>
    tpu.vector_store %arg11[%c14_41, %c0_42], %47 {strides = array<i32>} : memref<32x32xf32, #tpu.memory_space<vmem>>, vector<2x32xf32>,
    %c16 = arith.constant 16 : index
    %c0_43 = arith.constant 0 : index
    %49 = vector.load %arg10[%c16, %c0_43] : memref<32x32xf32, #tpu.memory_space<vmem>>, vector<2x32xf32>
    %cst_44 = arith.constant dense<0.000000e+00> : vector<2x32xf32>
    %50 = tpu.matmul %47, %7, %cst_44 {dimension_numbers = #tpu.dot_dimension_numbers<[1], [0], [0], [1], [0, 0, 1, 1], [], []>} : vector<2x32xf32>, vector<32x32xf32>, vector<2x32xf32> -> vector<2x32xf32>
    %51 = arith.addf %49, %50 : vector<2x32xf32>
    %52 = math.tanh %51 : vector<2x32xf32>
    %c16_45 = arith.constant 16 : index
    %c0_46 = arith.constant 0 : index
    %53 = vector.load %arg11[%c16_45, %c0_46] : memref<32x32xf32, #tpu.memory_space<vmem>>, vector<2x32xf32>
    tpu.vector_store %arg11[%c16_45, %c0_46], %52 {strides = array<i32>} : memref<32x32xf32, #tpu.memory_space<vmem>>, vector<2x32xf32>,
    %c18 = arith.constant 18 : index
    %c0_47 = arith.constant 0 : index
    %54 = vector.load %arg10[%c18, %c0_47] : memref<32x32xf32, #tpu.memory_space<vmem>>, vector<2x32xf32>
    %cst_48 = arith.constant dense<0.000000e+00> : vector<2x32xf32>
    %55 = tpu.matmul %52, %7, %cst_48 {dimension_numbers = #tpu.dot_dimension_numbers<[1], [0], [0], [1], [0, 0, 1, 1], [], []>} : vector<2x32xf32>, vector<32x32xf32>, vector<2x32xf32> -> vector<2x32xf32>
    %56 = arith.addf %54, %55 : vector<2x32xf32>
    %57 = math.tanh %56 : vector<2x32xf32>
    %c18_49 = arith.constant 18 : index
    %c0_50 = arith.constant 0 : index
    %58 = vector.load %arg11[%c18_49, %c0_50] : memref<32x32xf32, #tpu.memory_space<vmem>>, vector<2x32xf32>
    tpu.vector_store %arg11[%c18_49, %c0_50], %57 {strides = array<i32>} : memref<32x32xf32, #tpu.memory_space<vmem>>, vector<2x32xf32>,
    %c20 = arith.constant 20 : index
    %c0_51 = arith.constant 0 : index
    %59 = vector.load %arg10[%c20, %c0_51] : memref<32x32xf32, #tpu.memory_space<vmem>>, vector<2x32xf32>
    %cst_52 = arith.constant dense<0.000000e+00> : vector<2x32xf32>
    %60 = tpu.matmul %57, %7, %cst_52 {dimension_numbers = #tpu.dot_dimension_numbers<[1], [0], [0], [1], [0, 0, 1, 1], [], []>} : vector<2x32xf32>, vector<32x32xf32>, vector<2x32xf32> -> vector<2x32xf32>
    %61 = arith.addf %59, %60 : vector<2x32xf32>
    %62 = math.tanh %61 : vector<2x32xf32>
    %c20_53 = arith.constant 20 : index
    %c0_54 = arith.constant 0 : index
    %63 = vector.load %arg11[%c20_53, %c0_54] : memref<32x32xf32, #tpu.memory_space<vmem>>, vector<2x32xf32>
    tpu.vector_store %arg11[%c20_53, %c0_54], %62 {strides = array<i32>} : memref<32x32xf32, #tpu.memory_space<vmem>>, vector<2x32xf32>,
    %c22 = arith.constant 22 : index
    %c0_55 = arith.constant 0 : index
    %64 = vector.load %arg10[%c22, %c0_55] : memref<32x32xf32, #tpu.memory_space<vmem>>, vector<2x32xf32>
    %cst_56 = arith.constant dense<0.000000e+00> : vector<2x32xf32>
    %65 = tpu.matmul %62, %7, %cst_56 {dimension_numbers = #tpu.dot_dimension_numbers<[1], [0], [0], [1], [0, 0, 1, 1], [], []>} : vector<2x32xf32>, vector<32x32xf32>, vector<2x32xf32> -> vector<2x32xf32>
    %66 = arith.addf %64, %65 : vector<2x32xf32>
    %67 = math.tanh %66 : vector<2x32xf32>
    %c22_57 = arith.constant 22 : index
    %c0_58 = arith.constant 0 : index
    %68 = vector.load %arg11[%c22_57, %c0_58] : memref<32x32xf32, #tpu.memory_space<vmem>>, vector<2x32xf32>
    tpu.vector_store %arg11[%c22_57, %c0_58], %67 {strides = array<i32>} : memref<32x32xf32, #tpu.memory_space<vmem>>, vector<2x32xf32>,
    %c24 = arith.constant 24 : index
    %c0_59 = arith.constant 0 : index
    %69 = vector.load %arg10[%c24, %c0_59] : memref<32x32xf32, #tpu.memory_space<vmem>>, vector<2x32xf32>
    %cst_60 = arith.constant dense<0.000000e+00> : vector<2x32xf32>
    %70 = tpu.matmul %67, %7, %cst_60 {dimension_numbers = #tpu.dot_dimension_numbers<[1], [0], [0], [1], [0, 0, 1, 1], [], []>} : vector<2x32xf32>, vector<32x32xf32>, vector<2x32xf32> -> vector<2x32xf32>
    %71 = arith.addf %69, %70 : vector<2x32xf32>
    %72 = math.tanh %71 : vector<2x32xf32>
    %c24_61 = arith.constant 24 : index
    %c0_62 = arith.constant 0 : index
    %73 = vector.load %arg11[%c24_61, %c0_62] : memref<32x32xf32, #tpu.memory_space<vmem>>, vector<2x32xf32>
    tpu.vector_store %arg11[%c24_61, %c0_62], %72 {strides = array<i32>} : memref<32x32xf32, #tpu.memory_space<vmem>>, vector<2x32xf32>,
    %c26 = arith.constant 26 : index
    %c0_63 = arith.constant 0 : index
    %74 = vector.load %arg10[%c26, %c0_63] : memref<32x32xf32, #tpu.memory_space<vmem>>, vector<2x32xf32>
    %cst_64 = arith.constant dense<0.000000e+00> : vector<2x32xf32>
    %75 = tpu.matmul %72, %7, %cst_64 {dimension_numbers = #tpu.dot_dimension_numbers<[1], [0], [0], [1], [0, 0, 1, 1], [], []>} : vector<2x32xf32>, vector<32x32xf32>, vector<2x32xf32> -> vector<2x32xf32>
    %76 = arith.addf %74, %75 : vector<2x32xf32>
    %77 = math.tanh %76 : vector<2x32xf32>
    %c26_65 = arith.constant 26 : index
    %c0_66 = arith.constant 0 : index
    %78 = vector.load %arg11[%c26_65, %c0_66] : memref<32x32xf32, #tpu.memory_space<vmem>>, vector<2x32xf32>
    tpu.vector_store %arg11[%c26_65, %c0_66], %77 {strides = array<i32>} : memref<32x32xf32, #tpu.memory_space<vmem>>, vector<2x32xf32>,
    %c28 = arith.constant 28 : index
    %c0_67 = arith.constant 0 : index
    %79 = vector.load %arg10[%c28, %c0_67] : memref<32x32xf32, #tpu.memory_space<vmem>>, vector<2x32xf32>
    %cst_68 = arith.constant dense<0.000000e+00> : vector<2x32xf32>
    %80 = tpu.matmul %77, %7, %cst_68 {dimension_numbers = #tpu.dot_dimension_numbers<[1], [0], [0], [1], [0, 0, 1, 1], [], []>} : vector<2x32xf32>, vector<32x32xf32>, vector<2x32xf32> -> vector<2x32xf32>
    %81 = arith.addf %79, %80 : vector<2x32xf32>
    %82 = math.tanh %81 : vector<2x32xf32>
    %c28_69 = arith.constant 28 : index
    %c0_70 = arith.constant 0 : index
    %83 = vector.load %arg11[%c28_69, %c0_70] : memref<32x32xf32, #tpu.memory_space<vmem>>, vector<2x32xf32>
    tpu.vector_store %arg11[%c28_69, %c0_70], %82 {strides = array<i32>} : memref<32x32xf32, #tpu.memory_space<vmem>>, vector<2x32xf32>,
    %c30 = arith.constant 30 : index
    %c0_71 = arith.constant 0 : index
    %84 = vector.load %arg10[%c30, %c0_71] : memref<32x32xf32, #tpu.memory_space<vmem>>, vector<2x32xf32>
    %cst_72 = arith.constant dense<0.000000e+00> : vector<2x32xf32>
    %85 = tpu.matmul %82, %7, %cst_72 {dimension_numbers = #tpu.dot_dimension_numbers<[1], [0], [0], [1], [0, 0, 1, 1], [], []>} : vector<2x32xf32>, vector<32x32xf32>, vector<2x32xf32> -> vector<2x32xf32>
    %86 = arith.addf %84, %85 : vector<2x32xf32>
    %87 = math.tanh %86 : vector<2x32xf32>
    %c30_73 = arith.constant 30 : index
    %c0_74 = arith.constant 0 : index
    %88 = vector.load %arg11[%c30_73, %c0_74] : memref<32x32xf32, #tpu.memory_space<vmem>>, vector<2x32xf32>
    tpu.vector_store %arg11[%c30_73, %c0_74], %87 {strides = array<i32>} : memref<32x32xf32, #tpu.memory_space<vmem>>, vector<2x32xf32>,
    %c0_75 = arith.constant 0 : index
    %c0_76 = arith.constant 0 : index
    %89 = vector.load %arg11[%c0_75, %c0_76] : memref<32x32xf32, #tpu.memory_space<vmem>>, vector<32x32xf32>
    %c0_77 = arith.constant 0 : index
    %c0_78 = arith.constant 0 : index
    %90 = vector.load %arg4[%c0_77, %c0_78] : memref<32x32xf32, #tpu.memory_space<vmem>>, vector<32x32xf32>
    %cst_79 = arith.constant dense<0.000000e+00> : vector<32x32xf32>
    %91 = tpu.matmul %89, %90, %cst_79 {dimension_numbers = #tpu.dot_dimension_numbers<[1], [0], [0], [1], [0, 0, 1, 1], [], []>} : vector<32x32xf32>, vector<32x32xf32>, vector<32x32xf32> -> vector<32x32xf32>
    %c0_80 = arith.constant 0 : index
    %c0_81 = arith.constant 0 : index
    %92 = vector.load %arg6[%c0_80, %c0_81] : memref<1x32xf32, #tpu.memory_space<vmem>>, vector<1x32xf32>
    %93 = vector.broadcast %92 : vector<1x32xf32> to vector<32x32xf32>
    %94 = arith.addf %91, %93 : vector<32x32xf32>
    %c0_82 = arith.constant 0 : index
    %c0_83 = arith.constant 0 : index
    %95 = vector.load %arg10[%c0_82, %c0_83] : memref<32x32xf32, #tpu.memory_space<vmem>>, vector<32x32xf32>
    tpu.vector_store %arg10[%c0_82, %c0_83], %94 {strides = array<i32>} : memref<32x32xf32, #tpu.memory_space<vmem>>, vector<32x32xf32>,
    %c0_84 = arith.constant 0 : index
    %c0_85 = arith.constant 0 : index
    %96 = vector.load %arg5[%c0_84, %c0_85] : memref<32x32xf32, #tpu.memory_space<vmem>>, vector<32x32xf32>
    %cst_86 = arith.constant 0.000000e+00 : f32
    %97 = vector.broadcast %cst_86 : f32 to vector<2x32xf32>
    %c0_87 = arith.constant 0 : index
    %c0_88 = arith.constant 0 : index
    %98 = vector.load %arg10[%c0_87, %c0_88] : memref<32x32xf32, #tpu.memory_space<vmem>>, vector<2x32xf32>
    %cst_89 = arith.constant dense<0.000000e+00> : vector<2x32xf32>
    %99 = tpu.matmul %97, %96, %cst_89 {dimension_numbers = #tpu.dot_dimension_numbers<[1], [0], [0], [1], [0, 0, 1, 1], [], []>} : vector<2x32xf32>, vector<32x32xf32>, vector<2x32xf32> -> vector<2x32xf32>
    %100 = arith.addf %98, %99 : vector<2x32xf32>
    %101 = math.tanh %100 : vector<2x32xf32>
    %c0_90 = arith.constant 0 : index
    %c0_91 = arith.constant 0 : index
    %102 = vector.load %arg11[%c0_90, %c0_91] : memref<32x32xf32, #tpu.memory_space<vmem>>, vector<2x32xf32>
    tpu.vector_store %arg11[%c0_90, %c0_91], %101 {strides = array<i32>} : memref<32x32xf32, #tpu.memory_space<vmem>>, vector<2x32xf32>,
    %c2_92 = arith.constant 2 : index
    %c0_93 = arith.constant 0 : index
    %103 = vector.load %arg10[%c2_92, %c0_93] : memref<32x32xf32, #tpu.memory_space<vmem>>, vector<2x32xf32>
    %cst_94 = arith.constant dense<0.000000e+00> : vector<2x32xf32>
    %104 = tpu.matmul %101, %96, %cst_94 {dimension_numbers = #tpu.dot_dimension_numbers<[1], [0], [0], [1], [0, 0, 1, 1], [], []>} : vector<2x32xf32>, vector<32x32xf32>, vector<2x32xf32> -> vector<2x32xf32>
    %105 = arith.addf %103, %104 : vector<2x32xf32>
    %106 = math.tanh %105 : vector<2x32xf32>
    %c2_95 = arith.constant 2 : index
    %c0_96 = arith.constant 0 : index
    %107 = vector.load %arg11[%c2_95, %c0_96] : memref<32x32xf32, #tpu.memory_space<vmem>>, vector<2x32xf32>
    tpu.vector_store %arg11[%c2_95, %c0_96], %106 {strides = array<i32>} : memref<32x32xf32, #tpu.memory_space<vmem>>, vector<2x32xf32>,
    %c4_97 = arith.constant 4 : index
    %c0_98 = arith.constant 0 : index
    %108 = vector.load %arg10[%c4_97, %c0_98] : memref<32x32xf32, #tpu.memory_space<vmem>>, vector<2x32xf32>
    %cst_99 = arith.constant dense<0.000000e+00> : vector<2x32xf32>
    %109 = tpu.matmul %106, %96, %cst_99 {dimension_numbers = #tpu.dot_dimension_numbers<[1], [0], [0], [1], [0, 0, 1, 1], [], []>} : vector<2x32xf32>, vector<32x32xf32>, vector<2x32xf32> -> vector<2x32xf32>
    %110 = arith.addf %108, %109 : vector<2x32xf32>
    %111 = math.tanh %110 : vector<2x32xf32>
    %c4_100 = arith.constant 4 : index
    %c0_101 = arith.constant 0 : index
    %112 = vector.load %arg11[%c4_100, %c0_101] : memref<32x32xf32, #tpu.memory_space<vmem>>, vector<2x32xf32>
    tpu.vector_store %arg11[%c4_100, %c0_101], %111 {strides = array<i32>} : memref<32x32xf32, #tpu.memory_space<vmem>>, vector<2x32xf32>,
    %c6_102 = arith.constant 6 : index
    %c0_103 = arith.constant 0 : index
    %113 = vector.load %arg10[%c6_102, %c0_103] : memref<32x32xf32, #tpu.memory_space<vmem>>, vector<2x32xf32>
    %cst_104 = arith.constant dense<0.000000e+00> : vector<2x32xf32>
    %114 = tpu.matmul %111, %96, %cst_104 {dimension_numbers = #tpu.dot_dimension_numbers<[1], [0], [0], [1], [0, 0, 1, 1], [], []>} : vector<2x32xf32>, vector<32x32xf32>, vector<2x32xf32> -> vector<2x32xf32>
    %115 = arith.addf %113, %114 : vector<2x32xf32>
    %116 = math.tanh %115 : vector<2x32xf32>
    %c6_105 = arith.constant 6 : index
    %c0_106 = arith.constant 0 : index
    %117 = vector.load %arg11[%c6_105, %c0_106] : memref<32x32xf32, #tpu.memory_space<vmem>>, vector<2x32xf32>
    tpu.vector_store %arg11[%c6_105, %c0_106], %116 {strides = array<i32>} : memref<32x32xf32, #tpu.memory_space<vmem>>, vector<2x32xf32>,
    %c8_107 = arith.constant 8 : index
    %c0_108 = arith.constant 0 : index
    %118 = vector.load %arg10[%c8_107, %c0_108] : memref<32x32xf32, #tpu.memory_space<vmem>>, vector<2x32xf32>
    %cst_109 = arith.constant dense<0.000000e+00> : vector<2x32xf32>
    %119 = tpu.matmul %116, %96, %cst_109 {dimension_numbers = #tpu.dot_dimension_numbers<[1], [0], [0], [1], [0, 0, 1, 1], [], []>} : vector<2x32xf32>, vector<32x32xf32>, vector<2x32xf32> -> vector<2x32xf32>
    %120 = arith.addf %118, %119 : vector<2x32xf32>
    %121 = math.tanh %120 : vector<2x32xf32>
    %c8_110 = arith.constant 8 : index
    %c0_111 = arith.constant 0 : index
    %122 = vector.load %arg11[%c8_110, %c0_111] : memref<32x32xf32, #tpu.memory_space<vmem>>, vector<2x32xf32>
    tpu.vector_store %arg11[%c8_110, %c0_111], %121 {strides = array<i32>} : memref<32x32xf32, #tpu.memory_space<vmem>>, vector<2x32xf32>,
    %c10_112 = arith.constant 10 : index
    %c0_113 = arith.constant 0 : index
    %123 = vector.load %arg10[%c10_112, %c0_113] : memref<32x32xf32, #tpu.memory_space<vmem>>, vector<2x32xf32>
    %cst_114 = arith.constant dense<0.000000e+00> : vector<2x32xf32>
    %124 = tpu.matmul %121, %96, %cst_114 {dimension_numbers = #tpu.dot_dimension_numbers<[1], [0], [0], [1], [0, 0, 1, 1], [], []>} : vector<2x32xf32>, vector<32x32xf32>, vector<2x32xf32> -> vector<2x32xf32>
    %125 = arith.addf %123, %124 : vector<2x32xf32>
    %126 = math.tanh %125 : vector<2x32xf32>
    %c10_115 = arith.constant 10 : index
    %c0_116 = arith.constant 0 : index
    %127 = vector.load %arg11[%c10_115, %c0_116] : memref<32x32xf32, #tpu.memory_space<vmem>>, vector<2x32xf32>
    tpu.vector_store %arg11[%c10_115, %c0_116], %126 {strides = array<i32>} : memref<32x32xf32, #tpu.memory_space<vmem>>, vector<2x32xf32>,
    %c12_117 = arith.constant 12 : index
    %c0_118 = arith.constant 0 : index
    %128 = vector.load %arg10[%c12_117, %c0_118] : memref<32x32xf32, #tpu.memory_space<vmem>>, vector<2x32xf32>
    %cst_119 = arith.constant dense<0.000000e+00> : vector<2x32xf32>
    %129 = tpu.matmul %126, %96, %cst_119 {dimension_numbers = #tpu.dot_dimension_numbers<[1], [0], [0], [1], [0, 0, 1, 1], [], []>} : vector<2x32xf32>, vector<32x32xf32>, vector<2x32xf32> -> vector<2x32xf32>
    %130 = arith.addf %128, %129 : vector<2x32xf32>
    %131 = math.tanh %130 : vector<2x32xf32>
    %c12_120 = arith.constant 12 : index
    %c0_121 = arith.constant 0 : index
    %132 = vector.load %arg11[%c12_120, %c0_121] : memref<32x32xf32, #tpu.memory_space<vmem>>, vector<2x32xf32>
    tpu.vector_store %arg11[%c12_120, %c0_121], %131 {strides = array<i32>} : memref<32x32xf32, #tpu.memory_space<vmem>>, vector<2x32xf32>,
    %c14_122 = arith.constant 14 : index
    %c0_123 = arith.constant 0 : index
    %133 = vector.load %arg10[%c14_122, %c0_123] : memref<32x32xf32, #tpu.memory_space<vmem>>, vector<2x32xf32>
    %cst_124 = arith.constant dense<0.000000e+00> : vector<2x32xf32>
    %134 = tpu.matmul %131, %96, %cst_124 {dimension_numbers = #tpu.dot_dimension_numbers<[1], [0], [0], [1], [0, 0, 1, 1], [], []>} : vector<2x32xf32>, vector<32x32xf32>, vector<2x32xf32> -> vector<2x32xf32>
    %135 = arith.addf %133, %134 : vector<2x32xf32>
    %136 = math.tanh %135 : vector<2x32xf32>
    %c14_125 = arith.constant 14 : index
    %c0_126 = arith.constant 0 : index
    %137 = vector.load %arg11[%c14_125, %c0_126] : memref<32x32xf32, #tpu.memory_space<vmem>>, vector<2x32xf32>
    tpu.vector_store %arg11[%c14_125, %c0_126], %136 {strides = array<i32>} : memref<32x32xf32, #tpu.memory_space<vmem>>, vector<2x32xf32>,
    %c16_127 = arith.constant 16 : index
    %c0_128 = arith.constant 0 : index
    %138 = vector.load %arg10[%c16_127, %c0_128] : memref<32x32xf32, #tpu.memory_space<vmem>>, vector<2x32xf32>
    %cst_129 = arith.constant dense<0.000000e+00> : vector<2x32xf32>
    %139 = tpu.matmul %136, %96, %cst_129 {dimension_numbers = #tpu.dot_dimension_numbers<[1], [0], [0], [1], [0, 0, 1, 1], [], []>} : vector<2x32xf32>, vector<32x32xf32>, vector<2x32xf32> -> vector<2x32xf32>
    %140 = arith.addf %138, %139 : vector<2x32xf32>
    %141 = math.tanh %140 : vector<2x32xf32>
    %c16_130 = arith.constant 16 : index
    %c0_131 = arith.constant 0 : index
    %142 = vector.load %arg11[%c16_130, %c0_131] : memref<32x32xf32, #tpu.memory_space<vmem>>, vector<2x32xf32>
    tpu.vector_store %arg11[%c16_130, %c0_131], %141 {strides = array<i32>} : memref<32x32xf32, #tpu.memory_space<vmem>>, vector<2x32xf32>,
    %c18_132 = arith.constant 18 : index
    %c0_133 = arith.constant 0 : index
    %143 = vector.load %arg10[%c18_132, %c0_133] : memref<32x32xf32, #tpu.memory_space<vmem>>, vector<2x32xf32>
    %cst_134 = arith.constant dense<0.000000e+00> : vector<2x32xf32>
    %144 = tpu.matmul %141, %96, %cst_134 {dimension_numbers = #tpu.dot_dimension_numbers<[1], [0], [0], [1], [0, 0, 1, 1], [], []>} : vector<2x32xf32>, vector<32x32xf32>, vector<2x32xf32> -> vector<2x32xf32>
    %145 = arith.addf %143, %144 : vector<2x32xf32>
    %146 = math.tanh %145 : vector<2x32xf32>
    %c18_135 = arith.constant 18 : index
    %c0_136 = arith.constant 0 : index
    %147 = vector.load %arg11[%c18_135, %c0_136] : memref<32x32xf32, #tpu.memory_space<vmem>>, vector<2x32xf32>
    tpu.vector_store %arg11[%c18_135, %c0_136], %146 {strides = array<i32>} : memref<32x32xf32, #tpu.memory_space<vmem>>, vector<2x32xf32>,
    %c20_137 = arith.constant 20 : index
    %c0_138 = arith.constant 0 : index
    %148 = vector.load %arg10[%c20_137, %c0_138] : memref<32x32xf32, #tpu.memory_space<vmem>>, vector<2x32xf32>
    %cst_139 = arith.constant dense<0.000000e+00> : vector<2x32xf32>
    %149 = tpu.matmul %146, %96, %cst_139 {dimension_numbers = #tpu.dot_dimension_numbers<[1], [0], [0], [1], [0, 0, 1, 1], [], []>} : vector<2x32xf32>, vector<32x32xf32>, vector<2x32xf32> -> vector<2x32xf32>
    %150 = arith.addf %148, %149 : vector<2x32xf32>
    %151 = math.tanh %150 : vector<2x32xf32>
    %c20_140 = arith.constant 20 : index
    %c0_141 = arith.constant 0 : index
    %152 = vector.load %arg11[%c20_140, %c0_141] : memref<32x32xf32, #tpu.memory_space<vmem>>, vector<2x32xf32>
    tpu.vector_store %arg11[%c20_140, %c0_141], %151 {strides = array<i32>} : memref<32x32xf32, #tpu.memory_space<vmem>>, vector<2x32xf32>,
    %c22_142 = arith.constant 22 : index
    %c0_143 = arith.constant 0 : index
    %153 = vector.load %arg10[%c22_142, %c0_143] : memref<32x32xf32, #tpu.memory_space<vmem>>, vector<2x32xf32>
    %cst_144 = arith.constant dense<0.000000e+00> : vector<2x32xf32>
    %154 = tpu.matmul %151, %96, %cst_144 {dimension_numbers = #tpu.dot_dimension_numbers<[1], [0], [0], [1], [0, 0, 1, 1], [], []>} : vector<2x32xf32>, vector<32x32xf32>, vector<2x32xf32> -> vector<2x32xf32>
    %155 = arith.addf %153, %154 : vector<2x32xf32>
    %156 = math.tanh %155 : vector<2x32xf32>
    %c22_145 = arith.constant 22 : index
    %c0_146 = arith.constant 0 : index
    %157 = vector.load %arg11[%c22_145, %c0_146] : memref<32x32xf32, #tpu.memory_space<vmem>>, vector<2x32xf32>
    tpu.vector_store %arg11[%c22_145, %c0_146], %156 {strides = array<i32>} : memref<32x32xf32, #tpu.memory_space<vmem>>, vector<2x32xf32>,
    %c24_147 = arith.constant 24 : index
    %c0_148 = arith.constant 0 : index
    %158 = vector.load %arg10[%c24_147, %c0_148] : memref<32x32xf32, #tpu.memory_space<vmem>>, vector<2x32xf32>
    %cst_149 = arith.constant dense<0.000000e+00> : vector<2x32xf32>
    %159 = tpu.matmul %156, %96, %cst_149 {dimension_numbers = #tpu.dot_dimension_numbers<[1], [0], [0], [1], [0, 0, 1, 1], [], []>} : vector<2x32xf32>, vector<32x32xf32>, vector<2x32xf32> -> vector<2x32xf32>
    %160 = arith.addf %158, %159 : vector<2x32xf32>
    %161 = math.tanh %160 : vector<2x32xf32>
    %c24_150 = arith.constant 24 : index
    %c0_151 = arith.constant 0 : index
    %162 = vector.load %arg11[%c24_150, %c0_151] : memref<32x32xf32, #tpu.memory_space<vmem>>, vector<2x32xf32>
    tpu.vector_store %arg11[%c24_150, %c0_151], %161 {strides = array<i32>} : memref<32x32xf32, #tpu.memory_space<vmem>>, vector<2x32xf32>,
    %c26_152 = arith.constant 26 : index
    %c0_153 = arith.constant 0 : index
    %163 = vector.load %arg10[%c26_152, %c0_153] : memref<32x32xf32, #tpu.memory_space<vmem>>, vector<2x32xf32>
    %cst_154 = arith.constant dense<0.000000e+00> : vector<2x32xf32>
    %164 = tpu.matmul %161, %96, %cst_154 {dimension_numbers = #tpu.dot_dimension_numbers<[1], [0], [0], [1], [0, 0, 1, 1], [], []>} : vector<2x32xf32>, vector<32x32xf32>, vector<2x32xf32> -> vector<2x32xf32>
    %165 = arith.addf %163, %164 : vector<2x32xf32>
    %166 = math.tanh %165 : vector<2x32xf32>
    %c26_155 = arith.constant 26 : index
    %c0_156 = arith.constant 0 : index
    %167 = vector.load %arg11[%c26_155, %c0_156] : memref<32x32xf32, #tpu.memory_space<vmem>>, vector<2x32xf32>
    tpu.vector_store %arg11[%c26_155, %c0_156], %166 {strides = array<i32>} : memref<32x32xf32, #tpu.memory_space<vmem>>, vector<2x32xf32>,
    %c28_157 = arith.constant 28 : index
    %c0_158 = arith.constant 0 : index
    %168 = vector.load %arg10[%c28_157, %c0_158] : memref<32x32xf32, #tpu.memory_space<vmem>>, vector<2x32xf32>
    %cst_159 = arith.constant dense<0.000000e+00> : vector<2x32xf32>
    %169 = tpu.matmul %166, %96, %cst_159 {dimension_numbers = #tpu.dot_dimension_numbers<[1], [0], [0], [1], [0, 0, 1, 1], [], []>} : vector<2x32xf32>, vector<32x32xf32>, vector<2x32xf32> -> vector<2x32xf32>
    %170 = arith.addf %168, %169 : vector<2x32xf32>
    %171 = math.tanh %170 : vector<2x32xf32>
    %c28_160 = arith.constant 28 : index
    %c0_161 = arith.constant 0 : index
    %172 = vector.load %arg11[%c28_160, %c0_161] : memref<32x32xf32, #tpu.memory_space<vmem>>, vector<2x32xf32>
    tpu.vector_store %arg11[%c28_160, %c0_161], %171 {strides = array<i32>} : memref<32x32xf32, #tpu.memory_space<vmem>>, vector<2x32xf32>,
    %c30_162 = arith.constant 30 : index
    %c0_163 = arith.constant 0 : index
    %173 = vector.load %arg10[%c30_162, %c0_163] : memref<32x32xf32, #tpu.memory_space<vmem>>, vector<2x32xf32>
    %cst_164 = arith.constant dense<0.000000e+00> : vector<2x32xf32>
    %174 = tpu.matmul %171, %96, %cst_164 {dimension_numbers = #tpu.dot_dimension_numbers<[1], [0], [0], [1], [0, 0, 1, 1], [], []>} : vector<2x32xf32>, vector<32x32xf32>, vector<2x32xf32> -> vector<2x32xf32>
    %175 = arith.addf %173, %174 : vector<2x32xf32>
    %176 = math.tanh %175 : vector<2x32xf32>
    %c30_165 = arith.constant 30 : index
    %c0_166 = arith.constant 0 : index
    %177 = vector.load %arg11[%c30_165, %c0_166] : memref<32x32xf32, #tpu.memory_space<vmem>>, vector<2x32xf32>
    tpu.vector_store %arg11[%c30_165, %c0_166], %176 {strides = array<i32>} : memref<32x32xf32, #tpu.memory_space<vmem>>, vector<2x32xf32>,
    %c24_167 = arith.constant 24 : index
    %c0_168 = arith.constant 0 : index
    %178 = vector.load %arg11[%c24_167, %c0_168] : memref<32x32xf32, #tpu.memory_space<vmem>>, vector<8x32xf32>
    %c0_169 = arith.constant 0 : index
    %c0_170 = arith.constant 0 : index
    %179 = vector.load %arg7[%c0_169, %c0_170] : memref<32x4xf32, #tpu.memory_space<vmem>>, vector<32x4xf32>
    %cst_171 = arith.constant dense<0.000000e+00> : vector<8x4xf32>
    %180 = tpu.matmul %178, %179, %cst_171 {dimension_numbers = #tpu.dot_dimension_numbers<[1], [0], [0], [1], [0, 0, 1, 1], [], []>} : vector<8x32xf32>, vector<32x4xf32>, vector<8x4xf32> -> vector<8x4xf32>
    %c0_172 = arith.constant 0 : index
    %c0_173 = arith.constant 0 : index
    %181 = vector.load %arg8[%c0_172, %c0_173] : memref<1x4xf32, #tpu.memory_space<vmem>>, vector<1x4xf32>
    %182 = vector.broadcast %181 : vector<1x4xf32> to vector<8x4xf32>
    %183 = arith.addf %180, %182 : vector<8x4xf32>
    %c0_174 = arith.constant 0 : index
    %c0_175 = arith.constant 0 : index
    %184 = vector.load %arg9[%c0_174, %c0_175] : memref<8x4xf32, #tpu.memory_space<vmem>>, vector<8x4xf32>
    tpu.vector_store %arg9[%c0_174, %c0_175], %183 {strides = array<i32>} : memref<8x4xf32, #tpu.memory_space<vmem>>, vector<8x4xf32>,
    return
  }
}

</mosaic_0001>

<llo_original>
// kernel: tpu_custom_call.1
$region0: #{tpu_custom_call.1}
  #allocation0 [shape = 'u32[]', space=smem, size = 0x4, offset = 0x4, fixed_abs, tag = 'smem constant byte address 0x4 - core index']
  #allocation1 [shape = 'u32[144,128]{1,0:T(1,128)}', space=vmem, size = 0x12000, scoped, tag = 'internal scratch']
  #allocation2 [shape = 'f32[32,32]{1,0:T(8,128)}', space=vmem, size = 0x4000, scoped, tag = 'scratch operand']
  #allocation3 [shape = 'f32[32,32]{1,0:T(8,128)}', space=vmem, size = 0x4000, scoped, tag = 'scratch operand']
  %s0 = inlined_call_operand.vmem [shape: f32[32,8], index: 0, kind: input, shape index: {}]
  %s1 = inlined_call_operand.vmem [shape: f32[8,32], index: 1, kind: input, shape index: {}]
  %s2 = inlined_call_operand.vmem [shape: f32[32,32], index: 2, kind: input, shape index: {}]
  %s3 = inlined_call_operand.vmem [shape: f32[1,32], index: 3, kind: input, shape index: {}]
  %s4 = inlined_call_operand.vmem [shape: f32[32,32], index: 4, kind: input, shape index: {}]
  %s5 = inlined_call_operand.hbm [shape: f32[32,32], index: 5, kind: input, shape index: {}]
  %s6 = inlined_call_operand.vmem [shape: f32[1,32], index: 6, kind: input, shape index: {}]
  %s7 = inlined_call_operand.vmem [shape: f32[32,4], index: 7, kind: input, shape index: {}]
  %s8 = inlined_call_operand.vmem [shape: f32[1,4], index: 8, kind: input, shape index: {}]
  %s9 = inlined_call_operand.vmem [shape: f32[8,4], index: 9, kind: output, shape index: {}]
  %s10 = sld [smem:[#allocation0]]
  $region50: #{tpu_custom_call.1} parent=0
    _
  %s12 = ssub.s32 1, %s10
  %s13 = scalar_select 0, %s12, %s10
  $region1: #{tpu_custom_call.1} parent=0
    #allocation4 [shape = 'u8[16384]{0}', space=vmem, size = 0x4000, scoped, tag = 'input window, operand 5, single buffered']
    #allocation5 [shape = 's32[1]{0}', space=sflag, size = 0x4, scoped, tag = 'scoped memory for tpu_custom_call.1']
    %14 = vsyncpa [#allocation5], 0
    // Predicated region
    $region2: #{tpu_custom_call.1} parent=1 // pred_check
      _
    $region3: #{tpu_custom_call.1} parent=1 // pred_check_branch
      %16 = sbr.rel (0) target = $region5
    $region4: #{tpu_custom_call.1} parent=1 // pred_region
      _
    $region5: #{tpu_custom_call.1} parent=1 // pred_fallthru
      _
    // Predicated region
    $region6: #{tpu_custom_call.1} parent=1 // pred_check
      _
    $region7: #{tpu_custom_call.1} parent=1 // pred_check_branch
      %18 = sbr.rel (0) target = $region9
    $region8: #{tpu_custom_call.1} parent=1 // pred_region
      _
    $region9: #{tpu_custom_call.1} parent=1 // pred_fallthru
      _
    // Predicated region
    $region10: #{tpu_custom_call.1} parent=1 // pred_check
      _
    $region11: #{tpu_custom_call.1} parent=1 // pred_check_branch
      %20 = sbr.rel (0) target = $region13
    $region12: #{tpu_custom_call.1} parent=1 // pred_region
      _
    $region13: #{tpu_custom_call.1} parent=1 // pred_fallthru
      _
    // Predicated region
    $region14: #{tpu_custom_call.1} parent=1 // pred_check
      _
    $region15: #{tpu_custom_call.1} parent=1 // pred_check_branch
      %22 = sbr.rel (0) target = $region17
    $region16: #{tpu_custom_call.1} parent=1 // pred_region
      _
    $region17: #{tpu_custom_call.1} parent=1 // pred_fallthru
      _
    // Predicated region
    $region18: #{tpu_custom_call.1} parent=1 // pred_check
      _
    $region19: #{tpu_custom_call.1} parent=1 // pred_check_branch
      %24 = sbr.rel (0) target = $region21
    $region20: #{tpu_custom_call.1} parent=1 // pred_region
      _
    $region21: #{tpu_custom_call.1} parent=1 // pred_fallthru
      _
    // Predicated region
    $region22: #{tpu_custom_call.1} parent=1 // pred_check
      _
    $region23: #{tpu_custom_call.1} parent=1 // pred_check_branch
      %26 = sbr.rel (0) target = $region25
    $region24: #{tpu_custom_call.1} parent=1 // pred_region
      %s28 = ssub.s32 512, 512
      %29 = vsyncadd [#allocation5], %s28
      %s30 = sshll.u32 [#allocation4], 4
      %s31 = int_to_ptr.vmem [resolvable:$true] %s30
      %36 = dma.hbm_to_vmem [thread:$0]  %s5, 512, %s31, [#allocation5], 128, 128, 8
    $region25: #{tpu_custom_call.1} parent=1 // pred_fallthru
      _
    // Predicated region
    $region26: #{tpu_custom_call.1} parent=1 // pred_check
      _
    $region27: #{tpu_custom_call.1} parent=1 // pred_check_branch
      %38 = sbr.rel (0) target = $region29
    $region28: #{tpu_custom_call.1} parent=1 // pred_region
      _
    $region29: #{tpu_custom_call.1} parent=1 // pred_fallthru
      _
    // Predicated region
    $region30: #{tpu_custom_call.1} parent=1 // pred_check
      _
    $region31: #{tpu_custom_call.1} parent=1 // pred_check_branch
      %40 = sbr.rel (0) target = $region33
    $region32: #{tpu_custom_call.1} parent=1 // pred_region
      _
    $region33: #{tpu_custom_call.1} parent=1 // pred_fallthru
      _
    // Predicated region
    $region34: #{tpu_custom_call.1} parent=1 // pred_check
      _
    $region35: #{tpu_custom_call.1} parent=1 // pred_check_branch
      %42 = sbr.rel (0) target = $region37
    $region36: #{tpu_custom_call.1} parent=1 // pred_region
      _
    $region37: #{tpu_custom_call.1} parent=1 // pred_fallthru
      _
    // Predicated region
    $region38: #{tpu_custom_call.1} parent=1 // pred_check
      _
    $region39: #{tpu_custom_call.1} parent=1 // pred_check_branch
      %44 = sbr.rel (0) target = $region41
    $region40: #{tpu_custom_call.1} parent=1 // pred_region
      %45 = dma.done [#allocation5], 512
    $region41: #{tpu_custom_call.1} parent=1 // pred_fallthru
      _
    %v46 = vld [vmem:[%s0] sm:$0xff]
    %v47 = vld [vmem:[%s0 + $0x8] sm:$0xff]
    %v48 = vld [vmem:[%s0 + $0x10] sm:$0xff]
    %v49 = vld [vmem:[%s0 + $0x18] sm:$0xff]
    %v50 = vld [vmem:[%s1] sm:$0xff]
    %v51 = vld [vmem:[%s3] sm:$0x1]
    %v53 = vlaneseq
    %v54 = vshrl.u32 %v53, 7
    %v55 = vsub.s32 0, %v54
    %v56 = vrot.slane %v51, %v55
    %vm58 = vcmask 64512
    %v60 = vsel %vm58, %v46, 0
    %v63 = vsel %vm58, %v47, 0
    %v66 = vsel %vm58, %v48, 0
    %v69 = vsel %vm58, %v49, 0
    %71 = vmatprep.subr.mxu0 0.0
    %72 = vmatpush1.msra.mxu0 %v50
    %73 = vmatprep.subr.mxu0 0.0
    %74 = vmatpush1.msra.mxu0 0.0
    %75 = vmatprep.subr.mxu0 0.0
    %76 = vmatpush1.msra.mxu0 0.0
    %77 = vmatprep.subr.mxu0 0.0
    %78 = vmatpush1.msra.mxu0 0.0
    %79 = vmatprep.subr.mxu0 0.0
    %80 = vmatpush1.msra.mxu0 0.0
    %81 = vmatprep.subr.mxu0 0.0
    %82 = vmatpush1.msra.mxu0 0.0
    %83 = vmatprep.subr.mxu0 0.0
    %84 = vmatpush1.msra.mxu0 0.0
    %85 = vmatprep.subr.mxu0 0.0
    %86 = vmatpush1.msra.mxu0 0.0
    %87 = vmatprep.subr.mxu0 0.0
    %88 = vmatpush1.msra.mxu0 0.0
    %89 = vmatprep.subr.mxu0 0.0
    %90 = vmatpush1.msra.mxu0 0.0
    %91 = vmatprep.subr.mxu0 0.0
    %92 = vmatpush1.msra.mxu0 0.0
    %93 = vmatprep.subr.mxu0 0.0
    %94 = vmatpush1.msra.mxu0 0.0
    %95 = vmatprep.subr.mxu0 0.0
    %96 = vmatpush1.msra.mxu0 0.0
    %97 = vmatprep.subr.mxu0 0.0
    %98 = vmatpush1.msra.mxu0 0.0
    %99 = vmatprep.subr.mxu0 0.0
    %100 = vmatpush1.msra.mxu0 0.0
    %101 = vmatprep.subr.mxu0 0.0
    %102 = vmatpush1.msra.mxu0 0.0
    %103 = vmatprep.subr.mxu0 0.0
    %104 = vmatpush1.msra.mxu0 0.0
    %105 = vmatprep.subr.mxu0 0.0
    %106 = vmatpush1.msra.mxu0 0.0
    %107 = vmatprep.subr.mxu0 0.0
    %108 = vmatpush1.msra.mxu0 0.0
    %109 = vmatprep.subr.mxu0 0.0
    %110 = vmatpush1.msra.mxu0 0.0
    %111 = vmatprep.subr.mxu0 0.0
    %112 = vmatpush1.msra.mxu0 0.0
    %113 = vmatprep.subr.mxu0 0.0
    %114 = vmatpush1.msra.mxu0 0.0
    %115 = vmatprep.subr.mxu0 0.0
    %116 = vmatpush1.msra.mxu0 0.0
    %117 = vmatprep.subr.mxu0 0.0
    %118 = vmatpush1.msra.mxu0 0.0
    %119 = vmatprep.subr.mxu0 0.0
    %120 = vmatpush1.msra.mxu0 0.0
    %121 = vmatprep.subr.mxu0 0.0
    %122 = vmatpush1.msra.mxu0 0.0
    %123 = vmatprep.subr.mxu0 0.0
    %124 = vmatpush1.msra.mxu0 0.0
    %125 = vmatprep.subr.mxu0 0.0
    %126 = vmatpush1.msra.mxu0 0.0
    %127 = vmatprep.subr.mxu0 0.0
    %128 = vmatpush1.msra.mxu0 0.0
    %129 = vmatprep.subr.mxu0 0.0
    %130 = vmatpush1.msra.mxu0 0.0
    %131 = vmatprep.subr.mxu0 0.0
    %132 = vmatpush1.msra.mxu0 0.0
    %133 = vmatprep.subr.mxu0 0.0
    %134 = vmatpush1.msra.mxu0 0.0
    %135 = vmatprep.mubr.f32.mxu0 0.0
    %136 = vmatmul.mubr.f32.gmra.mrb[0].mxu0 %v60
    %v137 = vpop.f32.mrb[0].mxu0
    %v138 = vadd.f32 %v56, %v137
    %v139 = vpop.f32.mrb[0].mxu0
    %140 = vmatprep.mubr.f32.mxu0 0.0
    %141 = vmatmul.mubr.f32.gmra.mrb[0].mxu0 %v63
    %v142 = vpop.f32.mrb[0].mxu0
    %v143 = vadd.f32 %v56, %v142
    %v144 = vpop.f32.mrb[0].mxu0
    %145 = vmatprep.mubr.f32.mxu0 0.0
    %146 = vmatmul.mubr.f32.gmra.mrb[0].mxu0 %v66
    %v147 = vpop.f32.mrb[0].mxu0
    %v148 = vadd.f32 %v56, %v147
    %v149 = vpop.f32.mrb[0].mxu0
    %150 = vmatprep.mubr.f32.mxu0 0.0
    %151 = vmatmul.mubr.f32.gmra.mrb[0].mxu0 %v69
    %v152 = vpop.f32.mrb[0].mxu0
    %v153 = vadd.f32 %v56, %v152
    %v154 = vpop.f32.mrb[0].mxu0
    %155 = vdwg.mxu0
    %vm156 = vcmask 261120
    %157 = vst.msk [vmem:[#allocation2] sm:$0xff] %vm156, %v138
    %158 = vst.msk [vmem:[#allocation2 + $0x8] sm:$0xff] %vm156, %v143
    %159 = vst.msk [vmem:[#allocation2 + $0x10] sm:$0xff] %vm156, %v148
    %160 = vst.msk [vmem:[#allocation2 + $0x18] sm:$0xff] %vm156, %v153
    %v161 = vld [vmem:[%s2] sm:$0xff]
    %v162 = vld [vmem:[%s2 + $0x8] sm:$0xff]
    %v163 = vld [vmem:[%s2 + $0x10] sm:$0xff]
    %v164 = vld [vmem:[%s2 + $0x18] sm:$0xff]
    %v165 = vld [vmem:[#allocation2] sm:$0x3]
    %v167 = vsel %vm156, 0.0, 0
    %169 = vmatprep.subr.mxu0 0.0
    %170 = vmatpush1.msra.mxu0 %v161
    %171 = vmatprep.subr.mxu0 0.0
    %172 = vmatpush1.msra.mxu0 %v162
    %173 = vmatprep.subr.mxu0 0.0
    %174 = vmatpush1.msra.mxu0 %v163
    %175 = vmatprep.subr.mxu0 0.0
    %176 = vmatpush1.msra.mxu0 %v164
    %177 = vmatprep.subr.mxu0 0.0
    %178 = vmatpush1.msra.mxu0 0.0
    %179 = vmatprep.subr.mxu0 0.0
    %180 = vmatpush1.msra.mxu0 0.0
    %181 = vmatprep.subr.mxu0 0.0
    %182 = vmatpush1.msra.mxu0 0.0
    %183 = vmatprep.subr.mxu0 0.0
    %184 = vmatpush1.msra.mxu0 0.0
    %185 = vmatprep.subr.mxu0 0.0
    %186 = vmatpush1.msra.mxu0 0.0
    %187 = vmatprep.subr.mxu0 0.0
    %188 = vmatpush1.msra.mxu0 0.0
    %189 = vmatprep.subr.mxu0 0.0
    %190 = vmatpush1.msra.mxu0 0.0
    %191 = vmatprep.subr.mxu0 0.0
    %192 = vmatpush1.msra.mxu0 0.0
    %193 = vmatprep.subr.mxu0 0.0
    %194 = vmatpush1.msra.mxu0 0.0
    %195 = vmatprep.subr.mxu0 0.0
    %196 = vmatpush1.msra.mxu0 0.0
    %197 = vmatprep.subr.mxu0 0.0
    %198 = vmatpush1.msra.mxu0 0.0
    %199 = vmatprep.subr.mxu0 0.0
    %200 = vmatpush1.msra.mxu0 0.0
    %201 = vmatprep.subr.mxu0 0.0
    %202 = vmatpush1.msra.mxu0 0.0
    %203 = vmatprep.subr.mxu0 0.0
    %204 = vmatpush1.msra.mxu0 0.0
    %205 = vmatprep.subr.mxu0 0.0
    %206 = vmatpush1.msra.mxu0 0.0
    %207 = vmatprep.subr.mxu0 0.0
    %208 = vmatpush1.msra.mxu0 0.0
    %209 = vmatprep.subr.mxu0 0.0
    %210 = vmatpush1.msra.mxu0 0.0
    %211 = vmatprep.subr.mxu0 0.0
    %212 = vmatpush1.msra.mxu0 0.0
    %213 = vmatprep.subr.mxu0 0.0
    %214 = vmatpush1.msra.mxu0 0.0
    %215 = vmatprep.subr.mxu0 0.0
    %216 = vmatpush1.msra.mxu0 0.0
    %217 = vmatprep.subr.mxu0 0.0
    %218 = vmatpush1.msra.mxu0 0.0
    %219 = vmatprep.subr.mxu0 0.0
    %220 = vmatpush1.msra.mxu0 0.0
    %221 = vmatprep.subr.mxu0 0.0
    %222 = vmatpush1.msra.mxu0 0.0
    %223 = vmatprep.subr.mxu0 0.0
    %224 = vmatpush1.msra.mxu0 0.0
    %225 = vmatprep.subr.mxu0 0.0
    %226 = vmatpush1.msra.mxu0 0.0
    %227 = vmatprep.subr.mxu0 0.0
    %228 = vmatpush1.msra.mxu0 0.0
    %229 = vmatprep.subr.mxu0 0.0
    %230 = vmatpush1.msra.mxu0 0.0
    %231 = vmatprep.subr.mxu0 0.0
    %232 = vmatpush1.msra.mxu0 0.0
    %233 = vmatprep.mubr.f32.mxu0 0.0
    %234 = vmatmul.mubr.f32.gmra.mrb[0].mxu0 %v167
    %v235 = vpop.f32.mrb[0].mxu0
    %v236 = vadd.f32 0.0, %v235
    %v237 = vpop.f32.mrb[0].mxu0
    %238 = vdwg.mxu0
    %v239 = vadd.f32 %v165, %v236
    %v240 = vtanh.pop %v239
    %vm241 = vcmask 254976
    %242 = vst.msk [vmem:[#allocation3] sm:$0x3] %vm241, %v240
    %v243 = vld [vmem:[#allocation2 + $0x2] sm:$0x3]
    %v245 = vsel %vm156, %v240, 0
    %247 = vmatprep.subr.mxu0 0.0
    %248 = vmatpush1.msra.mxu0 %v161
    %249 = vmatprep.subr.mxu0 0.0
    %250 = vmatpush1.msra.mxu0 %v162
    %251 = vmatprep.subr.mxu0 0.0
    %252 = vmatpush1.msra.mxu0 %v163
    %253 = vmatprep.subr.mxu0 0.0
    %254 = vmatpush1.msra.mxu0 %v164
    %255 = vmatprep.subr.mxu0 0.0
    %256 = vmatpush1.msra.mxu0 0.0
    %257 = vmatprep.subr.mxu0 0.0
    %258 = vmatpush1.msra.mxu0 0.0
    %259 = vmatprep.subr.mxu0 0.0
    %260 = vmatpush1.msra.mxu0 0.0
    %261 = vmatprep.subr.mxu0 0.0
    %262 = vmatpush1.msra.mxu0 0.0
    %263 = vmatprep.subr.mxu0 0.0
    %264 = vmatpush1.msra.mxu0 0.0
    %265 = vmatprep.subr.mxu0 0.0
    %266 = vmatpush1.msra.mxu0 0.0
    %267 = vmatprep.subr.mxu0 0.0
    %268 = vmatpush1.msra.mxu0 0.0
    %269 = vmatprep.subr.mxu0 0.0
    %270 = vmatpush1.msra.mxu0 0.0
    %271 = vmatprep.subr.mxu0 0.0
    %272 = vmatpush1.msra.mxu0 0.0
    %273 = vmatprep.subr.mxu0 0.0
    %274 = vmatpush1.msra.mxu0 0.0
    %275 = vmatprep.subr.mxu0 0.0
    %276 = vmatpush1.msra.mxu0 0.0
    %277 = vmatprep.subr.mxu0 0.0
    %278 = vmatpush1.msra.mxu0 0.0
    %279 = vmatprep.subr.mxu0 0.0
    %280 = vmatpush1.msra.mxu0 0.0
    %281 = vmatprep.subr.mxu0 0.0
    %282 = vmatpush1.msra.mxu0 0.0
    %283 = vmatprep.subr.mxu0 0.0
    %284 = vmatpush1.msra.mxu0 0.0
    %285 = vmatprep.subr.mxu0 0.0
    %286 = vmatpush1.msra.mxu0 0.0
    %287 = vmatprep.subr.mxu0 0.0
    %288 = vmatpush1.msra.mxu0 0.0
    %289 = vmatprep.subr.mxu0 0.0
    %290 = vmatpush1.msra.mxu0 0.0
    %291 = vmatprep.subr.mxu0 0.0
    %292 = vmatpush1.msra.mxu0 0.0
    %293 = vmatprep.subr.mxu0 0.0
    %294 = vmatpush1.msra.mxu0 0.0
    %295 = vmatprep.subr.mxu0 0.0
    %296 = vmatpush1.msra.mxu0 0.0
    %297 = vmatprep.subr.mxu0 0.0
    %298 = vmatpush1.msra.mxu0 0.0
    %299 = vmatprep.subr.mxu0 0.0
    %300 = vmatpush1.msra.mxu0 0.0
    %301 = vmatprep.subr.mxu0 0.0
    %302 = vmatpush1.msra.mxu0 0.0
    %303 = vmatprep.subr.mxu0 0.0
    %304 = vmatpush1.msra.mxu0 0.0
    %305 = vmatprep.subr.mxu0 0.0
    %306 = vmatpush1.msra.mxu0 0.0
    %307 = vmatprep.subr.mxu0 0.0
    %308 = vmatpush1.msra.mxu0 0.0
    %309 = vmatprep.subr.mxu0 0.0
    %310 = vmatpush1.msra.mxu0 0.0
    %311 = vmatprep.mubr.f32.mxu0 0.0
    %312 = vmatmul.mubr.f32.gmra.mrb[0].mxu0 %v245
    %v313 = vpop.f32.mrb[0].mxu0
    %v314 = vadd.f32 0.0, %v313
    %v315 = vpop.f32.mrb[0].mxu0
    %316 = vdwg.mxu0
    %v317 = vadd.f32 %v243, %v314
    %v318 = vtanh.pop %v317
    %319 = vst.msk [vmem:[#allocation3 + $0x2] sm:$0x3] %vm241, %v318
    %v320 = vld [vmem:[#allocation2 + $0x4] sm:$0x3]
    %v322 = vsel %vm156, %v318, 0
    %324 = vmatprep.subr.mxu0 0.0
    %325 = vmatpush1.msra.mxu0 %v161
    %326 = vmatprep.subr.mxu0 0.0
    %327 = vmatpush1.msra.mxu0 %v162
    %328 = vmatprep.subr.mxu0 0.0
    %329 = vmatpush1.msra.mxu0 %v163
    %330 = vmatprep.subr.mxu0 0.0
    %331 = vmatpush1.msra.mxu0 %v164
    %332 = vmatprep.subr.mxu0 0.0
    %333 = vmatpush1.msra.mxu0 0.0
    %334 = vmatprep.subr.mxu0 0.0
    %335 = vmatpush1.msra.mxu0 0.0
    %336 = vmatprep.subr.mxu0 0.0
    %337 = vmatpush1.msra.mxu0 0.0
    %338 = vmatprep.subr.mxu0 0.0
    %339 = vmatpush1.msra.mxu0 0.0
    %340 = vmatprep.subr.mxu0 0.0
    %341 = vmatpush1.msra.mxu0 0.0
    %342 = vmatprep.subr.mxu0 0.0
    %343 = vmatpush1.msra.mxu0 0.0
    %344 = vmatprep.subr.mxu0 0.0
    %345 = vmatpush1.msra.mxu0 0.0
    %346 = vmatprep.subr.mxu0 0.0
    %347 = vmatpush1.msra.mxu0 0.0
    %348 = vmatprep.subr.mxu0 0.0
    %349 = vmatpush1.msra.mxu0 0.0
    %350 = vmatprep.subr.mxu0 0.0
    %351 = vmatpush1.msra.mxu0 0.0
    %352 = vmatprep.subr.mxu0 0.0
    %353 = vmatpush1.msra.mxu0 0.0
    %354 = vmatprep.subr.mxu0 0.0
    %355 = vmatpush1.msra.mxu0 0.0
    %356 = vmatprep.subr.mxu0 0.0
    %357 = vmatpush1.msra.mxu0 0.0
    %358 = vmatprep.subr.mxu0 0.0
    %359 = vmatpush1.msra.mxu0 0.0
    %360 = vmatprep.subr.mxu0 0.0
    %361 = vmatpush1.msra.mxu0 0.0
    %362 = vmatprep.subr.mxu0 0.0
    %363 = vmatpush1.msra.mxu0 0.0
    %364 = vmatprep.subr.mxu0 0.0
    %365 = vmatpush1.msra.mxu0 0.0
    %366 = vmatprep.subr.mxu0 0.0
    %367 = vmatpush1.msra.mxu0 0.0
    %368 = vmatprep.subr.mxu0 0.0
    %369 = vmatpush1.msra.mxu0 0.0
    %370 = vmatprep.subr.mxu0 0.0
    %371 = vmatpush1.msra.mxu0 0.0
    %372 = vmatprep.subr.mxu0 0.0
    %373 = vmatpush1.msra.mxu0 0.0
    %374 = vmatprep.subr.mxu0 0.0
    %375 = vmatpush1.msra.mxu0 0.0
    %376 = vmatprep.subr.mxu0 0.0
    %377 = vmatpush1.msra.mxu0 0.0
    %378 = vmatprep.subr.mxu0 0.0
    %379 = vmatpush1.msra.mxu0 0.0
    %380 = vmatprep.subr.mxu0 0.0
    %381 = vmatpush1.msra.mxu0 0.0
    %382 = vmatprep.subr.mxu0 0.0
    %383 = vmatpush1.msra.mxu0 0.0
    %384 = vmatprep.subr.mxu0 0.0
    %385 = vmatpush1.msra.mxu0 0.0
    %386 = vmatprep.subr.mxu0 0.0
    %387 = vmatpush1.msra.mxu0 0.0
    %388 = vmatprep.mubr.f32.mxu0 0.0
    %389 = vmatmul.mubr.f32.gmra.mrb[0].mxu0 %v322
    %v390 = vpop.f32.mrb[0].mxu0
    %v391 = vadd.f32 0.0, %v390
    %v392 = vpop.f32.mrb[0].mxu0
    %393 = vdwg.mxu0
    %v394 = vadd.f32 %v320, %v391
    %v395 = vtanh.pop %v394
    %396 = vst.msk [vmem:[#allocation3 + $0x4] sm:$0x3] %vm241, %v395
    %v397 = vld [vmem:[#allocation2 + $0x6] sm:$0x3]
    %v399 = vsel %vm156, %v395, 0
    %401 = vmatprep.subr.mxu0 0.0
    %402 = vmatpush1.msra.mxu0 %v161
    %403 = vmatprep.subr.mxu0 0.0
    %404 = vmatpush1.msra.mxu0 %v162
    %405 = vmatprep.subr.mxu0 0.0
    %406 = vmatpush1.msra.mxu0 %v163
    %407 = vmatprep.subr.mxu0 0.0
    %408 = vmatpush1.msra.mxu0 %v164
    %409 = vmatprep.subr.mxu0 0.0
    %410 = vmatpush1.msra.mxu0 0.0
    %411 = vmatprep.subr.mxu0 0.0
    %412 = vmatpush1.msra.mxu0 0.0
    %413 = vmatprep.subr.mxu0 0.0
    %414 = vmatpush1.msra.mxu0 0.0
    %415 = vmatprep.subr.mxu0 0.0
    %416 = vmatpush1.msra.mxu0 0.0
    %417 = vmatprep.subr.mxu0 0.0
    %418 = vmatpush1.msra.mxu0 0.0
    %419 = vmatprep.subr.mxu0 0.0
    %420 = vmatpush1.msra.mxu0 0.0
    %421 = vmatprep.subr.mxu0 0.0
    %422 = vmatpush1.msra.mxu0 0.0
    %423 = vmatprep.subr.mxu0 0.0
    %424 = vmatpush1.msra.mxu0 0.0
    %425 = vmatprep.subr.mxu0 0.0
    %426 = vmatpush1.msra.mxu0 0.0
    %427 = vmatprep.subr.mxu0 0.0
    %428 = vmatpush1.msra.mxu0 0.0
    %429 = vmatprep.subr.mxu0 0.0
    %430 = vmatpush1.msra.mxu0 0.0
    %431 = vmatprep.subr.mxu0 0.0
    %432 = vmatpush1.msra.mxu0 0.0
    %433 = vmatprep.subr.mxu0 0.0
    %434 = vmatpush1.msra.mxu0 0.0
    %435 = vmatprep.subr.mxu0 0.0
    %436 = vmatpush1.msra.mxu0 0.0
    %437 = vmatprep.subr.mxu0 0.0
    %438 = vmatpush1.msra.mxu0 0.0
    %439 = vmatprep.subr.mxu0 0.0
    %440 = vmatpush1.msra.mxu0 0.0
    %441 = vmatprep.subr.mxu0 0.0
    %442 = vmatpush1.msra.mxu0 0.0
    %443 = vmatprep.subr.mxu0 0.0
    %444 = vmatpush1.msra.mxu0 0.0
    %445 = vmatprep.subr.mxu0 0.0
    %446 = vmatpush1.msra.mxu0 0.0
    %447 = vmatprep.subr.mxu0 0.0
    %448 = vmatpush1.msra.mxu0 0.0
    %449 = vmatprep.subr.mxu0 0.0
    %450 = vmatpush1.msra.mxu0 0.0
    %451 = vmatprep.subr.mxu0 0.0
    %452 = vmatpush1.msra.mxu0 0.0
    %453 = vmatprep.subr.mxu0 0.0
    %454 = vmatpush1.msra.mxu0 0.0
    %455 = vmatprep.subr.mxu0 0.0
    %456 = vmatpush1.msra.mxu0 0.0
    %457 = vmatprep.subr.mxu0 0.0
    %458 = vmatpush1.msra.mxu0 0.0
    %459 = vmatprep.subr.mxu0 0.0
    %460 = vmatpush1.msra.mxu0 0.0
    %461 = vmatprep.subr.mxu0 0.0
    %462 = vmatpush1.msra.mxu0 0.0
    %463 = vmatprep.subr.mxu0 0.0
    %464 = vmatpush1.msra.mxu0 0.0
    %465 = vmatprep.mubr.f32.mxu0 0.0
    %466 = vmatmul.mubr.f32.gmra.mrb[0].mxu0 %v399
    %v467 = vpop.f32.mrb[0].mxu0
    %v468 = vadd.f32 0.0, %v467
    %v469 = vpop.f32.mrb[0].mxu0
    %470 = vdwg.mxu0
    %v471 = vadd.f32 %v397, %v468
    %v472 = vtanh.pop %v471
    %473 = vst.msk [vmem:[#allocation3 + $0x6] sm:$0x3] %vm241, %v472
    %v474 = vld [vmem:[#allocation2 + $0x8] sm:$0x3]
    %v476 = vsel %vm156, %v472, 0
    %478 = vmatprep.subr.mxu0 0.0
    %479 = vmatpush1.msra.mxu0 %v161
    %480 = vmatprep.subr.mxu0 0.0
    %481 = vmatpush1.msra.mxu0 %v162
    %482 = vmatprep.subr.mxu0 0.0
    %483 = vmatpush1.msra.mxu0 %v163
    %484 = vmatprep.subr.mxu0 0.0
    %485 = vmatpush1.msra.mxu0 %v164
    %486 = vmatprep.subr.mxu0 0.0
    %487 = vmatpush1.msra.mxu0 0.0
    %488 = vmatprep.subr.mxu0 0.0
    %489 = vmatpush1.msra.mxu0 0.0
    %490 = vmatprep.subr.mxu0 0.0
    %491 = vmatpush1.msra.mxu0 0.0
    %492 = vmatprep.subr.mxu0 0.0
    %493 = vmatpush1.msra.mxu0 0.0
    %494 = vmatprep.subr.mxu0 0.0
    %495 = vmatpush1.msra.mxu0 0.0
    %496 = vmatprep.subr.mxu0 0.0
    %497 = vmatpush1.msra.mxu0 0.0
    %498 = vmatprep.subr.mxu0 0.0
    %499 = vmatpush1.msra.mxu0 0.0
    %500 = vmatprep.subr.mxu0 0.0
    %501 = vmatpush1.msra.mxu0 0.0
    %502 = vmatprep.subr.mxu0 0.0
    %503 = vmatpush1.msra.mxu0 0.0
    %504 = vmatprep.subr.mxu0 0.0
    %505 = vmatpush1.msra.mxu0 0.0
    %506 = vmatprep.subr.mxu0 0.0
    %507 = vmatpush1.msra.mxu0 0.0
    %508 = vmatprep.subr.mxu0 0.0
    %509 = vmatpush1.msra.mxu0 0.0
    %510 = vmatprep.subr.mxu0 0.0
    %511 = vmatpush1.msra.mxu0 0.0
    %512 = vmatprep.subr.mxu0 0.0
    %513 = vmatpush1.msra.mxu0 0.0
    %514 = vmatprep.subr.mxu0 0.0
    %515 = vmatpush1.msra.mxu0 0.0
    %516 = vmatprep.subr.mxu0 0.0
    %517 = vmatpush1.msra.mxu0 0.0
    %518 = vmatprep.subr.mxu0 0.0
    %519 = vmatpush1.msra.mxu0 0.0
    %520 = vmatprep.subr.mxu0 0.0
    %521 = vmatpush1.msra.mxu0 0.0
    %522 = vmatprep.subr.mxu0 0.0
    %523 = vmatpush1.msra.mxu0 0.0
    %524 = vmatprep.subr.mxu0 0.0
    %525 = vmatpush1.msra.mxu0 0.0
    %526 = vmatprep.subr.mxu0 0.0
    %527 = vmatpush1.msra.mxu0 0.0
    %528 = vmatprep.subr.mxu0 0.0
    %529 = vmatpush1.msra.mxu0 0.0
    %530 = vmatprep.subr.mxu0 0.0
    %531 = vmatpush1.msra.mxu0 0.0
    %532 = vmatprep.subr.mxu0 0.0
    %533 = vmatpush1.msra.mxu0 0.0
    %534 = vmatprep.subr.mxu0 0.0
    %535 = vmatpush1.msra.mxu0 0.0
    %536 = vmatprep.subr.mxu0 0.0
    %537 = vmatpush1.msra.mxu0 0.0
    %538 = vmatprep.subr.mxu0 0.0
    %539 = vmatpush1.msra.mxu0 0.0
    %540 = vmatprep.subr.mxu0 0.0
    %541 = vmatpush1.msra.mxu0 0.0
    %542 = vmatprep.mubr.f32.mxu0 0.0
    %543 = vmatmul.mubr.f32.gmra.mrb[0].mxu0 %v476
    %v544 = vpop.f32.mrb[0].mxu0
    %v545 = vadd.f32 0.0, %v544
    %v546 = vpop.f32.mrb[0].mxu0
    %547 = vdwg.mxu0
    %v548 = vadd.f32 %v474, %v545
    %v549 = vtanh.pop %v548
    %550 = vst.msk [vmem:[#allocation3 + $0x8] sm:$0x3] %vm241, %v549
    %v551 = vld [vmem:[#allocation2 + $0xa] sm:$0x3]
    %v553 = vsel %vm156, %v549, 0
    %555 = vmatprep.subr.mxu0 0.0
    %556 = vmatpush1.msra.mxu0 %v161
    %557 = vmatprep.subr.mxu0 0.0
    %558 = vmatpush1.msra.mxu0 %v162
    %559 = vmatprep.subr.mxu0 0.0
    %560 = vmatpush1.msra.mxu0 %v163
    %561 = vmatprep.subr.mxu0 0.0
    %562 = vmatpush1.msra.mxu0 %v164
    %563 = vmatprep.subr.mxu0 0.0
    %564 = vmatpush1.msra.mxu0 0.0
    %565 = vmatprep.subr.mxu0 0.0
    %566 = vmatpush1.msra.mxu0 0.0
    %567 = vmatprep.subr.mxu0 0.0
    %568 = vmatpush1.msra.mxu0 0.0
    %569 = vmatprep.subr.mxu0 0.0
    %570 = vmatpush1.msra.mxu0 0.0
    %571 = vmatprep.subr.mxu0 0.0
    %572 = vmatpush1.msra.mxu0 0.0
    %573 = vmatprep.subr.mxu0 0.0
    %574 = vmatpush1.msra.mxu0 0.0
    %575 = vmatprep.subr.mxu0 0.0
    %576 = vmatpush1.msra.mxu0 0.0
    %577 = vmatprep.subr.mxu0 0.0
    %578 = vmatpush1.msra.mxu0 0.0
    %579 = vmatprep.subr.mxu0 0.0
    %580 = vmatpush1.msra.mxu0 0.0
    %581 = vmatprep.subr.mxu0 0.0
    %582 = vmatpush1.msra.mxu0 0.0
    %583 = vmatprep.subr.mxu0 0.0
    %584 = vmatpush1.msra.mxu0 0.0
    %585 = vmatprep.subr.mxu0 0.0
    %586 = vmatpush1.msra.mxu0 0.0
    %587 = vmatprep.subr.mxu0 0.0
    %588 = vmatpush1.msra.mxu0 0.0
    %589 = vmatprep.subr.mxu0 0.0
    %590 = vmatpush1.msra.mxu0 0.0
    %591 = vmatprep.subr.mxu0 0.0
    %592 = vmatpush1.msra.mxu0 0.0
    %593 = vmatprep.subr.mxu0 0.0
    %594 = vmatpush1.msra.mxu0 0.0
    %595 = vmatprep.subr.mxu0 0.0
    %596 = vmatpush1.msra.mxu0 0.0
    %597 = vmatprep.subr.mxu0 0.0
    %598 = vmatpush1.msra.mxu0 0.0
    %599 = vmatprep.subr.mxu0 0.0
    %600 = vmatpush1.msra.mxu0 0.0
    %601 = vmatprep.subr.mxu0 0.0
    %602 = vmatpush1.msra.mxu0 0.0
    %603 = vmatprep.subr.mxu0 0.0
    %604 = vmatpush1.msra.mxu0 0.0
    %605 = vmatprep.subr.mxu0 0.0
    %606 = vmatpush1.msra.mxu0 0.0
    %607 = vmatprep.subr.mxu0 0.0
    %608 = vmatpush1.msra.mxu0 0.0
    %609 = vmatprep.subr.mxu0 0.0
    %610 = vmatpush1.msra.mxu0 0.0
    %611 = vmatprep.subr.mxu0 0.0
    %612 = vmatpush1.msra.mxu0 0.0
    %613 = vmatprep.subr.mxu0 0.0
    %614 = vmatpush1.msra.mxu0 0.0
    %615 = vmatprep.subr.mxu0 0.0
    %616 = vmatpush1.msra.mxu0 0.0
    %617 = vmatprep.subr.mxu0 0.0
    %618 = vmatpush1.msra.mxu0 0.0
    %619 = vmatprep.mubr.f32.mxu0 0.0
    %620 = vmatmul.mubr.f32.gmra.mrb[0].mxu0 %v553
    %v621 = vpop.f32.mrb[0].mxu0
    %v622 = vadd.f32 0.0, %v621
    %v623 = vpop.f32.mrb[0].mxu0
    %624 = vdwg.mxu0
    %v625 = vadd.f32 %v551, %v622
    %v626 = vtanh.pop %v625
    %627 = vst.msk [vmem:[#allocation3 + $0xa] sm:$0x3] %vm241, %v626
    %v628 = vld [vmem:[#allocation2 + $0xc] sm:$0x3]
    %v630 = vsel %vm156, %v626, 0
    %632 = vmatprep.subr.mxu0 0.0
    %633 = vmatpush1.msra.mxu0 %v161
    %634 = vmatprep.subr.mxu0 0.0
    %635 = vmatpush1.msra.mxu0 %v162
    %636 = vmatprep.subr.mxu0 0.0
    %637 = vmatpush1.msra.mxu0 %v163
    %638 = vmatprep.subr.mxu0 0.0
    %639 = vmatpush1.msra.mxu0 %v164
    %640 = vmatprep.subr.mxu0 0.0
    %641 = vmatpush1.msra.mxu0 0.0
    %642 = vmatprep.subr.mxu0 0.0
    %643 = vmatpush1.msra.mxu0 0.0
    %644 = vmatprep.subr.mxu0 0.0
    %645 = vmatpush1.msra.mxu0 0.0
    %646 = vmatprep.subr.mxu0 0.0
    %647 = vmatpush1.msra.mxu0 0.0
    %648 = vmatprep.subr.mxu0 0.0
    %649 = vmatpush1.msra.mxu0 0.0
    %650 = vmatprep.subr.mxu0 0.0
    %651 = vmatpush1.msra.mxu0 0.0
    %652 = vmatprep.subr.mxu0 0.0
    %653 = vmatpush1.msra.mxu0 0.0
    %654 = vmatprep.subr.mxu0 0.0
    %655 = vmatpush1.msra.mxu0 0.0
    %656 = vmatprep.subr.mxu0 0.0
    %657 = vmatpush1.msra.mxu0 0.0
    %658 = vmatprep.subr.mxu0 0.0
    %659 = vmatpush1.msra.mxu0 0.0
    %660 = vmatprep.subr.mxu0 0.0
    %661 = vmatpush1.msra.mxu0 0.0
    %662 = vmatprep.subr.mxu0 0.0
    %663 = vmatpush1.msra.mxu0 0.0
    %664 = vmatprep.subr.mxu0 0.0
    %665 = vmatpush1.msra.mxu0 0.0
    %666 = vmatprep.subr.mxu0 0.0
    %667 = vmatpush1.msra.mxu0 0.0
    %668 = vmatprep.subr.mxu0 0.0
    %669 = vmatpush1.msra.mxu0 0.0
    %670 = vmatprep.subr.mxu0 0.0
    %671 = vmatpush1.msra.mxu0 0.0
    %672 = vmatprep.subr.mxu0 0.0
    %673 = vmatpush1.msra.mxu0 0.0
    %674 = vmatprep.subr.mxu0 0.0
    %675 = vmatpush1.msra.mxu0 0.0
    %676 = vmatprep.subr.mxu0 0.0
    %677 = vmatpush1.msra.mxu0 0.0
    %678 = vmatprep.subr.mxu0 0.0
    %679 = vmatpush1.msra.mxu0 0.0
    %680 = vmatprep.subr.mxu0 0.0
    %681 = vmatpush1.msra.mxu0 0.0
    %682 = vmatprep.subr.mxu0 0.0
    %683 = vmatpush1.msra.mxu0 0.0
    %684 = vmatprep.subr.mxu0 0.0
    %685 = vmatpush1.msra.mxu0 0.0
    %686 = vmatprep.subr.mxu0 0.0
    %687 = vmatpush1.msra.mxu0 0.0
    %688 = vmatprep.subr.mxu0 0.0
    %689 = vmatpush1.msra.mxu0 0.0
    %690 = vmatprep.subr.mxu0 0.0
    %691 = vmatpush1.msra.mxu0 0.0
    %692 = vmatprep.subr.mxu0 0.0
    %693 = vmatpush1.msra.mxu0 0.0
    %694 = vmatprep.subr.mxu0 0.0
    %695 = vmatpush1.msra.mxu0 0.0
    %696 = vmatprep.mubr.f32.mxu0 0.0
    %697 = vmatmul.mubr.f32.gmra.mrb[0].mxu0 %v630
    %v698 = vpop.f32.mrb[0].mxu0
    %v699 = vadd.f32 0.0, %v698
    %v700 = vpop.f32.mrb[0].mxu0
    %701 = vdwg.mxu0
    %v702 = vadd.f32 %v628, %v699
    %v703 = vtanh.pop %v702
    %704 = vst.msk [vmem:[#allocation3 + $0xc] sm:$0x3] %vm241, %v703
    %v705 = vld [vmem:[#allocation2 + $0xe] sm:$0x3]
    %v707 = vsel %vm156, %v703, 0
    %709 = vmatprep.subr.mxu0 0.0
    %710 = vmatpush1.msra.mxu0 %v161
    %711 = vmatprep.subr.mxu0 0.0
    %712 = vmatpush1.msra.mxu0 %v162
    %713 = vmatprep.subr.mxu0 0.0
    %714 = vmatpush1.msra.mxu0 %v163
    %715 = vmatprep.subr.mxu0 0.0
    %716 = vmatpush1.msra.mxu0 %v164
    %717 = vmatprep.subr.mxu0 0.0
    %718 = vmatpush1.msra.mxu0 0.0
    %719 = vmatprep.subr.mxu0 0.0
    %720 = vmatpush1.msra.mxu0 0.0
    %721 = vmatprep.subr.mxu0 0.0
    %722 = vmatpush1.msra.mxu0 0.0
    %723 = vmatprep.subr.mxu0 0.0
    %724 = vmatpush1.msra.mxu0 0.0
    %725 = vmatprep.subr.mxu0 0.0
    %726 = vmatpush1.msra.mxu0 0.0
    %727 = vmatprep.subr.mxu0 0.0
    %728 = vmatpush1.msra.mxu0 0.0
    %729 = vmatprep.subr.mxu0 0.0
    %730 = vmatpush1.msra.mxu0 0.0
    %731 = vmatprep.subr.mxu0 0.0
    %732 = vmatpush1.msra.mxu0 0.0
    %733 = vmatprep.subr.mxu0 0.0
    %734 = vmatpush1.msra.mxu0 0.0
    %735 = vmatprep.subr.mxu0 0.0
    %736 = vmatpush1.msra.mxu0 0.0
    %737 = vmatprep.subr.mxu0 0.0
    %738 = vmatpush1.msra.mxu0 0.0
    %739 = vmatprep.subr.mxu0 0.0
    %740 = vmatpush1.msra.mxu0 0.0
    %741 = vmatprep.subr.mxu0 0.0
    %742 = vmatpush1.msra.mxu0 0.0
    %743 = vmatprep.subr.mxu0 0.0
    %744 = vmatpush1.msra.mxu0 0.0
    %745 = vmatprep.subr.mxu0 0.0
    %746 = vmatpush1.msra.mxu0 0.0
    %747 = vmatprep.subr.mxu0 0.0
    %748 = vmatpush1.msra.mxu0 0.0
    %749 = vmatprep.subr.mxu0 0.0
    %750 = vmatpush1.msra.mxu0 0.0
    %751 = vmatprep.subr.mxu0 0.0
    %752 = vmatpush1.msra.mxu0 0.0
    %753 = vmatprep.subr.mxu0 0.0
    %754 = vmatpush1.msra.mxu0 0.0
    %755 = vmatprep.subr.mxu0 0.0
    %756 = vmatpush1.msra.mxu0 0.0
    %757 = vmatprep.subr.mxu0 0.0
    %758 = vmatpush1.msra.mxu0 0.0
    %759 = vmatprep.subr.mxu0 0.0
    %760 = vmatpush1.msra.mxu0 0.0
    %761 = vmatprep.subr.mxu0 0.0
    %762 = vmatpush1.msra.mxu0 0.0
    %763 = vmatprep.subr.mxu0 0.0
    %764 = vmatpush1.msra.mxu0 0.0
    %765 = vmatprep.subr.mxu0 0.0
    %766 = vmatpush1.msra.mxu0 0.0
    %767 = vmatprep.subr.mxu0 0.0
    %768 = vmatpush1.msra.mxu0 0.0
    %769 = vmatprep.subr.mxu0 0.0
    %770 = vmatpush1.msra.mxu0 0.0
    %771 = vmatprep.subr.mxu0 0.0
    %772 = vmatpush1.msra.mxu0 0.0
    %773 = vmatprep.mubr.f32.mxu0 0.0
    %774 = vmatmul.mubr.f32.gmra.mrb[0].mxu0 %v707
    %v775 = vpop.f32.mrb[0].mxu0
    %v776 = vadd.f32 0.0, %v775
    %v777 = vpop.f32.mrb[0].mxu0
    %778 = vdwg.mxu0
    %v779 = vadd.f32 %v705, %v776
    %v780 = vtanh.pop %v779
    %781 = vst.msk [vmem:[#allocation3 + $0xe] sm:$0x3] %vm241, %v780
    %v782 = vld [vmem:[#allocation2 + $0x10] sm:$0x3]
    %v784 = vsel %vm156, %v780, 0
    %786 = vmatprep.subr.mxu0 0.0
    %787 = vmatpush1.msra.mxu0 %v161
    %788 = vmatprep.subr.mxu0 0.0
    %789 = vmatpush1.msra.mxu0 %v162
    %790 = vmatprep.subr.mxu0 0.0
    %791 = vmatpush1.msra.mxu0 %v163
    %792 = vmatprep.subr.mxu0 0.0
    %793 = vmatpush1.msra.mxu0 %v164
    %794 = vmatprep.subr.mxu0 0.0
    %795 = vmatpush1.msra.mxu0 0.0
    %796 = vmatprep.subr.mxu0 0.0
    %797 = vmatpush1.msra.mxu0 0.0
    %798 = vmatprep.subr.mxu0 0.0
    %799 = vmatpush1.msra.mxu0 0.0
    %800 = vmatprep.subr.mxu0 0.0
    %801 = vmatpush1.msra.mxu0 0.0
    %802 = vmatprep.subr.mxu0 0.0
    %803 = vmatpush1.msra.mxu0 0.0
    %804 = vmatprep.subr.mxu0 0.0
    %805 = vmatpush1.msra.mxu0 0.0
    %806 = vmatprep.subr.mxu0 0.0
    %807 = vmatpush1.msra.mxu0 0.0
    %808 = vmatprep.subr.mxu0 0.0
    %809 = vmatpush1.msra.mxu0 0.0
    %810 = vmatprep.subr.mxu0 0.0
    %811 = vmatpush1.msra.mxu0 0.0
    %812 = vmatprep.subr.mxu0 0.0
    %813 = vmatpush1.msra.mxu0 0.0
    %814 = vmatprep.subr.mxu0 0.0
    %815 = vmatpush1.msra.mxu0 0.0
    %816 = vmatprep.subr.mxu0 0.0
    %817 = vmatpush1.msra.mxu0 0.0
    %818 = vmatprep.subr.mxu0 0.0
    %819 = vmatpush1.msra.mxu0 0.0
    %820 = vmatprep.subr.mxu0 0.0
    %821 = vmatpush1.msra.mxu0 0.0
    %822 = vmatprep.subr.mxu0 0.0
    %823 = vmatpush1.msra.mxu0 0.0
    %824 = vmatprep.subr.mxu0 0.0
    %825 = vmatpush1.msra.mxu0 0.0
    %826 = vmatprep.subr.mxu0 0.0
    %827 = vmatpush1.msra.mxu0 0.0
    %828 = vmatprep.subr.mxu0 0.0
    %829 = vmatpush1.msra.mxu0 0.0
    %830 = vmatprep.subr.mxu0 0.0
    %831 = vmatpush1.msra.mxu0 0.0
    %832 = vmatprep.subr.mxu0 0.0
    %833 = vmatpush1.msra.mxu0 0.0
    %834 = vmatprep.subr.mxu0 0.0
    %835 = vmatpush1.msra.mxu0 0.0
    %836 = vmatprep.subr.mxu0 0.0
    %837 = vmatpush1.msra.mxu0 0.0
    %838 = vmatprep.subr.mxu0 0.0
    %839 = vmatpush1.msra.mxu0 0.0
    %840 = vmatprep.subr.mxu0 0.0
    %841 = vmatpush1.msra.mxu0 0.0
    %842 = vmatprep.subr.mxu0 0.0
    %843 = vmatpush1.msra.mxu0 0.0
    %844 = vmatprep.subr.mxu0 0.0
    %845 = vmatpush1.msra.mxu0 0.0
    %846 = vmatprep.subr.mxu0 0.0
    %847 = vmatpush1.msra.mxu0 0.0
    %848 = vmatprep.subr.mxu0 0.0
    %849 = vmatpush1.msra.mxu0 0.0
    %850 = vmatprep.mubr.f32.mxu0 0.0
    %851 = vmatmul.mubr.f32.gmra.mrb[0].mxu0 %v784
    %v852 = vpop.f32.mrb[0].mxu0
    %v853 = vadd.f32 0.0, %v852
    %v854 = vpop.f32.mrb[0].mxu0
    %855 = vdwg.mxu0
    %v856 = vadd.f32 %v782, %v853
    %v857 = vtanh.pop %v856
    %858 = vst.msk [vmem:[#allocation3 + $0x10] sm:$0x3] %vm241, %v857
    %v859 = vld [vmem:[#allocation2 + $0x12] sm:$0x3]
    %v861 = vsel %vm156, %v857, 0
    %863 = vmatprep.subr.mxu0 0.0
    %864 = vmatpush1.msra.mxu0 %v161
    %865 = vmatprep.subr.mxu0 0.0
    %866 = vmatpush1.msra.mxu0 %v162
    %867 = vmatprep.subr.mxu0 0.0
    %868 = vmatpush1.msra.mxu0 %v163
    %869 = vmatprep.subr.mxu0 0.0
    %870 = vmatpush1.msra.mxu0 %v164
    %871 = vmatprep.subr.mxu0 0.0
    %872 = vmatpush1.msra.mxu0 0.0
    %873 = vmatprep.subr.mxu0 0.0
    %874 = vmatpush1.msra.mxu0 0.0
    %875 = vmatprep.subr.mxu0 0.0
    %876 = vmatpush1.msra.mxu0 0.0
    %877 = vmatprep.subr.mxu0 0.0
    %878 = vmatpush1.msra.mxu0 0.0
    %879 = vmatprep.subr.mxu0 0.0
    %880 = vmatpush1.msra.mxu0 0.0
    %881 = vmatprep.subr.mxu0 0.0
    %882 = vmatpush1.msra.mxu0 0.0
    %883 = vmatprep.subr.mxu0 0.0
    %884 = vmatpush1.msra.mxu0 0.0
    %885 = vmatprep.subr.mxu0 0.0
    %886 = vmatpush1.msra.mxu0 0.0
    %887 = vmatprep.subr.mxu0 0.0
    %888 = vmatpush1.msra.mxu0 0.0
    %889 = vmatprep.subr.mxu0 0.0
    %890 = vmatpush1.msra.mxu0 0.0
    %891 = vmatprep.subr.mxu0 0.0
    %892 = vmatpush1.msra.mxu0 0.0
    %893 = vmatprep.subr.mxu0 0.0
    %894 = vmatpush1.msra.mxu0 0.0
    %895 = vmatprep.subr.mxu0 0.0
    %896 = vmatpush1.msra.mxu0 0.0
    %897 = vmatprep.subr.mxu0 0.0
    %898 = vmatpush1.msra.mxu0 0.0
    %899 = vmatprep.subr.mxu0 0.0
    %900 = vmatpush1.msra.mxu0 0.0
    %901 = vmatprep.subr.mxu0 0.0
    %902 = vmatpush1.msra.mxu0 0.0
    %903 = vmatprep.subr.mxu0 0.0
    %904 = vmatpush1.msra.mxu0 0.0
    %905 = vmatprep.subr.mxu0 0.0
    %906 = vmatpush1.msra.mxu0 0.0
    %907 = vmatprep.subr.mxu0 0.0
    %908 = vmatpush1.msra.mxu0 0.0
    %909 = vmatprep.subr.mxu0 0.0
    %910 = vmatpush1.msra.mxu0 0.0
    %911 = vmatprep.subr.mxu0 0.0
    %912 = vmatpush1.msra.mxu0 0.0
    %913 = vmatprep.subr.mxu0 0.0
    %914 = vmatpush1.msra.mxu0 0.0
    %915 = vmatprep.subr.mxu0 0.0
    %916 = vmatpush1.msra.mxu0 0.0
    %917 = vmatprep.subr.mxu0 0.0
    %918 = vmatpush1.msra.mxu0 0.0
    %919 = vmatprep.subr.mxu0 0.0
    %920 = vmatpush1.msra.mxu0 0.0
    %921 = vmatprep.subr.mxu0 0.0
    %922 = vmatpush1.msra.mxu0 0.0
    %923 = vmatprep.subr.mxu0 0.0
    %924 = vmatpush1.msra.mxu0 0.0
    %925 = vmatprep.subr.mxu0 0.0
    %926 = vmatpush1.msra.mxu0 0.0
    %927 = vmatprep.mubr.f32.mxu0 0.0
    %928 = vmatmul.mubr.f32.gmra.mrb[0].mxu0 %v861
    %v929 = vpop.f32.mrb[0].mxu0
    %v930 = vadd.f32 0.0, %v929
    %v931 = vpop.f32.mrb[0].mxu0
    %932 = vdwg.mxu0
    %v933 = vadd.f32 %v859, %v930
    %v934 = vtanh.pop %v933
    %935 = vst.msk [vmem:[#allocation3 + $0x12] sm:$0x3] %vm241, %v934
    %v936 = vld [vmem:[#allocation2 + $0x14] sm:$0x3]
    %v938 = vsel %vm156, %v934, 0
    %940 = vmatprep.subr.mxu0 0.0
    %941 = vmatpush1.msra.mxu0 %v161
    %942 = vmatprep.subr.mxu0 0.0
    %943 = vmatpush1.msra.mxu0 %v162
    %944 = vmatprep.subr.mxu0 0.0
    %945 = vmatpush1.msra.mxu0 %v163
    %946 = vmatprep.subr.mxu0 0.0
    %947 = vmatpush1.msra.mxu0 %v164
    %948 = vmatprep.subr.mxu0 0.0
    %949 = vmatpush1.msra.mxu0 0.0
    %950 = vmatprep.subr.mxu0 0.0
    %951 = vmatpush1.msra.mxu0 0.0
    %952 = vmatprep.subr.mxu0 0.0
    %953 = vmatpush1.msra.mxu0 0.0
    %954 = vmatprep.subr.mxu0 0.0
    %955 = vmatpush1.msra.mxu0 0.0
    %956 = vmatprep.subr.mxu0 0.0
    %957 = vmatpush1.msra.mxu0 0.0
    %958 = vmatprep.subr.mxu0 0.0
    %959 = vmatpush1.msra.mxu0 0.0
    %960 = vmatprep.subr.mxu0 0.0
    %961 = vmatpush1.msra.mxu0 0.0
    %962 = vmatprep.subr.mxu0 0.0
    %963 = vmatpush1.msra.mxu0 0.0
    %964 = vmatprep.subr.mxu0 0.0
    %965 = vmatpush1.msra.mxu0 0.0
    %966 = vmatprep.subr.mxu0 0.0
    %967 = vmatpush1.msra.mxu0 0.0
    %968 = vmatprep.subr.mxu0 0.0
    %969 = vmatpush1.msra.mxu0 0.0
    %970 = vmatprep.subr.mxu0 0.0
    %971 = vmatpush1.msra.mxu0 0.0
    %972 = vmatprep.subr.mxu0 0.0
    %973 = vmatpush1.msra.mxu0 0.0
    %974 = vmatprep.subr.mxu0 0.0
    %975 = vmatpush1.msra.mxu0 0.0
    %976 = vmatprep.subr.mxu0 0.0
    %977 = vmatpush1.msra.mxu0 0.0
    %978 = vmatprep.subr.mxu0 0.0
    %979 = vmatpush1.msra.mxu0 0.0
    %980 = vmatprep.subr.mxu0 0.0
    %981 = vmatpush1.msra.mxu0 0.0
    %982 = vmatprep.subr.mxu0 0.0
    %983 = vmatpush1.msra.mxu0 0.0
    %984 = vmatprep.subr.mxu0 0.0
    %985 = vmatpush1.msra.mxu0 0.0
    %986 = vmatprep.subr.mxu0 0.0
    %987 = vmatpush1.msra.mxu0 0.0
    %988 = vmatprep.subr.mxu0 0.0
    %989 = vmatpush1.msra.mxu0 0.0
    %990 = vmatprep.subr.mxu0 0.0
    %991 = vmatpush1.msra.mxu0 0.0
    %992 = vmatprep.subr.mxu0 0.0
    %993 = vmatpush1.msra.mxu0 0.0
    %994 = vmatprep.subr.mxu0 0.0
    %995 = vmatpush1.msra.mxu0 0.0
    %996 = vmatprep.subr.mxu0 0.0
    %997 = vmatpush1.msra.mxu0 0.0
    %998 = vmatprep.subr.mxu0 0.0
    %999 = vmatpush1.msra.mxu0 0.0
    %1000 = vmatprep.subr.mxu0 0.0
    %1001 = vmatpush1.msra.mxu0 0.0
    %1002 = vmatprep.subr.mxu0 0.0
    %1003 = vmatpush1.msra.mxu0 0.0
    %1004 = vmatprep.mubr.f32.mxu0 0.0
    %1005 = vmatmul.mubr.f32.gmra.mrb[0].mxu0 %v938
    %v1006 = vpop.f32.mrb[0].mxu0
    %v1007 = vadd.f32 0.0, %v1006
    %v1008 = vpop.f32.mrb[0].mxu0
    %1009 = vdwg.mxu0
    %v1010 = vadd.f32 %v936, %v1007
    %v1011 = vtanh.pop %v1010
    %1012 = vst.msk [vmem:[#allocation3 + $0x14] sm:$0x3] %vm241, %v1011
    %v1013 = vld [vmem:[#allocation2 + $0x16] sm:$0x3]
    %v1015 = vsel %vm156, %v1011, 0
    %1017 = vmatprep.subr.mxu0 0.0
    %1018 = vmatpush1.msra.mxu0 %v161
    %1019 = vmatprep.subr.mxu0 0.0
    %1020 = vmatpush1.msra.mxu0 %v162
    %1021 = vmatprep.subr.mxu0 0.0
    %1022 = vmatpush1.msra.mxu0 %v163
    %1023 = vmatprep.subr.mxu0 0.0
    %1024 = vmatpush1.msra.mxu0 %v164
    %1025 = vmatprep.subr.mxu0 0.0
    %1026 = vmatpush1.msra.mxu0 0.0
    %1027 = vmatprep.subr.mxu0 0.0
    %1028 = vmatpush1.msra.mxu0 0.0
    %1029 = vmatprep.subr.mxu0 0.0
    %1030 = vmatpush1.msra.mxu0 0.0
    %1031 = vmatprep.subr.mxu0 0.0
    %1032 = vmatpush1.msra.mxu0 0.0
    %1033 = vmatprep.subr.mxu0 0.0
    %1034 = vmatpush1.msra.mxu0 0.0
    %1035 = vmatprep.subr.mxu0 0.0
    %1036 = vmatpush1.msra.mxu0 0.0
    %1037 = vmatprep.subr.mxu0 0.0
    %1038 = vmatpush1.msra.mxu0 0.0
    %1039 = vmatprep.subr.mxu0 0.0
    %1040 = vmatpush1.msra.mxu0 0.0
    %1041 = vmatprep.subr.mxu0 0.0
    %1042 = vmatpush1.msra.mxu0 0.0
    %1043 = vmatprep.subr.mxu0 0.0
    %1044 = vmatpush1.msra.mxu0 0.0
    %1045 = vmatprep.subr.mxu0 0.0
    %1046 = vmatpush1.msra.mxu0 0.0
    %1047 = vmatprep.subr.mxu0 0.0
    %1048 = vmatpush1.msra.mxu0 0.0
    %1049 = vmatprep.subr.mxu0 0.0
    %1050 = vmatpush1.msra.mxu0 0.0
    %1051 = vmatprep.subr.mxu0 0.0
    %1052 = vmatpush1.msra.mxu0 0.0
    %1053 = vmatprep.subr.mxu0 0.0
    %1054 = vmatpush1.msra.mxu0 0.0
    %1055 = vmatprep.subr.mxu0 0.0
    %1056 = vmatpush1.msra.mxu0 0.0
    %1057 = vmatprep.subr.mxu0 0.0
    %1058 = vmatpush1.msra.mxu0 0.0
    %1059 = vmatprep.subr.mxu0 0.0
    %1060 = vmatpush1.msra.mxu0 0.0
    %1061 = vmatprep.subr.mxu0 0.0
    %1062 = vmatpush1.msra.mxu0 0.0
    %1063 = vmatprep.subr.mxu0 0.0
    %1064 = vmatpush1.msra.mxu0 0.0
    %1065 = vmatprep.subr.mxu0 0.0
    %1066 = vmatpush1.msra.mxu0 0.0
    %1067 = vmatprep.subr.mxu0 0.0
    %1068 = vmatpush1.msra.mxu0 0.0
    %1069 = vmatprep.subr.mxu0 0.0
    %1070 = vmatpush1.msra.mxu0 0.0
    %1071 = vmatprep.subr.mxu0 0.0
    %1072 = vmatpush1.msra.mxu0 0.0
    %1073 = vmatprep.subr.mxu0 0.0
    %1074 = vmatpush1.msra.mxu0 0.0
    %1075 = vmatprep.subr.mxu0 0.0
    %1076 = vmatpush1.msra.mxu0 0.0
    %1077 = vmatprep.subr.mxu0 0.0
    %1078 = vmatpush1.msra.mxu0 0.0
    %1079 = vmatprep.subr.mxu0 0.0
    %1080 = vmatpush1.msra.mxu0 0.0
    %1081 = vmatprep.mubr.f32.mxu0 0.0
    %1082 = vmatmul.mubr.f32.gmra.mrb[0].mxu0 %v1015
    %v1083 = vpop.f32.mrb[0].mxu0
    %v1084 = vadd.f32 0.0, %v1083
    %v1085 = vpop.f32.mrb[0].mxu0
    %1086 = vdwg.mxu0
    %v1087 = vadd.f32 %v1013, %v1084
    %v1088 = vtanh.pop %v1087
    %1089 = vst.msk [vmem:[#allocation3 + $0x16] sm:$0x3] %vm241, %v1088
    %v1090 = vld [vmem:[#allocation2 + $0x18] sm:$0x3]
    %v1092 = vsel %vm156, %v1088, 0
    %1094 = vmatprep.subr.mxu0 0.0
    %1095 = vmatpush1.msra.mxu0 %v161
    %1096 = vmatprep.subr.mxu0 0.0
    %1097 = vmatpush1.msra.mxu0 %v162
    %1098 = vmatprep.subr.mxu0 0.0
    %1099 = vmatpush1.msra.mxu0 %v163
    %1100 = vmatprep.subr.mxu0 0.0
    %1101 = vmatpush1.msra.mxu0 %v164
    %1102 = vmatprep.subr.mxu0 0.0
    %1103 = vmatpush1.msra.mxu0 0.0
    %1104 = vmatprep.subr.mxu0 0.0
    %1105 = vmatpush1.msra.mxu0 0.0
    %1106 = vmatprep.subr.mxu0 0.0
    %1107 = vmatpush1.msra.mxu0 0.0
    %1108 = vmatprep.subr.mxu0 0.0
    %1109 = vmatpush1.msra.mxu0 0.0
    %1110 = vmatprep.subr.mxu0 0.0
    %1111 = vmatpush1.msra.mxu0 0.0
    %1112 = vmatprep.subr.mxu0 0.0
    %1113 = vmatpush1.msra.mxu0 0.0
    %1114 = vmatprep.subr.mxu0 0.0
    %1115 = vmatpush1.msra.mxu0 0.0
    %1116 = vmatprep.subr.mxu0 0.0
    %1117 = vmatpush1.msra.mxu0 0.0
    %1118 = vmatprep.subr.mxu0 0.0
    %1119 = vmatpush1.msra.mxu0 0.0
    %1120 = vmatprep.subr.mxu0 0.0
    %1121 = vmatpush1.msra.mxu0 0.0
    %1122 = vmatprep.subr.mxu0 0.0
    %1123 = vmatpush1.msra.mxu0 0.0
    %1124 = vmatprep.subr.mxu0 0.0
    %1125 = vmatpush1.msra.mxu0 0.0
    %1126 = vmatprep.subr.mxu0 0.0
    %1127 = vmatpush1.msra.mxu0 0.0
    %1128 = vmatprep.subr.mxu0 0.0
    %1129 = vmatpush1.msra.mxu0 0.0
    %1130 = vmatprep.subr.mxu0 0.0
    %1131 = vmatpush1.msra.mxu0 0.0
    %1132 = vmatprep.subr.mxu0 0.0
    %1133 = vmatpush1.msra.mxu0 0.0
    %1134 = vmatprep.subr.mxu0 0.0
    %1135 = vmatpush1.msra.mxu0 0.0
    %1136 = vmatprep.subr.mxu0 0.0
    %1137 = vmatpush1.msra.mxu0 0.0
    %1138 = vmatprep.subr.mxu0 0.0
    %1139 = vmatpush1.msra.mxu0 0.0
    %1140 = vmatprep.subr.mxu0 0.0
    %1141 = vmatpush1.msra.mxu0 0.0
    %1142 = vmatprep.subr.mxu0 0.0
    %1143 = vmatpush1.msra.mxu0 0.0
    %1144 = vmatprep.subr.mxu0 0.0
    %1145 = vmatpush1.msra.mxu0 0.0
    %1146 = vmatprep.subr.mxu0 0.0
    %1147 = vmatpush1.msra.mxu0 0.0
    %1148 = vmatprep.subr.mxu0 0.0
    %1149 = vmatpush1.msra.mxu0 0.0
    %1150 = vmatprep.subr.mxu0 0.0
    %1151 = vmatpush1.msra.mxu0 0.0
    %1152 = vmatprep.subr.mxu0 0.0
    %1153 = vmatpush1.msra.mxu0 0.0
    %1154 = vmatprep.subr.mxu0 0.0
    %1155 = vmatpush1.msra.mxu0 0.0
    %1156 = vmatprep.subr.mxu0 0.0
    %1157 = vmatpush1.msra.mxu0 0.0
    %1158 = vmatprep.mubr.f32.mxu0 0.0
    %1159 = vmatmul.mubr.f32.gmra.mrb[0].mxu0 %v1092
    %v1160 = vpop.f32.mrb[0].mxu0
    %v1161 = vadd.f32 0.0, %v1160
    %v1162 = vpop.f32.mrb[0].mxu0
    %1163 = vdwg.mxu0
    %v1164 = vadd.f32 %v1090, %v1161
    %v1165 = vtanh.pop %v1164
    %1166 = vst.msk [vmem:[#allocation3 + $0x18] sm:$0x3] %vm241, %v1165
    %v1167 = vld [vmem:[#allocation2 + $0x1a] sm:$0x3]
    %v1169 = vsel %vm156, %v1165, 0
    %1171 = vmatprep.subr.mxu0 0.0
    %1172 = vmatpush1.msra.mxu0 %v161
    %1173 = vmatprep.subr.mxu0 0.0
    %1174 = vmatpush1.msra.mxu0 %v162
    %1175 = vmatprep.subr.mxu0 0.0
    %1176 = vmatpush1.msra.mxu0 %v163
    %1177 = vmatprep.subr.mxu0 0.0
    %1178 = vmatpush1.msra.mxu0 %v164
    %1179 = vmatprep.subr.mxu0 0.0
    %1180 = vmatpush1.msra.mxu0 0.0
    %1181 = vmatprep.subr.mxu0 0.0
    %1182 = vmatpush1.msra.mxu0 0.0
    %1183 = vmatprep.subr.mxu0 0.0
    %1184 = vmatpush1.msra.mxu0 0.0
    %1185 = vmatprep.subr.mxu0 0.0
    %1186 = vmatpush1.msra.mxu0 0.0
    %1187 = vmatprep.subr.mxu0 0.0
    %1188 = vmatpush1.msra.mxu0 0.0
    %1189 = vmatprep.subr.mxu0 0.0
    %1190 = vmatpush1.msra.mxu0 0.0
    %1191 = vmatprep.subr.mxu0 0.0
    %1192 = vmatpush1.msra.mxu0 0.0
    %1193 = vmatprep.subr.mxu0 0.0
    %1194 = vmatpush1.msra.mxu0 0.0
    %1195 = vmatprep.subr.mxu0 0.0
    %1196 = vmatpush1.msra.mxu0 0.0
    %1197 = vmatprep.subr.mxu0 0.0
    %1198 = vmatpush1.msra.mxu0 0.0
    %1199 = vmatprep.subr.mxu0 0.0
    %1200 = vmatpush1.msra.mxu0 0.0
    %1201 = vmatprep.subr.mxu0 0.0
    %1202 = vmatpush1.msra.mxu0 0.0
    %1203 = vmatprep.subr.mxu0 0.0
    %1204 = vmatpush1.msra.mxu0 0.0
    %1205 = vmatprep.subr.mxu0 0.0
    %1206 = vmatpush1.msra.mxu0 0.0
    %1207 = vmatprep.subr.mxu0 0.0
    %1208 = vmatpush1.msra.mxu0 0.0
    %1209 = vmatprep.subr.mxu0 0.0
    %1210 = vmatpush1.msra.mxu0 0.0
    %1211 = vmatprep.subr.mxu0 0.0
    %1212 = vmatpush1.msra.mxu0 0.0
    %1213 = vmatprep.subr.mxu0 0.0
    %1214 = vmatpush1.msra.mxu0 0.0
    %1215 = vmatprep.subr.mxu0 0.0
    %1216 = vmatpush1.msra.mxu0 0.0
    %1217 = vmatprep.subr.mxu0 0.0
    %1218 = vmatpush1.msra.mxu0 0.0
    %1219 = vmatprep.subr.mxu0 0.0
    %1220 = vmatpush1.msra.mxu0 0.0
    %1221 = vmatprep.subr.mxu0 0.0
    %1222 = vmatpush1.msra.mxu0 0.0
    %1223 = vmatprep.subr.mxu0 0.0
    %1224 = vmatpush1.msra.mxu0 0.0
    %1225 = vmatprep.subr.mxu0 0.0
    %1226 = vmatpush1.msra.mxu0 0.0
    %1227 = vmatprep.subr.mxu0 0.0
    %1228 = vmatpush1.msra.mxu0 0.0
    %1229 = vmatprep.subr.mxu0 0.0
    %1230 = vmatpush1.msra.mxu0 0.0
    %1231 = vmatprep.subr.mxu0 0.0
    %1232 = vmatpush1.msra.mxu0 0.0
    %1233 = vmatprep.subr.mxu0 0.0
    %1234 = vmatpush1.msra.mxu0 0.0
    %1235 = vmatprep.mubr.f32.mxu0 0.0
    %1236 = vmatmul.mubr.f32.gmra.mrb[0].mxu0 %v1169
    %v1237 = vpop.f32.mrb[0].mxu0
    %v1238 = vadd.f32 0.0, %v1237
    %v1239 = vpop.f32.mrb[0].mxu0
    %1240 = vdwg.mxu0
    %v1241 = vadd.f32 %v1167, %v1238
    %v1242 = vtanh.pop %v1241
    %1243 = vst.msk [vmem:[#allocation3 + $0x1a] sm:$0x3] %vm241, %v1242
    %v1244 = vld [vmem:[#allocation2 + $0x1c] sm:$0x3]
    %v1246 = vsel %vm156, %v1242, 0
    %1248 = vmatprep.subr.mxu0 0.0
    %1249 = vmatpush1.msra.mxu0 %v161
    %1250 = vmatprep.subr.mxu0 0.0
    %1251 = vmatpush1.msra.mxu0 %v162
    %1252 = vmatprep.subr.mxu0 0.0
    %1253 = vmatpush1.msra.mxu0 %v163
    %1254 = vmatprep.subr.mxu0 0.0
    %1255 = vmatpush1.msra.mxu0 %v164
    %1256 = vmatprep.subr.mxu0 0.0
    %1257 = vmatpush1.msra.mxu0 0.0
    %1258 = vmatprep.subr.mxu0 0.0
    %1259 = vmatpush1.msra.mxu0 0.0
    %1260 = vmatprep.subr.mxu0 0.0
    %1261 = vmatpush1.msra.mxu0 0.0
    %1262 = vmatprep.subr.mxu0 0.0
    %1263 = vmatpush1.msra.mxu0 0.0
    %1264 = vmatprep.subr.mxu0 0.0
    %1265 = vmatpush1.msra.mxu0 0.0
    %1266 = vmatprep.subr.mxu0 0.0
    %1267 = vmatpush1.msra.mxu0 0.0
    %1268 = vmatprep.subr.mxu0 0.0
    %1269 = vmatpush1.msra.mxu0 0.0
    %1270 = vmatprep.subr.mxu0 0.0
    %1271 = vmatpush1.msra.mxu0 0.0
    %1272 = vmatprep.subr.mxu0 0.0
    %1273 = vmatpush1.msra.mxu0 0.0
    %1274 = vmatprep.subr.mxu0 0.0
    %1275 = vmatpush1.msra.mxu0 0.0
    %1276 = vmatprep.subr.mxu0 0.0
    %1277 = vmatpush1.msra.mxu0 0.0
    %1278 = vmatprep.subr.mxu0 0.0
    %1279 = vmatpush1.msra.mxu0 0.0
    %1280 = vmatprep.subr.mxu0 0.0
    %1281 = vmatpush1.msra.mxu0 0.0
    %1282 = vmatprep.subr.mxu0 0.0
    %1283 = vmatpush1.msra.mxu0 0.0
    %1284 = vmatprep.subr.mxu0 0.0
    %1285 = vmatpush1.msra.mxu0 0.0
    %1286 = vmatprep.subr.mxu0 0.0
    %1287 = vmatpush1.msra.mxu0 0.0
    %1288 = vmatprep.subr.mxu0 0.0
    %1289 = vmatpush1.msra.mxu0 0.0
    %1290 = vmatprep.subr.mxu0 0.0
    %1291 = vmatpush1.msra.mxu0 0.0
    %1292 = vmatprep.subr.mxu0 0.0
    %1293 = vmatpush1.msra.mxu0 0.0
    %1294 = vmatprep.subr.mxu0 0.0
    %1295 = vmatpush1.msra.mxu0 0.0
    %1296 = vmatprep.subr.mxu0 0.0
    %1297 = vmatpush1.msra.mxu0 0.0
    %1298 = vmatprep.subr.mxu0 0.0
    %1299 = vmatpush1.msra.mxu0 0.0
    %1300 = vmatprep.subr.mxu0 0.0
    %1301 = vmatpush1.msra.mxu0 0.0
    %1302 = vmatprep.subr.mxu0 0.0
    %1303 = vmatpush1.msra.mxu0 0.0
    %1304 = vmatprep.subr.mxu0 0.0
    %1305 = vmatpush1.msra.mxu0 0.0
    %1306 = vmatprep.subr.mxu0 0.0
    %1307 = vmatpush1.msra.mxu0 0.0
    %1308 = vmatprep.subr.mxu0 0.0
    %1309 = vmatpush1.msra.mxu0 0.0
    %1310 = vmatprep.subr.mxu0 0.0
    %1311 = vmatpush1.msra.mxu0 0.0
    %1312 = vmatprep.mubr.f32.mxu0 0.0
    %1313 = vmatmul.mubr.f32.gmra.mrb[0].mxu0 %v1246
    %v1314 = vpop.f32.mrb[0].mxu0
    %v1315 = vadd.f32 0.0, %v1314
    %v1316 = vpop.f32.mrb[0].mxu0
    %1317 = vdwg.mxu0
    %v1318 = vadd.f32 %v1244, %v1315
    %v1319 = vtanh.pop %v1318
    %1320 = vst.msk [vmem:[#allocation3 + $0x1c] sm:$0x3] %vm241, %v1319
    %v1321 = vld [vmem:[#allocation2 + $0x1e] sm:$0x3]
    %v1323 = vsel %vm156, %v1319, 0
    %1325 = vmatprep.subr.mxu0 0.0
    %1326 = vmatpush1.msra.mxu0 %v161
    %1327 = vmatprep.subr.mxu0 0.0
    %1328 = vmatpush1.msra.mxu0 %v162
    %1329 = vmatprep.subr.mxu0 0.0
    %1330 = vmatpush1.msra.mxu0 %v163
    %1331 = vmatprep.subr.mxu0 0.0
    %1332 = vmatpush1.msra.mxu0 %v164
    %1333 = vmatprep.subr.mxu0 0.0
    %1334 = vmatpush1.msra.mxu0 0.0
    %1335 = vmatprep.subr.mxu0 0.0
    %1336 = vmatpush1.msra.mxu0 0.0
    %1337 = vmatprep.subr.mxu0 0.0
    %1338 = vmatpush1.msra.mxu0 0.0
    %1339 = vmatprep.subr.mxu0 0.0
    %1340 = vmatpush1.msra.mxu0 0.0
    %1341 = vmatprep.subr.mxu0 0.0
    %1342 = vmatpush1.msra.mxu0 0.0
    %1343 = vmatprep.subr.mxu0 0.0
    %1344 = vmatpush1.msra.mxu0 0.0
    %1345 = vmatprep.subr.mxu0 0.0
    %1346 = vmatpush1.msra.mxu0 0.0
    %1347 = vmatprep.subr.mxu0 0.0
    %1348 = vmatpush1.msra.mxu0 0.0
    %1349 = vmatprep.subr.mxu0 0.0
    %1350 = vmatpush1.msra.mxu0 0.0
    %1351 = vmatprep.subr.mxu0 0.0
    %1352 = vmatpush1.msra.mxu0 0.0
    %1353 = vmatprep.subr.mxu0 0.0
    %1354 = vmatpush1.msra.mxu0 0.0
    %1355 = vmatprep.subr.mxu0 0.0
    %1356 = vmatpush1.msra.mxu0 0.0
    %1357 = vmatprep.subr.mxu0 0.0
    %1358 = vmatpush1.msra.mxu0 0.0
    %1359 = vmatprep.subr.mxu0 0.0
    %1360 = vmatpush1.msra.mxu0 0.0
    %1361 = vmatprep.subr.mxu0 0.0
    %1362 = vmatpush1.msra.mxu0 0.0
    %1363 = vmatprep.subr.mxu0 0.0
    %1364 = vmatpush1.msra.mxu0 0.0
    %1365 = vmatprep.subr.mxu0 0.0
    %1366 = vmatpush1.msra.mxu0 0.0
    %1367 = vmatprep.subr.mxu0 0.0
    %1368 = vmatpush1.msra.mxu0 0.0
    %1369 = vmatprep.subr.mxu0 0.0
    %1370 = vmatpush1.msra.mxu0 0.0
    %1371 = vmatprep.subr.mxu0 0.0
    %1372 = vmatpush1.msra.mxu0 0.0
    %1373 = vmatprep.subr.mxu0 0.0
    %1374 = vmatpush1.msra.mxu0 0.0
    %1375 = vmatprep.subr.mxu0 0.0
    %1376 = vmatpush1.msra.mxu0 0.0
    %1377 = vmatprep.subr.mxu0 0.0
    %1378 = vmatpush1.msra.mxu0 0.0
    %1379 = vmatprep.subr.mxu0 0.0
    %1380 = vmatpush1.msra.mxu0 0.0
    %1381 = vmatprep.subr.mxu0 0.0
    %1382 = vmatpush1.msra.mxu0 0.0
    %1383 = vmatprep.subr.mxu0 0.0
    %1384 = vmatpush1.msra.mxu0 0.0
    %1385 = vmatprep.subr.mxu0 0.0
    %1386 = vmatpush1.msra.mxu0 0.0
    %1387 = vmatprep.subr.mxu0 0.0
    %1388 = vmatpush1.msra.mxu0 0.0
    %1389 = vmatprep.mubr.f32.mxu0 0.0
    %1390 = vmatmul.mubr.f32.gmra.mrb[0].mxu0 %v1323
    %v1391 = vpop.f32.mrb[0].mxu0
    %v1392 = vadd.f32 0.0, %v1391
    %v1393 = vpop.f32.mrb[0].mxu0
    %1394 = vdwg.mxu0
    %v1395 = vadd.f32 %v1321, %v1392
    %v1396 = vtanh.pop %v1395
    %1397 = vst.msk [vmem:[#allocation3 + $0x1e] sm:$0x3] %vm241, %v1396
    %v1398 = vld [vmem:[#allocation3] sm:$0xff]
    %v1399 = vld [vmem:[#allocation3 + $0x8] sm:$0xff]
    %v1400 = vld [vmem:[#allocation3 + $0x10] sm:$0xff]
    %v1401 = vld [vmem:[#allocation3 + $0x18] sm:$0xff]
    %v1402 = vld [vmem:[%s4] sm:$0xff]
    %v1403 = vld [vmem:[%s4 + $0x8] sm:$0xff]
    %v1404 = vld [vmem:[%s4 + $0x10] sm:$0xff]
    %v1405 = vld [vmem:[%s4 + $0x18] sm:$0xff]
    %v1406 = vld [vmem:[%s6] sm:$0x1]
    %v1408 = vlaneseq
    %v1409 = vshrl.u32 %v1408, 7
    %v1410 = vsub.s32 0, %v1409
    %v1411 = vrot.slane %v1406, %v1410
    %v1414 = vsel %vm156, %v1398, 0
    %v1417 = vsel %vm156, %v1399, 0
    %v1420 = vsel %vm156, %v1400, 0
    %v1423 = vsel %vm156, %v1401, 0
    %1425 = vmatprep.subr.mxu0 0.0
    %1426 = vmatpush1.msra.mxu0 %v1402
    %1427 = vmatprep.subr.mxu0 0.0
    %1428 = vmatpush1.msra.mxu0 %v1403
    %1429 = vmatprep.subr.mxu0 0.0
    %1430 = vmatpush1.msra.mxu0 %v1404
    %1431 = vmatprep.subr.mxu0 0.0
    %1432 = vmatpush1.msra.mxu0 %v1405
    %1433 = vmatprep.subr.mxu0 0.0
    %1434 = vmatpush1.msra.mxu0 0.0
    %1435 = vmatprep.subr.mxu0 0.0
    %1436 = vmatpush1.msra.mxu0 0.0
    %1437 = vmatprep.subr.mxu0 0.0
    %1438 = vmatpush1.msra.mxu0 0.0
    %1439 = vmatprep.subr.mxu0 0.0
    %1440 = vmatpush1.msra.mxu0 0.0
    %1441 = vmatprep.subr.mxu0 0.0
    %1442 = vmatpush1.msra.mxu0 0.0
    %1443 = vmatprep.subr.mxu0 0.0
    %1444 = vmatpush1.msra.mxu0 0.0
    %1445 = vmatprep.subr.mxu0 0.0
    %1446 = vmatpush1.msra.mxu0 0.0
    %1447 = vmatprep.subr.mxu0 0.0
    %1448 = vmatpush1.msra.mxu0 0.0
    %1449 = vmatprep.subr.mxu0 0.0
    %1450 = vmatpush1.msra.mxu0 0.0
    %1451 = vmatprep.subr.mxu0 0.0
    %1452 = vmatpush1.msra.mxu0 0.0
    %1453 = vmatprep.subr.mxu0 0.0
    %1454 = vmatpush1.msra.mxu0 0.0
    %1455 = vmatprep.subr.mxu0 0.0
    %1456 = vmatpush1.msra.mxu0 0.0
    %1457 = vmatprep.subr.mxu0 0.0
    %1458 = vmatpush1.msra.mxu0 0.0
    %1459 = vmatprep.subr.mxu0 0.0
    %1460 = vmatpush1.msra.mxu0 0.0
    %1461 = vmatprep.subr.mxu0 0.0
    %1462 = vmatpush1.msra.mxu0 0.0
    %1463 = vmatprep.subr.mxu0 0.0
    %1464 = vmatpush1.msra.mxu0 0.0
    %1465 = vmatprep.subr.mxu0 0.0
    %1466 = vmatpush1.msra.mxu0 0.0
    %1467 = vmatprep.subr.mxu0 0.0
    %1468 = vmatpush1.msra.mxu0 0.0
    %1469 = vmatprep.subr.mxu0 0.0
    %1470 = vmatpush1.msra.mxu0 0.0
    %1471 = vmatprep.subr.mxu0 0.0
    %1472 = vmatpush1.msra.mxu0 0.0
    %1473 = vmatprep.subr.mxu0 0.0
    %1474 = vmatpush1.msra.mxu0 0.0
    %1475 = vmatprep.subr.mxu0 0.0
    %1476 = vmatpush1.msra.mxu0 0.0
    %1477 = vmatprep.subr.mxu0 0.0
    %1478 = vmatpush1.msra.mxu0 0.0
    %1479 = vmatprep.subr.mxu0 0.0
    %1480 = vmatpush1.msra.mxu0 0.0
    %1481 = vmatprep.subr.mxu0 0.0
    %1482 = vmatpush1.msra.mxu0 0.0
    %1483 = vmatprep.subr.mxu0 0.0
    %1484 = vmatpush1.msra.mxu0 0.0
    %1485 = vmatprep.subr.mxu0 0.0
    %1486 = vmatpush1.msra.mxu0 0.0
    %1487 = vmatprep.subr.mxu0 0.0
    %1488 = vmatpush1.msra.mxu0 0.0
    %1489 = vmatprep.mubr.f32.mxu0 0.0
    %1490 = vmatmul.mubr.f32.gmra.mrb[0].mxu0 %v1414
    %v1491 = vpop.f32.mrb[0].mxu0
    %v1492 = vadd.f32 %v1411, %v1491
    %v1493 = vpop.f32.mrb[0].mxu0
    %1494 = vmatprep.mubr.f32.mxu0 0.0
    %1495 = vmatmul.mubr.f32.gmra.mrb[0].mxu0 %v1417
    %v1496 = vpop.f32.mrb[0].mxu0
    %v1497 = vadd.f32 %v1411, %v1496
    %v1498 = vpop.f32.mrb[0].mxu0
    %1499 = vmatprep.mubr.f32.mxu0 0.0
    %1500 = vmatmul.mubr.f32.gmra.mrb[0].mxu0 %v1420
    %v1501 = vpop.f32.mrb[0].mxu0
    %v1502 = vadd.f32 %v1411, %v1501
    %v1503 = vpop.f32.mrb[0].mxu0
    %1504 = vmatprep.mubr.f32.mxu0 0.0
    %1505 = vmatmul.mubr.f32.gmra.mrb[0].mxu0 %v1423
    %v1506 = vpop.f32.mrb[0].mxu0
    %v1507 = vadd.f32 %v1411, %v1506
    %v1508 = vpop.f32.mrb[0].mxu0
    %1509 = vdwg.mxu0
    %1510 = vst.msk [vmem:[#allocation2] sm:$0xff] %vm156, %v1492
    %1511 = vst.msk [vmem:[#allocation2 + $0x8] sm:$0xff] %vm156, %v1497
    %1512 = vst.msk [vmem:[#allocation2 + $0x10] sm:$0xff] %vm156, %v1502
    %1513 = vst.msk [vmem:[#allocation2 + $0x18] sm:$0xff] %vm156, %v1507
    %v1514 = vld [vmem:[#allocation4] sm:$0xff]
    %v1515 = vld [vmem:[#allocation4 + $0x8] sm:$0xff]
    %v1516 = vld [vmem:[#allocation4 + $0x10] sm:$0xff]
    %v1517 = vld [vmem:[#allocation4 + $0x18] sm:$0xff]
    %v1518 = vld [vmem:[#allocation2] sm:$0x3]
    %1519 = vmatprep.subr.mxu0 0.0
    %1520 = vmatpush1.msra.mxu0 %v1514
    %1521 = vmatprep.subr.mxu0 0.0
    %1522 = vmatpush1.msra.mxu0 %v1515
    %1523 = vmatprep.subr.mxu0 0.0
    %1524 = vmatpush1.msra.mxu0 %v1516
    %1525 = vmatprep.subr.mxu0 0.0
    %1526 = vmatpush1.msra.mxu0 %v1517
    %1527 = vmatprep.subr.mxu0 0.0
    %1528 = vmatpush1.msra.mxu0 0.0
    %1529 = vmatprep.subr.mxu0 0.0
    %1530 = vmatpush1.msra.mxu0 0.0
    %1531 = vmatprep.subr.mxu0 0.0
    %1532 = vmatpush1.msra.mxu0 0.0
    %1533 = vmatprep.subr.mxu0 0.0
    %1534 = vmatpush1.msra.mxu0 0.0
    %1535 = vmatprep.subr.mxu0 0.0
    %1536 = vmatpush1.msra.mxu0 0.0
    %1537 = vmatprep.subr.mxu0 0.0
    %1538 = vmatpush1.msra.mxu0 0.0
    %1539 = vmatprep.subr.mxu0 0.0
    %1540 = vmatpush1.msra.mxu0 0.0
    %1541 = vmatprep.subr.mxu0 0.0
    %1542 = vmatpush1.msra.mxu0 0.0
    %1543 = vmatprep.subr.mxu0 0.0
    %1544 = vmatpush1.msra.mxu0 0.0
    %1545 = vmatprep.subr.mxu0 0.0
    %1546 = vmatpush1.msra.mxu0 0.0
    %1547 = vmatprep.subr.mxu0 0.0
    %1548 = vmatpush1.msra.mxu0 0.0
    %1549 = vmatprep.subr.mxu0 0.0
    %1550 = vmatpush1.msra.mxu0 0.0
    %1551 = vmatprep.subr.mxu0 0.0
    %1552 = vmatpush1.msra.mxu0 0.0
    %1553 = vmatprep.subr.mxu0 0.0
    %1554 = vmatpush1.msra.mxu0 0.0
    %1555 = vmatprep.subr.mxu0 0.0
    %1556 = vmatpush1.msra.mxu0 0.0
    %1557 = vmatprep.subr.mxu0 0.0
    %1558 = vmatpush1.msra.mxu0 0.0
    %1559 = vmatprep.subr.mxu0 0.0
    %1560 = vmatpush1.msra.mxu0 0.0
    %1561 = vmatprep.subr.mxu0 0.0
    %1562 = vmatpush1.msra.mxu0 0.0
    %1563 = vmatprep.subr.mxu0 0.0
    %1564 = vmatpush1.msra.mxu0 0.0
    %1565 = vmatprep.subr.mxu0 0.0
    %1566 = vmatpush1.msra.mxu0 0.0
    %1567 = vmatprep.subr.mxu0 0.0
    %1568 = vmatpush1.msra.mxu0 0.0
    %1569 = vmatprep.subr.mxu0 0.0
    %1570 = vmatpush1.msra.mxu0 0.0
    %1571 = vmatprep.subr.mxu0 0.0
    %1572 = vmatpush1.msra.mxu0 0.0
    %1573 = vmatprep.subr.mxu0 0.0
    %1574 = vmatpush1.msra.mxu0 0.0
    %1575 = vmatprep.subr.mxu0 0.0
    %1576 = vmatpush1.msra.mxu0 0.0
    %1577 = vmatprep.subr.mxu0 0.0
    %1578 = vmatpush1.msra.mxu0 0.0
    %1579 = vmatprep.subr.mxu0 0.0
    %1580 = vmatpush1.msra.mxu0 0.0
    %1581 = vmatprep.subr.mxu0 0.0
    %1582 = vmatpush1.msra.mxu0 0.0
    %1583 = vmatprep.mubr.f32.mxu0 0.0
    %1584 = vmatmul.mubr.f32.gmra.mrb[0].mxu0 %v167
    %v1585 = vpop.f32.mrb[0].mxu0
    %v1586 = vadd.f32 0.0, %v1585
    %v1587 = vpop.f32.mrb[0].mxu0
    %1588 = vdwg.mxu0
    %v1589 = vadd.f32 %v1518, %v1586
    %v1590 = vtanh.pop %v1589
    %1591 = vst.msk [vmem:[#allocation3] sm:$0x3] %vm241, %v1590
    %v1592 = vld [vmem:[#allocation2 + $0x2] sm:$0x3]
    %v1594 = vsel %vm156, %v1590, 0
    %1596 = vmatprep.subr.mxu0 0.0
    %1597 = vmatpush1.msra.mxu0 %v1514
    %1598 = vmatprep.subr.mxu0 0.0
    %1599 = vmatpush1.msra.mxu0 %v1515
    %1600 = vmatprep.subr.mxu0 0.0
    %1601 = vmatpush1.msra.mxu0 %v1516
    %1602 = vmatprep.subr.mxu0 0.0
    %1603 = vmatpush1.msra.mxu0 %v1517
    %1604 = vmatprep.subr.mxu0 0.0
    %1605 = vmatpush1.msra.mxu0 0.0
    %1606 = vmatprep.subr.mxu0 0.0
    %1607 = vmatpush1.msra.mxu0 0.0
    %1608 = vmatprep.subr.mxu0 0.0
    %1609 = vmatpush1.msra.mxu0 0.0
    %1610 = vmatprep.subr.mxu0 0.0
    %1611 = vmatpush1.msra.mxu0 0.0
    %1612 = vmatprep.subr.mxu0 0.0
    %1613 = vmatpush1.msra.mxu0 0.0
    %1614 = vmatprep.subr.mxu0 0.0
    %1615 = vmatpush1.msra.mxu0 0.0
    %1616 = vmatprep.subr.mxu0 0.0
    %1617 = vmatpush1.msra.mxu0 0.0
    %1618 = vmatprep.subr.mxu0 0.0
    %1619 = vmatpush1.msra.mxu0 0.0
    %1620 = vmatprep.subr.mxu0 0.0
    %1621 = vmatpush1.msra.mxu0 0.0
    %1622 = vmatprep.subr.mxu0 0.0
    %1623 = vmatpush1.msra.mxu0 0.0
    %1624 = vmatprep.subr.mxu0 0.0
    %1625 = vmatpush1.msra.mxu0 0.0
    %1626 = vmatprep.subr.mxu0 0.0
    %1627 = vmatpush1.msra.mxu0 0.0
    %1628 = vmatprep.subr.mxu0 0.0
    %1629 = vmatpush1.msra.mxu0 0.0
    %1630 = vmatprep.subr.mxu0 0.0
    %1631 = vmatpush1.msra.mxu0 0.0
    %1632 = vmatprep.subr.mxu0 0.0
    %1633 = vmatpush1.msra.mxu0 0.0
    %1634 = vmatprep.subr.mxu0 0.0
    %1635 = vmatpush1.msra.mxu0 0.0
    %1636 = vmatprep.subr.mxu0 0.0
    %1637 = vmatpush1.msra.mxu0 0.0
    %1638 = vmatprep.subr.mxu0 0.0
    %1639 = vmatpush1.msra.mxu0 0.0
    %1640 = vmatprep.subr.mxu0 0.0
    %1641 = vmatpush1.msra.mxu0 0.0
    %1642 = vmatprep.subr.mxu0 0.0
    %1643 = vmatpush1.msra.mxu0 0.0
    %1644 = vmatprep.subr.mxu0 0.0
    %1645 = vmatpush1.msra.mxu0 0.0
    %1646 = vmatprep.subr.mxu0 0.0
    %1647 = vmatpush1.msra.mxu0 0.0
    %1648 = vmatprep.subr.mxu0 0.0
    %1649 = vmatpush1.msra.mxu0 0.0
    %1650 = vmatprep.subr.mxu0 0.0
    %1651 = vmatpush1.msra.mxu0 0.0
    %1652 = vmatprep.subr.mxu0 0.0
    %1653 = vmatpush1.msra.mxu0 0.0
    %1654 = vmatprep.subr.mxu0 0.0
    %1655 = vmatpush1.msra.mxu0 0.0
    %1656 = vmatprep.subr.mxu0 0.0
    %1657 = vmatpush1.msra.mxu0 0.0
    %1658 = vmatprep.subr.mxu0 0.0
    %1659 = vmatpush1.msra.mxu0 0.0
    %1660 = vmatprep.mubr.f32.mxu0 0.0
    %1661 = vmatmul.mubr.f32.gmra.mrb[0].mxu0 %v1594
    %v1662 = vpop.f32.mrb[0].mxu0
    %v1663 = vadd.f32 0.0, %v1662
    %v1664 = vpop.f32.mrb[0].mxu0
    %1665 = vdwg.mxu0
    %v1666 = vadd.f32 %v1592, %v1663
    %v1667 = vtanh.pop %v1666
    %1668 = vst.msk [vmem:[#allocation3 + $0x2] sm:$0x3] %vm241, %v1667
    %v1669 = vld [vmem:[#allocation2 + $0x4] sm:$0x3]
    %v1671 = vsel %vm156, %v1667, 0
    %1673 = vmatprep.subr.mxu0 0.0
    %1674 = vmatpush1.msra.mxu0 %v1514
    %1675 = vmatprep.subr.mxu0 0.0
    %1676 = vmatpush1.msra.mxu0 %v1515
    %1677 = vmatprep.subr.mxu0 0.0
    %1678 = vmatpush1.msra.mxu0 %v1516
    %1679 = vmatprep.subr.mxu0 0.0
    %1680 = vmatpush1.msra.mxu0 %v1517
    %1681 = vmatprep.subr.mxu0 0.0
    %1682 = vmatpush1.msra.mxu0 0.0
    %1683 = vmatprep.subr.mxu0 0.0
    %1684 = vmatpush1.msra.mxu0 0.0
    %1685 = vmatprep.subr.mxu0 0.0
    %1686 = vmatpush1.msra.mxu0 0.0
    %1687 = vmatprep.subr.mxu0 0.0
    %1688 = vmatpush1.msra.mxu0 0.0
    %1689 = vmatprep.subr.mxu0 0.0
    %1690 = vmatpush1.msra.mxu0 0.0
    %1691 = vmatprep.subr.mxu0 0.0
    %1692 = vmatpush1.msra.mxu0 0.0
    %1693 = vmatprep.subr.mxu0 0.0
    %1694 = vmatpush1.msra.mxu0 0.0
    %1695 = vmatprep.subr.mxu0 0.0
    %1696 = vmatpush1.msra.mxu0 0.0
    %1697 = vmatprep.subr.mxu0 0.0
    %1698 = vmatpush1.msra.mxu0 0.0
    %1699 = vmatprep.subr.mxu0 0.0
    %1700 = vmatpush1.msra.mxu0 0.0
    %1701 = vmatprep.subr.mxu0 0.0
    %1702 = vmatpush1.msra.mxu0 0.0
    %1703 = vmatprep.subr.mxu0 0.0
    %1704 = vmatpush1.msra.mxu0 0.0
    %1705 = vmatprep.subr.mxu0 0.0
    %1706 = vmatpush1.msra.mxu0 0.0
    %1707 = vmatprep.subr.mxu0 0.0
    %1708 = vmatpush1.msra.mxu0 0.0
    %1709 = vmatprep.subr.mxu0 0.0
    %1710 = vmatpush1.msra.mxu0 0.0
    %1711 = vmatprep.subr.mxu0 0.0
    %1712 = vmatpush1.msra.mxu0 0.0
    %1713 = vmatprep.subr.mxu0 0.0
    %1714 = vmatpush1.msra.mxu0 0.0
    %1715 = vmatprep.subr.mxu0 0.0
    %1716 = vmatpush1.msra.mxu0 0.0
    %1717 = vmatprep.subr.mxu0 0.0
    %1718 = vmatpush1.msra.mxu0 0.0
    %1719 = vmatprep.subr.mxu0 0.0
    %1720 = vmatpush1.msra.mxu0 0.0
    %1721 = vmatprep.subr.mxu0 0.0
    %1722 = vmatpush1.msra.mxu0 0.0
    %1723 = vmatprep.subr.mxu0 0.0
    %1724 = vmatpush1.msra.mxu0 0.0
    %1725 = vmatprep.subr.mxu0 0.0
    %1726 = vmatpush1.msra.mxu0 0.0
    %1727 = vmatprep.subr.mxu0 0.0
    %1728 = vmatpush1.msra.mxu0 0.0
    %1729 = vmatprep.subr.mxu0 0.0
    %1730 = vmatpush1.msra.mxu0 0.0
    %1731 = vmatprep.subr.mxu0 0.0
    %1732 = vmatpush1.msra.mxu0 0.0
    %1733 = vmatprep.subr.mxu0 0.0
    %1734 = vmatpush1.msra.mxu0 0.0
    %1735 = vmatprep.subr.mxu0 0.0
    %1736 = vmatpush1.msra.mxu0 0.0
    %1737 = vmatprep.mubr.f32.mxu0 0.0
    %1738 = vmatmul.mubr.f32.gmra.mrb[0].mxu0 %v1671
    %v1739 = vpop.f32.mrb[0].mxu0
    %v1740 = vadd.f32 0.0, %v1739
    %v1741 = vpop.f32.mrb[0].mxu0
    %1742 = vdwg.mxu0
    %v1743 = vadd.f32 %v1669, %v1740
    %v1744 = vtanh.pop %v1743
    %1745 = vst.msk [vmem:[#allocation3 + $0x4] sm:$0x3] %vm241, %v1744
    %v1746 = vld [vmem:[#allocation2 + $0x6] sm:$0x3]
    %v1748 = vsel %vm156, %v1744, 0
    %1750 = vmatprep.subr.mxu0 0.0
    %1751 = vmatpush1.msra.mxu0 %v1514
    %1752 = vmatprep.subr.mxu0 0.0
    %1753 = vmatpush1.msra.mxu0 %v1515
    %1754 = vmatprep.subr.mxu0 0.0
    %1755 = vmatpush1.msra.mxu0 %v1516
    %1756 = vmatprep.subr.mxu0 0.0
    %1757 = vmatpush1.msra.mxu0 %v1517
    %1758 = vmatprep.subr.mxu0 0.0
    %1759 = vmatpush1.msra.mxu0 0.0
    %1760 = vmatprep.subr.mxu0 0.0
    %1761 = vmatpush1.msra.mxu0 0.0
    %1762 = vmatprep.subr.mxu0 0.0
    %1763 = vmatpush1.msra.mxu0 0.0
    %1764 = vmatprep.subr.mxu0 0.0
    %1765 = vmatpush1.msra.mxu0 0.0
    %1766 = vmatprep.subr.mxu0 0.0
    %1767 = vmatpush1.msra.mxu0 0.0
    %1768 = vmatprep.subr.mxu0 0.0
    %1769 = vmatpush1.msra.mxu0 0.0
    %1770 = vmatprep.subr.mxu0 0.0
    %1771 = vmatpush1.msra.mxu0 0.0
    %1772 = vmatprep.subr.mxu0 0.0
    %1773 = vmatpush1.msra.mxu0 0.0
    %1774 = vmatprep.subr.mxu0 0.0
    %1775 = vmatpush1.msra.mxu0 0.0
    %1776 = vmatprep.subr.mxu0 0.0
    %1777 = vmatpush1.msra.mxu0 0.0
    %1778 = vmatprep.subr.mxu0 0.0
    %1779 = vmatpush1.msra.mxu0 0.0
    %1780 = vmatprep.subr.mxu0 0.0
    %1781 = vmatpush1.msra.mxu0 0.0
    %1782 = vmatprep.subr.mxu0 0.0
    %1783 = vmatpush1.msra.mxu0 0.0
    %1784 = vmatprep.subr.mxu0 0.0
    %1785 = vmatpush1.msra.mxu0 0.0
    %1786 = vmatprep.subr.mxu0 0.0
    %1787 = vmatpush1.msra.mxu0 0.0
    %1788 = vmatprep.subr.mxu0 0.0
    %1789 = vmatpush1.msra.mxu0 0.0
    %1790 = vmatprep.subr.mxu0 0.0
    %1791 = vmatpush1.msra.mxu0 0.0
    %1792 = vmatprep.subr.mxu0 0.0
    %1793 = vmatpush1.msra.mxu0 0.0
    %1794 = vmatprep.subr.mxu0 0.0
    %1795 = vmatpush1.msra.mxu0 0.0
    %1796 = vmatprep.subr.mxu0 0.0
    %1797 = vmatpush1.msra.mxu0 0.0
    %1798 = vmatprep.subr.mxu0 0.0
    %1799 = vmatpush1.msra.mxu0 0.0
    %1800 = vmatprep.subr.mxu0 0.0
    %1801 = vmatpush1.msra.mxu0 0.0
    %1802 = vmatprep.subr.mxu0 0.0
    %1803 = vmatpush1.msra.mxu0 0.0
    %1804 = vmatprep.subr.mxu0 0.0
    %1805 = vmatpush1.msra.mxu0 0.0
    %1806 = vmatprep.subr.mxu0 0.0
    %1807 = vmatpush1.msra.mxu0 0.0
    %1808 = vmatprep.subr.mxu0 0.0
    %1809 = vmatpush1.msra.mxu0 0.0
    %1810 = vmatprep.subr.mxu0 0.0
    %1811 = vmatpush1.msra.mxu0 0.0
    %1812 = vmatprep.subr.mxu0 0.0
    %1813 = vmatpush1.msra.mxu0 0.0
    %1814 = vmatprep.mubr.f32.mxu0 0.0
    %1815 = vmatmul.mubr.f32.gmra.mrb[0].mxu0 %v1748
    %v1816 = vpop.f32.mrb[0].mxu0
    %v1817 = vadd.f32 0.0, %v1816
    %v1818 = vpop.f32.mrb[0].mxu0
    %1819 = vdwg.mxu0
    %v1820 = vadd.f32 %v1746, %v1817
    %v1821 = vtanh.pop %v1820
    %1822 = vst.msk [vmem:[#allocation3 + $0x6] sm:$0x3] %vm241, %v1821
    %v1823 = vld [vmem:[#allocation2 + $0x8] sm:$0x3]
    %v1825 = vsel %vm156, %v1821, 0
    %1827 = vmatprep.subr.mxu0 0.0
    %1828 = vmatpush1.msra.mxu0 %v1514
    %1829 = vmatprep.subr.mxu0 0.0
    %1830 = vmatpush1.msra.mxu0 %v1515
    %1831 = vmatprep.subr.mxu0 0.0
    %1832 = vmatpush1.msra.mxu0 %v1516
    %1833 = vmatprep.subr.mxu0 0.0
    %1834 = vmatpush1.msra.mxu0 %v1517
    %1835 = vmatprep.subr.mxu0 0.0
    %1836 = vmatpush1.msra.mxu0 0.0
    %1837 = vmatprep.subr.mxu0 0.0
    %1838 = vmatpush1.msra.mxu0 0.0
    %1839 = vmatprep.subr.mxu0 0.0
    %1840 = vmatpush1.msra.mxu0 0.0
    %1841 = vmatprep.subr.mxu0 0.0
    %1842 = vmatpush1.msra.mxu0 0.0
    %1843 = vmatprep.subr.mxu0 0.0
    %1844 = vmatpush1.msra.mxu0 0.0
    %1845 = vmatprep.subr.mxu0 0.0
    %1846 = vmatpush1.msra.mxu0 0.0
    %1847 = vmatprep.subr.mxu0 0.0
    %1848 = vmatpush1.msra.mxu0 0.0
    %1849 = vmatprep.subr.mxu0 0.0
    %1850 = vmatpush1.msra.mxu0 0.0
    %1851 = vmatprep.subr.mxu0 0.0
    %1852 = vmatpush1.msra.mxu0 0.0
    %1853 = vmatprep.subr.mxu0 0.0
    %1854 = vmatpush1.msra.mxu0 0.0
    %1855 = vmatprep.subr.mxu0 0.0
    %1856 = vmatpush1.msra.mxu0 0.0
    %1857 = vmatprep.subr.mxu0 0.0
    %1858 = vmatpush1.msra.mxu0 0.0
    %1859 = vmatprep.subr.mxu0 0.0
    %1860 = vmatpush1.msra.mxu0 0.0
    %1861 = vmatprep.subr.mxu0 0.0
    %1862 = vmatpush1.msra.mxu0 0.0
    %1863 = vmatprep.subr.mxu0 0.0
    %1864 = vmatpush1.msra.mxu0 0.0
    %1865 = vmatprep.subr.mxu0 0.0
    %1866 = vmatpush1.msra.mxu0 0.0
    %1867 = vmatprep.subr.mxu0 0.0
    %1868 = vmatpush1.msra.mxu0 0.0
    %1869 = vmatprep.subr.mxu0 0.0
    %1870 = vmatpush1.msra.mxu0 0.0
    %1871 = vmatprep.subr.mxu0 0.0
    %1872 = vmatpush1.msra.mxu0 0.0
    %1873 = vmatprep.subr.mxu0 0.0
    %1874 = vmatpush1.msra.mxu0 0.0
    %1875 = vmatprep.subr.mxu0 0.0
    %1876 = vmatpush1.msra.mxu0 0.0
    %1877 = vmatprep.subr.mxu0 0.0
    %1878 = vmatpush1.msra.mxu0 0.0
    %1879 = vmatprep.subr.mxu0 0.0
    %1880 = vmatpush1.msra.mxu0 0.0
    %1881 = vmatprep.subr.mxu0 0.0
    %1882 = vmatpush1.msra.mxu0 0.0
    %1883 = vmatprep.subr.mxu0 0.0
    %1884 = vmatpush1.msra.mxu0 0.0
    %1885 = vmatprep.subr.mxu0 0.0
    %1886 = vmatpush1.msra.mxu0 0.0
    %1887 = vmatprep.subr.mxu0 0.0
    %1888 = vmatpush1.msra.mxu0 0.0
    %1889 = vmatprep.subr.mxu0 0.0
    %1890 = vmatpush1.msra.mxu0 0.0
    %1891 = vmatprep.mubr.f32.mxu0 0.0
    %1892 = vmatmul.mubr.f32.gmra.mrb[0].mxu0 %v1825
    %v1893 = vpop.f32.mrb[0].mxu0
    %v1894 = vadd.f32 0.0, %v1893
    %v1895 = vpop.f32.mrb[0].mxu0
    %1896 = vdwg.mxu0
    %v1897 = vadd.f32 %v1823, %v1894
    %v1898 = vtanh.pop %v1897
    %1899 = vst.msk [vmem:[#allocation3 + $0x8] sm:$0x3] %vm241, %v1898
    %v1900 = vld [vmem:[#allocation2 + $0xa] sm:$0x3]
    %v1902 = vsel %vm156, %v1898, 0
    %1904 = vmatprep.subr.mxu0 0.0
    %1905 = vmatpush1.msra.mxu0 %v1514
    %1906 = vmatprep.subr.mxu0 0.0
    %1907 = vmatpush1.msra.mxu0 %v1515
    %1908 = vmatprep.subr.mxu0 0.0
    %1909 = vmatpush1.msra.mxu0 %v1516
    %1910 = vmatprep.subr.mxu0 0.0
    %1911 = vmatpush1.msra.mxu0 %v1517
    %1912 = vmatprep.subr.mxu0 0.0
    %1913 = vmatpush1.msra.mxu0 0.0
    %1914 = vmatprep.subr.mxu0 0.0
    %1915 = vmatpush1.msra.mxu0 0.0
    %1916 = vmatprep.subr.mxu0 0.0
    %1917 = vmatpush1.msra.mxu0 0.0
    %1918 = vmatprep.subr.mxu0 0.0
    %1919 = vmatpush1.msra.mxu0 0.0
    %1920 = vmatprep.subr.mxu0 0.0
    %1921 = vmatpush1.msra.mxu0 0.0
    %1922 = vmatprep.subr.mxu0 0.0
    %1923 = vmatpush1.msra.mxu0 0.0
    %1924 = vmatprep.subr.mxu0 0.0
    %1925 = vmatpush1.msra.mxu0 0.0
    %1926 = vmatprep.subr.mxu0 0.0
    %1927 = vmatpush1.msra.mxu0 0.0
    %1928 = vmatprep.subr.mxu0 0.0
    %1929 = vmatpush1.msra.mxu0 0.0
    %1930 = vmatprep.subr.mxu0 0.0
    %1931 = vmatpush1.msra.mxu0 0.0
    %1932 = vmatprep.subr.mxu0 0.0
    %1933 = vmatpush1.msra.mxu0 0.0
    %1934 = vmatprep.subr.mxu0 0.0
    %1935 = vmatpush1.msra.mxu0 0.0
    %1936 = vmatprep.subr.mxu0 0.0
    %1937 = vmatpush1.msra.mxu0 0.0
    %1938 = vmatprep.subr.mxu0 0.0
    %1939 = vmatpush1.msra.mxu0 0.0
    %1940 = vmatprep.subr.mxu0 0.0
    %1941 = vmatpush1.msra.mxu0 0.0
    %1942 = vmatprep.subr.mxu0 0.0
    %1943 = vmatpush1.msra.mxu0 0.0
    %1944 = vmatprep.subr.mxu0 0.0
    %1945 = vmatpush1.msra.mxu0 0.0
    %1946 = vmatprep.subr.mxu0 0.0
    %1947 = vmatpush1.msra.mxu0 0.0
    %1948 = vmatprep.subr.mxu0 0.0
    %1949 = vmatpush1.msra.mxu0 0.0
    %1950 = vmatprep.subr.mxu0 0.0
    %1951 = vmatpush1.msra.mxu0 0.0
    %1952 = vmatprep.subr.mxu0 0.0
    %1953 = vmatpush1.msra.mxu0 0.0
    %1954 = vmatprep.subr.mxu0 0.0
    %1955 = vmatpush1.msra.mxu0 0.0
    %1956 = vmatprep.subr.mxu0 0.0
    %1957 = vmatpush1.msra.mxu0 0.0
    %1958 = vmatprep.subr.mxu0 0.0
    %1959 = vmatpush1.msra.mxu0 0.0
    %1960 = vmatprep.subr.mxu0 0.0
    %1961 = vmatpush1.msra.mxu0 0.0
    %1962 = vmatprep.subr.mxu0 0.0
    %1963 = vmatpush1.msra.mxu0 0.0
    %1964 = vmatprep.subr.mxu0 0.0
    %1965 = vmatpush1.msra.mxu0 0.0
    %1966 = vmatprep.subr.mxu0 0.0
    %1967 = vmatpush1.msra.mxu0 0.0
    %1968 = vmatprep.mubr.f32.mxu0 0.0
    %1969 = vmatmul.mubr.f32.gmra.mrb[0].mxu0 %v1902
    %v1970 = vpop.f32.mrb[0].mxu0
    %v1971 = vadd.f32 0.0, %v1970
    %v1972 = vpop.f32.mrb[0].mxu0
    %1973 = vdwg.mxu0
    %v1974 = vadd.f32 %v1900, %v1971
    %v1975 = vtanh.pop %v1974
    %1976 = vst.msk [vmem:[#allocation3 + $0xa] sm:$0x3] %vm241, %v1975
    %v1977 = vld [vmem:[#allocation2 + $0xc] sm:$0x3]
    %v1979 = vsel %vm156, %v1975, 0
    %1981 = vmatprep.subr.mxu0 0.0
    %1982 = vmatpush1.msra.mxu0 %v1514
    %1983 = vmatprep.subr.mxu0 0.0
    %1984 = vmatpush1.msra.mxu0 %v1515
    %1985 = vmatprep.subr.mxu0 0.0
    %1986 = vmatpush1.msra.mxu0 %v1516
    %1987 = vmatprep.subr.mxu0 0.0
    %1988 = vmatpush1.msra.mxu0 %v1517
    %1989 = vmatprep.subr.mxu0 0.0
    %1990 = vmatpush1.msra.mxu0 0.0
    %1991 = vmatprep.subr.mxu0 0.0
    %1992 = vmatpush1.msra.mxu0 0.0
    %1993 = vmatprep.subr.mxu0 0.0
    %1994 = vmatpush1.msra.mxu0 0.0
    %1995 = vmatprep.subr.mxu0 0.0
    %1996 = vmatpush1.msra.mxu0 0.0
    %1997 = vmatprep.subr.mxu0 0.0
    %1998 = vmatpush1.msra.mxu0 0.0
    %1999 = vmatprep.subr.mxu0 0.0
    %2000 = vmatpush1.msra.mxu0 0.0
    %2001 = vmatprep.subr.mxu0 0.0
    %2002 = vmatpush1.msra.mxu0 0.0
    %2003 = vmatprep.subr.mxu0 0.0
    %2004 = vmatpush1.msra.mxu0 0.0
    %2005 = vmatprep.subr.mxu0 0.0
    %2006 = vmatpush1.msra.mxu0 0.0
    %2007 = vmatprep.subr.mxu0 0.0
    %2008 = vmatpush1.msra.mxu0 0.0
    %2009 = vmatprep.subr.mxu0 0.0
    %2010 = vmatpush1.msra.mxu0 0.0
    %2011 = vmatprep.subr.mxu0 0.0
    %2012 = vmatpush1.msra.mxu0 0.0
    %2013 = vmatprep.subr.mxu0 0.0
    %2014 = vmatpush1.msra.mxu0 0.0
    %2015 = vmatprep.subr.mxu0 0.0
    %2016 = vmatpush1.msra.mxu0 0.0
    %2017 = vmatprep.subr.mxu0 0.0
    %2018 = vmatpush1.msra.mxu0 0.0
    %2019 = vmatprep.subr.mxu0 0.0
    %2020 = vmatpush1.msra.mxu0 0.0
    %2021 = vmatprep.subr.mxu0 0.0
    %2022 = vmatpush1.msra.mxu0 0.0
    %2023 = vmatprep.subr.mxu0 0.0
    %2024 = vmatpush1.msra.mxu0 0.0
    %2025 = vmatprep.subr.mxu0 0.0
    %2026 = vmatpush1.msra.mxu0 0.0
    %2027 = vmatprep.subr.mxu0 0.0
    %2028 = vmatpush1.msra.mxu0 0.0
    %2029 = vmatprep.subr.mxu0 0.0
    %2030 = vmatpush1.msra.mxu0 0.0
    %2031 = vmatprep.subr.mxu0 0.0
    %2032 = vmatpush1.msra.mxu0 0.0
    %2033 = vmatprep.subr.mxu0 0.0
    %2034 = vmatpush1.msra.mxu0 0.0
    %2035 = vmatprep.subr.mxu0 0.0
    %2036 = vmatpush1.msra.mxu0 0.0
    %2037 = vmatprep.subr.mxu0 0.0
    %2038 = vmatpush1.msra.mxu0 0.0
    %2039 = vmatprep.subr.mxu0 0.0
    %2040 = vmatpush1.msra.mxu0 0.0
    %2041 = vmatprep.subr.mxu0 0.0
    %2042 = vmatpush1.msra.mxu0 0.0
    %2043 = vmatprep.subr.mxu0 0.0
    %2044 = vmatpush1.msra.mxu0 0.0
    %2045 = vmatprep.mubr.f32.mxu0 0.0
    %2046 = vmatmul.mubr.f32.gmra.mrb[0].mxu0 %v1979
    %v2047 = vpop.f32.mrb[0].mxu0
    %v2048 = vadd.f32 0.0, %v2047
    %v2049 = vpop.f32.mrb[0].mxu0
    %2050 = vdwg.mxu0
    %v2051 = vadd.f32 %v1977, %v2048
    %v2052 = vtanh.pop %v2051
    %2053 = vst.msk [vmem:[#allocation3 + $0xc] sm:$0x3] %vm241, %v2052
    %v2054 = vld [vmem:[#allocation2 + $0xe] sm:$0x3]
    %v2056 = vsel %vm156, %v2052, 0
    %2058 = vmatprep.subr.mxu0 0.0
    %2059 = vmatpush1.msra.mxu0 %v1514
    %2060 = vmatprep.subr.mxu0 0.0
    %2061 = vmatpush1.msra.mxu0 %v1515
    %2062 = vmatprep.subr.mxu0 0.0
    %2063 = vmatpush1.msra.mxu0 %v1516
    %2064 = vmatprep.subr.mxu0 0.0
    %2065 = vmatpush1.msra.mxu0 %v1517
    %2066 = vmatprep.subr.mxu0 0.0
    %2067 = vmatpush1.msra.mxu0 0.0
    %2068 = vmatprep.subr.mxu0 0.0
    %2069 = vmatpush1.msra.mxu0 0.0
    %2070 = vmatprep.subr.mxu0 0.0
    %2071 = vmatpush1.msra.mxu0 0.0
    %2072 = vmatprep.subr.mxu0 0.0
    %2073 = vmatpush1.msra.mxu0 0.0
    %2074 = vmatprep.subr.mxu0 0.0
    %2075 = vmatpush1.msra.mxu0 0.0
    %2076 = vmatprep.subr.mxu0 0.0
    %2077 = vmatpush1.msra.mxu0 0.0
    %2078 = vmatprep.subr.mxu0 0.0
    %2079 = vmatpush1.msra.mxu0 0.0
    %2080 = vmatprep.subr.mxu0 0.0
    %2081 = vmatpush1.msra.mxu0 0.0
    %2082 = vmatprep.subr.mxu0 0.0
    %2083 = vmatpush1.msra.mxu0 0.0
    %2084 = vmatprep.subr.mxu0 0.0
    %2085 = vmatpush1.msra.mxu0 0.0
    %2086 = vmatprep.subr.mxu0 0.0
    %2087 = vmatpush1.msra.mxu0 0.0
    %2088 = vmatprep.subr.mxu0 0.0
    %2089 = vmatpush1.msra.mxu0 0.0
    %2090 = vmatprep.subr.mxu0 0.0
    %2091 = vmatpush1.msra.mxu0 0.0
    %2092 = vmatprep.subr.mxu0 0.0
    %2093 = vmatpush1.msra.mxu0 0.0
    %2094 = vmatprep.subr.mxu0 0.0
    %2095 = vmatpush1.msra.mxu0 0.0
    %2096 = vmatprep.subr.mxu0 0.0
    %2097 = vmatpush1.msra.mxu0 0.0
    %2098 = vmatprep.subr.mxu0 0.0
    %2099 = vmatpush1.msra.mxu0 0.0
    %2100 = vmatprep.subr.mxu0 0.0
    %2101 = vmatpush1.msra.mxu0 0.0
    %2102 = vmatprep.subr.mxu0 0.0
    %2103 = vmatpush1.msra.mxu0 0.0
    %2104 = vmatprep.subr.mxu0 0.0
    %2105 = vmatpush1.msra.mxu0 0.0
    %2106 = vmatprep.subr.mxu0 0.0
    %2107 = vmatpush1.msra.mxu0 0.0
    %2108 = vmatprep.subr.mxu0 0.0
    %2109 = vmatpush1.msra.mxu0 0.0
    %2110 = vmatprep.subr.mxu0 0.0
    %2111 = vmatpush1.msra.mxu0 0.0
    %2112 = vmatprep.subr.mxu0 0.0
    %2113 = vmatpush1.msra.mxu0 0.0
    %2114 = vmatprep.subr.mxu0 0.0
    %2115 = vmatpush1.msra.mxu0 0.0
    %2116 = vmatprep.subr.mxu0 0.0
    %2117 = vmatpush1.msra.mxu0 0.0
    %2118 = vmatprep.subr.mxu0 0.0
    %2119 = vmatpush1.msra.mxu0 0.0
    %2120 = vmatprep.subr.mxu0 0.0
    %2121 = vmatpush1.msra.mxu0 0.0
    %2122 = vmatprep.mubr.f32.mxu0 0.0
    %2123 = vmatmul.mubr.f32.gmra.mrb[0].mxu0 %v2056
    %v2124 = vpop.f32.mrb[0].mxu0
    %v2125 = vadd.f32 0.0, %v2124
    %v2126 = vpop.f32.mrb[0].mxu0
    %2127 = vdwg.mxu0
    %v2128 = vadd.f32 %v2054, %v2125
    %v2129 = vtanh.pop %v2128
    %2130 = vst.msk [vmem:[#allocation3 + $0xe] sm:$0x3] %vm241, %v2129
    %v2131 = vld [vmem:[#allocation2 + $0x10] sm:$0x3]
    %v2133 = vsel %vm156, %v2129, 0
    %2135 = vmatprep.subr.mxu0 0.0
    %2136 = vmatpush1.msra.mxu0 %v1514
    %2137 = vmatprep.subr.mxu0 0.0
    %2138 = vmatpush1.msra.mxu0 %v1515
    %2139 = vmatprep.subr.mxu0 0.0
    %2140 = vmatpush1.msra.mxu0 %v1516
    %2141 = vmatprep.subr.mxu0 0.0
    %2142 = vmatpush1.msra.mxu0 %v1517
    %2143 = vmatprep.subr.mxu0 0.0
    %2144 = vmatpush1.msra.mxu0 0.0
    %2145 = vmatprep.subr.mxu0 0.0
    %2146 = vmatpush1.msra.mxu0 0.0
    %2147 = vmatprep.subr.mxu0 0.0
    %2148 = vmatpush1.msra.mxu0 0.0
    %2149 = vmatprep.subr.mxu0 0.0
    %2150 = vmatpush1.msra.mxu0 0.0
    %2151 = vmatprep.subr.mxu0 0.0
    %2152 = vmatpush1.msra.mxu0 0.0
    %2153 = vmatprep.subr.mxu0 0.0
    %2154 = vmatpush1.msra.mxu0 0.0
    %2155 = vmatprep.subr.mxu0 0.0
    %2156 = vmatpush1.msra.mxu0 0.0
    %2157 = vmatprep.subr.mxu0 0.0
    %2158 = vmatpush1.msra.mxu0 0.0
    %2159 = vmatprep.subr.mxu0 0.0
    %2160 = vmatpush1.msra.mxu0 0.0
    %2161 = vmatprep.subr.mxu0 0.0
    %2162 = vmatpush1.msra.mxu0 0.0
    %2163 = vmatprep.subr.mxu0 0.0
    %2164 = vmatpush1.msra.mxu0 0.0
    %2165 = vmatprep.subr.mxu0 0.0
    %2166 = vmatpush1.msra.mxu0 0.0
    %2167 = vmatprep.subr.mxu0 0.0
    %2168 = vmatpush1.msra.mxu0 0.0
    %2169 = vmatprep.subr.mxu0 0.0
    %2170 = vmatpush1.msra.mxu0 0.0
    %2171 = vmatprep.subr.mxu0 0.0
    %2172 = vmatpush1.msra.mxu0 0.0
    %2173 = vmatprep.subr.mxu0 0.0
    %2174 = vmatpush1.msra.mxu0 0.0
    %2175 = vmatprep.subr.mxu0 0.0
    %2176 = vmatpush1.msra.mxu0 0.0
    %2177 = vmatprep.subr.mxu0 0.0
    %2178 = vmatpush1.msra.mxu0 0.0
    %2179 = vmatprep.subr.mxu0 0.0
    %2180 = vmatpush1.msra.mxu0 0.0
    %2181 = vmatprep.subr.mxu0 0.0
    %2182 = vmatpush1.msra.mxu0 0.0
    %2183 = vmatprep.subr.mxu0 0.0
    %2184 = vmatpush1.msra.mxu0 0.0
    %2185 = vmatprep.subr.mxu0 0.0
    %2186 = vmatpush1.msra.mxu0 0.0
    %2187 = vmatprep.subr.mxu0 0.0
    %2188 = vmatpush1.msra.mxu0 0.0
    %2189 = vmatprep.subr.mxu0 0.0
    %2190 = vmatpush1.msra.mxu0 0.0
    %2191 = vmatprep.subr.mxu0 0.0
    %2192 = vmatpush1.msra.mxu0 0.0
    %2193 = vmatprep.subr.mxu0 0.0
    %2194 = vmatpush1.msra.mxu0 0.0
    %2195 = vmatprep.subr.mxu0 0.0
    %2196 = vmatpush1.msra.mxu0 0.0
    %2197 = vmatprep.subr.mxu0 0.0
    %2198 = vmatpush1.msra.mxu0 0.0
    %2199 = vmatprep.mubr.f32.mxu0 0.0
    %2200 = vmatmul.mubr.f32.gmra.mrb[0].mxu0 %v2133
    %v2201 = vpop.f32.mrb[0].mxu0
    %v2202 = vadd.f32 0.0, %v2201
    %v2203 = vpop.f32.mrb[0].mxu0
    %2204 = vdwg.mxu0
    %v2205 = vadd.f32 %v2131, %v2202
    %v2206 = vtanh.pop %v2205
    %2207 = vst.msk [vmem:[#allocation3 + $0x10] sm:$0x3] %vm241, %v2206
    %v2208 = vld [vmem:[#allocation2 + $0x12] sm:$0x3]
    %v2210 = vsel %vm156, %v2206, 0
    %2212 = vmatprep.subr.mxu0 0.0
    %2213 = vmatpush1.msra.mxu0 %v1514
    %2214 = vmatprep.subr.mxu0 0.0
    %2215 = vmatpush1.msra.mxu0 %v1515
    %2216 = vmatprep.subr.mxu0 0.0
    %2217 = vmatpush1.msra.mxu0 %v1516
    %2218 = vmatprep.subr.mxu0 0.0
    %2219 = vmatpush1.msra.mxu0 %v1517
    %2220 = vmatprep.subr.mxu0 0.0
    %2221 = vmatpush1.msra.mxu0 0.0
    %2222 = vmatprep.subr.mxu0 0.0
    %2223 = vmatpush1.msra.mxu0 0.0
    %2224 = vmatprep.subr.mxu0 0.0
    %2225 = vmatpush1.msra.mxu0 0.0
    %2226 = vmatprep.subr.mxu0 0.0
    %2227 = vmatpush1.msra.mxu0 0.0
    %2228 = vmatprep.subr.mxu0 0.0
    %2229 = vmatpush1.msra.mxu0 0.0
    %2230 = vmatprep.subr.mxu0 0.0
    %2231 = vmatpush1.msra.mxu0 0.0
    %2232 = vmatprep.subr.mxu0 0.0
    %2233 = vmatpush1.msra.mxu0 0.0
    %2234 = vmatprep.subr.mxu0 0.0
    %2235 = vmatpush1.msra.mxu0 0.0
    %2236 = vmatprep.subr.mxu0 0.0
    %2237 = vmatpush1.msra.mxu0 0.0
    %2238 = vmatprep.subr.mxu0 0.0
    %2239 = vmatpush1.msra.mxu0 0.0
    %2240 = vmatprep.subr.mxu0 0.0
    %2241 = vmatpush1.msra.mxu0 0.0
    %2242 = vmatprep.subr.mxu0 0.0
    %2243 = vmatpush1.msra.mxu0 0.0
    %2244 = vmatprep.subr.mxu0 0.0
    %2245 = vmatpush1.msra.mxu0 0.0
    %2246 = vmatprep.subr.mxu0 0.0
    %2247 = vmatpush1.msra.mxu0 0.0
    %2248 = vmatprep.subr.mxu0 0.0
    %2249 = vmatpush1.msra.mxu0 0.0
    %2250 = vmatprep.subr.mxu0 0.0
    %2251 = vmatpush1.msra.mxu0 0.0
    %2252 = vmatprep.subr.mxu0 0.0
    %2253 = vmatpush1.msra.mxu0 0.0
    %2254 = vmatprep.subr.mxu0 0.0
    %2255 = vmatpush1.msra.mxu0 0.0
    %2256 = vmatprep.subr.mxu0 0.0
    %2257 = vmatpush1.msra.mxu0 0.0
    %2258 = vmatprep.subr.mxu0 0.0
    %2259 = vmatpush1.msra.mxu0 0.0
    %2260 = vmatprep.subr.mxu0 0.0
    %2261 = vmatpush1.msra.mxu0 0.0
    %2262 = vmatprep.subr.mxu0 0.0
    %2263 = vmatpush1.msra.mxu0 0.0
    %2264 = vmatprep.subr.mxu0 0.0
    %2265 = vmatpush1.msra.mxu0 0.0
    %2266 = vmatprep.subr.mxu0 0.0
    %2267 = vmatpush1.msra.mxu0 0.0
    %2268 = vmatprep.subr.mxu0 0.0
    %2269 = vmatpush1.msra.mxu0 0.0
    %2270 = vmatprep.subr.mxu0 0.0
    %2271 = vmatpush1.msra.mxu0 0.0
    %2272 = vmatprep.subr.mxu0 0.0
    %2273 = vmatpush1.msra.mxu0 0.0
    %2274 = vmatprep.subr.mxu0 0.0
    %2275 = vmatpush1.msra.mxu0 0.0
    %2276 = vmatprep.mubr.f32.mxu0 0.0
    %2277 = vmatmul.mubr.f32.gmra.mrb[0].mxu0 %v2210
    %v2278 = vpop.f32.mrb[0].mxu0
    %v2279 = vadd.f32 0.0, %v2278
    %v2280 = vpop.f32.mrb[0].mxu0
    %2281 = vdwg.mxu0
    %v2282 = vadd.f32 %v2208, %v2279
    %v2283 = vtanh.pop %v2282
    %2284 = vst.msk [vmem:[#allocation3 + $0x12] sm:$0x3] %vm241, %v2283
    %v2285 = vld [vmem:[#allocation2 + $0x14] sm:$0x3]
    %v2287 = vsel %vm156, %v2283, 0
    %2289 = vmatprep.subr.mxu0 0.0
    %2290 = vmatpush1.msra.mxu0 %v1514
    %2291 = vmatprep.subr.mxu0 0.0
    %2292 = vmatpush1.msra.mxu0 %v1515
    %2293 = vmatprep.subr.mxu0 0.0
    %2294 = vmatpush1.msra.mxu0 %v1516
    %2295 = vmatprep.subr.mxu0 0.0
    %2296 = vmatpush1.msra.mxu0 %v1517
    %2297 = vmatprep.subr.mxu0 0.0
    %2298 = vmatpush1.msra.mxu0 0.0
    %2299 = vmatprep.subr.mxu0 0.0
    %2300 = vmatpush1.msra.mxu0 0.0
    %2301 = vmatprep.subr.mxu0 0.0
    %2302 = vmatpush1.msra.mxu0 0.0
    %2303 = vmatprep.subr.mxu0 0.0
    %2304 = vmatpush1.msra.mxu0 0.0
    %2305 = vmatprep.subr.mxu0 0.0
    %2306 = vmatpush1.msra.mxu0 0.0
    %2307 = vmatprep.subr.mxu0 0.0
    %2308 = vmatpush1.msra.mxu0 0.0
    %2309 = vmatprep.subr.mxu0 0.0
    %2310 = vmatpush1.msra.mxu0 0.0
    %2311 = vmatprep.subr.mxu0 0.0
    %2312 = vmatpush1.msra.mxu0 0.0
    %2313 = vmatprep.subr.mxu0 0.0
    %2314 = vmatpush1.msra.mxu0 0.0
    %2315 = vmatprep.subr.mxu0 0.0
    %2316 = vmatpush1.msra.mxu0 0.0
    %2317 = vmatprep.subr.mxu0 0.0
    %2318 = vmatpush1.msra.mxu0 0.0
    %2319 = vmatprep.subr.mxu0 0.0
    %2320 = vmatpush1.msra.mxu0 0.0
    %2321 = vmatprep.subr.mxu0 0.0
    %2322 = vmatpush1.msra.mxu0 0.0
    %2323 = vmatprep.subr.mxu0 0.0
    %2324 = vmatpush1.msra.mxu0 0.0
    %2325 = vmatprep.subr.mxu0 0.0
    %2326 = vmatpush1.msra.mxu0 0.0
    %2327 = vmatprep.subr.mxu0 0.0
    %2328 = vmatpush1.msra.mxu0 0.0
    %2329 = vmatprep.subr.mxu0 0.0
    %2330 = vmatpush1.msra.mxu0 0.0
    %2331 = vmatprep.subr.mxu0 0.0
    %2332 = vmatpush1.msra.mxu0 0.0
    %2333 = vmatprep.subr.mxu0 0.0
    %2334 = vmatpush1.msra.mxu0 0.0
    %2335 = vmatprep.subr.mxu0 0.0
    %2336 = vmatpush1.msra.mxu0 0.0
    %2337 = vmatprep.subr.mxu0 0.0
    %2338 = vmatpush1.msra.mxu0 0.0
    %2339 = vmatprep.subr.mxu0 0.0
    %2340 = vmatpush1.msra.mxu0 0.0
    %2341 = vmatprep.subr.mxu0 0.0
    %2342 = vmatpush1.msra.mxu0 0.0
    %2343 = vmatprep.subr.mxu0 0.0
    %2344 = vmatpush1.msra.mxu0 0.0
    %2345 = vmatprep.subr.mxu0 0.0
    %2346 = vmatpush1.msra.mxu0 0.0
    %2347 = vmatprep.subr.mxu0 0.0
    %2348 = vmatpush1.msra.mxu0 0.0
    %2349 = vmatprep.subr.mxu0 0.0
    %2350 = vmatpush1.msra.mxu0 0.0
    %2351 = vmatprep.subr.mxu0 0.0
    %2352 = vmatpush1.msra.mxu0 0.0
    %2353 = vmatprep.mubr.f32.mxu0 0.0
    %2354 = vmatmul.mubr.f32.gmra.mrb[0].mxu0 %v2287
    %v2355 = vpop.f32.mrb[0].mxu0
    %v2356 = vadd.f32 0.0, %v2355
    %v2357 = vpop.f32.mrb[0].mxu0
    %2358 = vdwg.mxu0
    %v2359 = vadd.f32 %v2285, %v2356
    %v2360 = vtanh.pop %v2359
    %2361 = vst.msk [vmem:[#allocation3 + $0x14] sm:$0x3] %vm241, %v2360
    %v2362 = vld [vmem:[#allocation2 + $0x16] sm:$0x3]
    %v2364 = vsel %vm156, %v2360, 0
    %2366 = vmatprep.subr.mxu0 0.0
    %2367 = vmatpush1.msra.mxu0 %v1514
    %2368 = vmatprep.subr.mxu0 0.0
    %2369 = vmatpush1.msra.mxu0 %v1515
    %2370 = vmatprep.subr.mxu0 0.0
    %2371 = vmatpush1.msra.mxu0 %v1516
    %2372 = vmatprep.subr.mxu0 0.0
    %2373 = vmatpush1.msra.mxu0 %v1517
    %2374 = vmatprep.subr.mxu0 0.0
    %2375 = vmatpush1.msra.mxu0 0.0
    %2376 = vmatprep.subr.mxu0 0.0
    %2377 = vmatpush1.msra.mxu0 0.0
    %2378 = vmatprep.subr.mxu0 0.0
    %2379 = vmatpush1.msra.mxu0 0.0
    %2380 = vmatprep.subr.mxu0 0.0
    %2381 = vmatpush1.msra.mxu0 0.0
    %2382 = vmatprep.subr.mxu0 0.0
    %2383 = vmatpush1.msra.mxu0 0.0
    %2384 = vmatprep.subr.mxu0 0.0
    %2385 = vmatpush1.msra.mxu0 0.0
    %2386 = vmatprep.subr.mxu0 0.0
    %2387 = vmatpush1.msra.mxu0 0.0
    %2388 = vmatprep.subr.mxu0 0.0
    %2389 = vmatpush1.msra.mxu0 0.0
    %2390 = vmatprep.subr.mxu0 0.0
    %2391 = vmatpush1.msra.mxu0 0.0
    %2392 = vmatprep.subr.mxu0 0.0
    %2393 = vmatpush1.msra.mxu0 0.0
    %2394 = vmatprep.subr.mxu0 0.0
    %2395 = vmatpush1.msra.mxu0 0.0
    %2396 = vmatprep.subr.mxu0 0.0
    %2397 = vmatpush1.msra.mxu0 0.0
    %2398 = vmatprep.subr.mxu0 0.0
    %2399 = vmatpush1.msra.mxu0 0.0
    %2400 = vmatprep.subr.mxu0 0.0
    %2401 = vmatpush1.msra.mxu0 0.0
    %2402 = vmatprep.subr.mxu0 0.0
    %2403 = vmatpush1.msra.mxu0 0.0
    %2404 = vmatprep.subr.mxu0 0.0
    %2405 = vmatpush1.msra.mxu0 0.0
    %2406 = vmatprep.subr.mxu0 0.0
    %2407 = vmatpush1.msra.mxu0 0.0
    %2408 = vmatprep.subr.mxu0 0.0
    %2409 = vmatpush1.msra.mxu0 0.0
    %2410 = vmatprep.subr.mxu0 0.0
    %2411 = vmatpush1.msra.mxu0 0.0
    %2412 = vmatprep.subr.mxu0 0.0
    %2413 = vmatpush1.msra.mxu0 0.0
    %2414 = vmatprep.subr.mxu0 0.0
    %2415 = vmatpush1.msra.mxu0 0.0
    %2416 = vmatprep.subr.mxu0 0.0
    %2417 = vmatpush1.msra.mxu0 0.0
    %2418 = vmatprep.subr.mxu0 0.0
    %2419 = vmatpush1.msra.mxu0 0.0
    %2420 = vmatprep.subr.mxu0 0.0
    %2421 = vmatpush1.msra.mxu0 0.0
    %2422 = vmatprep.subr.mxu0 0.0
    %2423 = vmatpush1.msra.mxu0 0.0
    %2424 = vmatprep.subr.mxu0 0.0
    %2425 = vmatpush1.msra.mxu0 0.0
    %2426 = vmatprep.subr.mxu0 0.0
    %2427 = vmatpush1.msra.mxu0 0.0
    %2428 = vmatprep.subr.mxu0 0.0
    %2429 = vmatpush1.msra.mxu0 0.0
    %2430 = vmatprep.mubr.f32.mxu0 0.0
    %2431 = vmatmul.mubr.f32.gmra.mrb[0].mxu0 %v2364
    %v2432 = vpop.f32.mrb[0].mxu0
    %v2433 = vadd.f32 0.0, %v2432
    %v2434 = vpop.f32.mrb[0].mxu0
    %2435 = vdwg.mxu0
    %v2436 = vadd.f32 %v2362, %v2433
    %v2437 = vtanh.pop %v2436
    %2438 = vst.msk [vmem:[#allocation3 + $0x16] sm:$0x3] %vm241, %v2437
    %v2439 = vld [vmem:[#allocation2 + $0x18] sm:$0x3]
    %v2441 = vsel %vm156, %v2437, 0
    %2443 = vmatprep.subr.mxu0 0.0
    %2444 = vmatpush1.msra.mxu0 %v1514
    %2445 = vmatprep.subr.mxu0 0.0
    %2446 = vmatpush1.msra.mxu0 %v1515
    %2447 = vmatprep.subr.mxu0 0.0
    %2448 = vmatpush1.msra.mxu0 %v1516
    %2449 = vmatprep.subr.mxu0 0.0
    %2450 = vmatpush1.msra.mxu0 %v1517
    %2451 = vmatprep.subr.mxu0 0.0
    %2452 = vmatpush1.msra.mxu0 0.0
    %2453 = vmatprep.subr.mxu0 0.0
    %2454 = vmatpush1.msra.mxu0 0.0
    %2455 = vmatprep.subr.mxu0 0.0
    %2456 = vmatpush1.msra.mxu0 0.0
    %2457 = vmatprep.subr.mxu0 0.0
    %2458 = vmatpush1.msra.mxu0 0.0
    %2459 = vmatprep.subr.mxu0 0.0
    %2460 = vmatpush1.msra.mxu0 0.0
    %2461 = vmatprep.subr.mxu0 0.0
    %2462 = vmatpush1.msra.mxu0 0.0
    %2463 = vmatprep.subr.mxu0 0.0
    %2464 = vmatpush1.msra.mxu0 0.0
    %2465 = vmatprep.subr.mxu0 0.0
    %2466 = vmatpush1.msra.mxu0 0.0
    %2467 = vmatprep.subr.mxu0 0.0
    %2468 = vmatpush1.msra.mxu0 0.0
    %2469 = vmatprep.subr.mxu0 0.0
    %2470 = vmatpush1.msra.mxu0 0.0
    %2471 = vmatprep.subr.mxu0 0.0
    %2472 = vmatpush1.msra.mxu0 0.0
    %2473 = vmatprep.subr.mxu0 0.0
    %2474 = vmatpush1.msra.mxu0 0.0
    %2475 = vmatprep.subr.mxu0 0.0
    %2476 = vmatpush1.msra.mxu0 0.0
    %2477 = vmatprep.subr.mxu0 0.0
    %2478 = vmatpush1.msra.mxu0 0.0
    %2479 = vmatprep.subr.mxu0 0.0
    %2480 = vmatpush1.msra.mxu0 0.0
    %2481 = vmatprep.subr.mxu0 0.0
    %2482 = vmatpush1.msra.mxu0 0.0
    %2483 = vmatprep.subr.mxu0 0.0
    %2484 = vmatpush1.msra.mxu0 0.0
    %2485 = vmatprep.subr.mxu0 0.0
    %2486 = vmatpush1.msra.mxu0 0.0
    %2487 = vmatprep.subr.mxu0 0.0
    %2488 = vmatpush1.msra.mxu0 0.0
    %2489 = vmatprep.subr.mxu0 0.0
    %2490 = vmatpush1.msra.mxu0 0.0
    %2491 = vmatprep.subr.mxu0 0.0
    %2492 = vmatpush1.msra.mxu0 0.0
    %2493 = vmatprep.subr.mxu0 0.0
    %2494 = vmatpush1.msra.mxu0 0.0
    %2495 = vmatprep.subr.mxu0 0.0
    %2496 = vmatpush1.msra.mxu0 0.0
    %2497 = vmatprep.subr.mxu0 0.0
    %2498 = vmatpush1.msra.mxu0 0.0
    %2499 = vmatprep.subr.mxu0 0.0
    %2500 = vmatpush1.msra.mxu0 0.0
    %2501 = vmatprep.subr.mxu0 0.0
    %2502 = vmatpush1.msra.mxu0 0.0
    %2503 = vmatprep.subr.mxu0 0.0
    %2504 = vmatpush1.msra.mxu0 0.0
    %2505 = vmatprep.subr.mxu0 0.0
    %2506 = vmatpush1.msra.mxu0 0.0
    %2507 = vmatprep.mubr.f32.mxu0 0.0
    %2508 = vmatmul.mubr.f32.gmra.mrb[0].mxu0 %v2441
    %v2509 = vpop.f32.mrb[0].mxu0
    %v2510 = vadd.f32 0.0, %v2509
    %v2511 = vpop.f32.mrb[0].mxu0
    %2512 = vdwg.mxu0
    %v2513 = vadd.f32 %v2439, %v2510
    %v2514 = vtanh.pop %v2513
    %2515 = vst.msk [vmem:[#allocation3 + $0x18] sm:$0x3] %vm241, %v2514
    %v2516 = vld [vmem:[#allocation2 + $0x1a] sm:$0x3]
    %v2518 = vsel %vm156, %v2514, 0
    %2520 = vmatprep.subr.mxu0 0.0
    %2521 = vmatpush1.msra.mxu0 %v1514
    %2522 = vmatprep.subr.mxu0 0.0
    %2523 = vmatpush1.msra.mxu0 %v1515
    %2524 = vmatprep.subr.mxu0 0.0
    %2525 = vmatpush1.msra.mxu0 %v1516
    %2526 = vmatprep.subr.mxu0 0.0
    %2527 = vmatpush1.msra.mxu0 %v1517
    %2528 = vmatprep.subr.mxu0 0.0
    %2529 = vmatpush1.msra.mxu0 0.0
    %2530 = vmatprep.subr.mxu0 0.0
    %2531 = vmatpush1.msra.mxu0 0.0
    %2532 = vmatprep.subr.mxu0 0.0
    %2533 = vmatpush1.msra.mxu0 0.0
    %2534 = vmatprep.subr.mxu0 0.0
    %2535 = vmatpush1.msra.mxu0 0.0
    %2536 = vmatprep.subr.mxu0 0.0
    %2537 = vmatpush1.msra.mxu0 0.0
    %2538 = vmatprep.subr.mxu0 0.0
    %2539 = vmatpush1.msra.mxu0 0.0
    %2540 = vmatprep.subr.mxu0 0.0
    %2541 = vmatpush1.msra.mxu0 0.0
    %2542 = vmatprep.subr.mxu0 0.0
    %2543 = vmatpush1.msra.mxu0 0.0
    %2544 = vmatprep.subr.mxu0 0.0
    %2545 = vmatpush1.msra.mxu0 0.0
    %2546 = vmatprep.subr.mxu0 0.0
    %2547 = vmatpush1.msra.mxu0 0.0
    %2548 = vmatprep.subr.mxu0 0.0
    %2549 = vmatpush1.msra.mxu0 0.0
    %2550 = vmatprep.subr.mxu0 0.0
    %2551 = vmatpush1.msra.mxu0 0.0
    %2552 = vmatprep.subr.mxu0 0.0
    %2553 = vmatpush1.msra.mxu0 0.0
    %2554 = vmatprep.subr.mxu0 0.0
    %2555 = vmatpush1.msra.mxu0 0.0
    %2556 = vmatprep.subr.mxu0 0.0
    %2557 = vmatpush1.msra.mxu0 0.0
    %2558 = vmatprep.subr.mxu0 0.0
    %2559 = vmatpush1.msra.mxu0 0.0
    %2560 = vmatprep.subr.mxu0 0.0
    %2561 = vmatpush1.msra.mxu0 0.0
    %2562 = vmatprep.subr.mxu0 0.0
    %2563 = vmatpush1.msra.mxu0 0.0
    %2564 = vmatprep.subr.mxu0 0.0
    %2565 = vmatpush1.msra.mxu0 0.0
    %2566 = vmatprep.subr.mxu0 0.0
    %2567 = vmatpush1.msra.mxu0 0.0
    %2568 = vmatprep.subr.mxu0 0.0
    %2569 = vmatpush1.msra.mxu0 0.0
    %2570 = vmatprep.subr.mxu0 0.0
    %2571 = vmatpush1.msra.mxu0 0.0
    %2572 = vmatprep.subr.mxu0 0.0
    %2573 = vmatpush1.msra.mxu0 0.0
    %2574 = vmatprep.subr.mxu0 0.0
    %2575 = vmatpush1.msra.mxu0 0.0
    %2576 = vmatprep.subr.mxu0 0.0
    %2577 = vmatpush1.msra.mxu0 0.0
    %2578 = vmatprep.subr.mxu0 0.0
    %2579 = vmatpush1.msra.mxu0 0.0
    %2580 = vmatprep.subr.mxu0 0.0
    %2581 = vmatpush1.msra.mxu0 0.0
    %2582 = vmatprep.subr.mxu0 0.0
    %2583 = vmatpush1.msra.mxu0 0.0
    %2584 = vmatprep.mubr.f32.mxu0 0.0
    %2585 = vmatmul.mubr.f32.gmra.mrb[0].mxu0 %v2518
    %v2586 = vpop.f32.mrb[0].mxu0
    %v2587 = vadd.f32 0.0, %v2586
    %v2588 = vpop.f32.mrb[0].mxu0
    %2589 = vdwg.mxu0
    %v2590 = vadd.f32 %v2516, %v2587
    %v2591 = vtanh.pop %v2590
    %2592 = vst.msk [vmem:[#allocation3 + $0x1a] sm:$0x3] %vm241, %v2591
    %v2593 = vld [vmem:[#allocation2 + $0x1c] sm:$0x3]
    %v2595 = vsel %vm156, %v2591, 0
    %2597 = vmatprep.subr.mxu0 0.0
    %2598 = vmatpush1.msra.mxu0 %v1514
    %2599 = vmatprep.subr.mxu0 0.0
    %2600 = vmatpush1.msra.mxu0 %v1515
    %2601 = vmatprep.subr.mxu0 0.0
    %2602 = vmatpush1.msra.mxu0 %v1516
    %2603 = vmatprep.subr.mxu0 0.0
    %2604 = vmatpush1.msra.mxu0 %v1517
    %2605 = vmatprep.subr.mxu0 0.0
    %2606 = vmatpush1.msra.mxu0 0.0
    %2607 = vmatprep.subr.mxu0 0.0
    %2608 = vmatpush1.msra.mxu0 0.0
    %2609 = vmatprep.subr.mxu0 0.0
    %2610 = vmatpush1.msra.mxu0 0.0
    %2611 = vmatprep.subr.mxu0 0.0
    %2612 = vmatpush1.msra.mxu0 0.0
    %2613 = vmatprep.subr.mxu0 0.0
    %2614 = vmatpush1.msra.mxu0 0.0
    %2615 = vmatprep.subr.mxu0 0.0
    %2616 = vmatpush1.msra.mxu0 0.0
    %2617 = vmatprep.subr.mxu0 0.0
    %2618 = vmatpush1.msra.mxu0 0.0
    %2619 = vmatprep.subr.mxu0 0.0
    %2620 = vmatpush1.msra.mxu0 0.0
    %2621 = vmatprep.subr.mxu0 0.0
    %2622 = vmatpush1.msra.mxu0 0.0
    %2623 = vmatprep.subr.mxu0 0.0
    %2624 = vmatpush1.msra.mxu0 0.0
    %2625 = vmatprep.subr.mxu0 0.0
    %2626 = vmatpush1.msra.mxu0 0.0
    %2627 = vmatprep.subr.mxu0 0.0
    %2628 = vmatpush1.msra.mxu0 0.0
    %2629 = vmatprep.subr.mxu0 0.0
    %2630 = vmatpush1.msra.mxu0 0.0
    %2631 = vmatprep.subr.mxu0 0.0
    %2632 = vmatpush1.msra.mxu0 0.0
    %2633 = vmatprep.subr.mxu0 0.0
    %2634 = vmatpush1.msra.mxu0 0.0
    %2635 = vmatprep.subr.mxu0 0.0
    %2636 = vmatpush1.msra.mxu0 0.0
    %2637 = vmatprep.subr.mxu0 0.0
    %2638 = vmatpush1.msra.mxu0 0.0
    %2639 = vmatprep.subr.mxu0 0.0
    %2640 = vmatpush1.msra.mxu0 0.0
    %2641 = vmatprep.subr.mxu0 0.0
    %2642 = vmatpush1.msra.mxu0 0.0
    %2643 = vmatprep.subr.mxu0 0.0
    %2644 = vmatpush1.msra.mxu0 0.0
    %2645 = vmatprep.subr.mxu0 0.0
    %2646 = vmatpush1.msra.mxu0 0.0
    %2647 = vmatprep.subr.mxu0 0.0
    %2648 = vmatpush1.msra.mxu0 0.0
    %2649 = vmatprep.subr.mxu0 0.0
    %2650 = vmatpush1.msra.mxu0 0.0
    %2651 = vmatprep.subr.mxu0 0.0
    %2652 = vmatpush1.msra.mxu0 0.0
    %2653 = vmatprep.subr.mxu0 0.0
    %2654 = vmatpush1.msra.mxu0 0.0
    %2655 = vmatprep.subr.mxu0 0.0
    %2656 = vmatpush1.msra.mxu0 0.0
    %2657 = vmatprep.subr.mxu0 0.0
    %2658 = vmatpush1.msra.mxu0 0.0
    %2659 = vmatprep.subr.mxu0 0.0
    %2660 = vmatpush1.msra.mxu0 0.0
    %2661 = vmatprep.mubr.f32.mxu0 0.0
    %2662 = vmatmul.mubr.f32.gmra.mrb[0].mxu0 %v2595
    %v2663 = vpop.f32.mrb[0].mxu0
    %v2664 = vadd.f32 0.0, %v2663
    %v2665 = vpop.f32.mrb[0].mxu0
    %2666 = vdwg.mxu0
    %v2667 = vadd.f32 %v2593, %v2664
    %v2668 = vtanh.pop %v2667
    %2669 = vst.msk [vmem:[#allocation3 + $0x1c] sm:$0x3] %vm241, %v2668
    %v2670 = vld [vmem:[#allocation2 + $0x1e] sm:$0x3]
    %v2672 = vsel %vm156, %v2668, 0
    %2674 = vmatprep.subr.mxu0 0.0
    %2675 = vmatpush1.msra.mxu0 %v1514
    %2676 = vmatprep.subr.mxu0 0.0
    %2677 = vmatpush1.msra.mxu0 %v1515
    %2678 = vmatprep.subr.mxu0 0.0
    %2679 = vmatpush1.msra.mxu0 %v1516
    %2680 = vmatprep.subr.mxu0 0.0
    %2681 = vmatpush1.msra.mxu0 %v1517
    %2682 = vmatprep.subr.mxu0 0.0
    %2683 = vmatpush1.msra.mxu0 0.0
    %2684 = vmatprep.subr.mxu0 0.0
    %2685 = vmatpush1.msra.mxu0 0.0
    %2686 = vmatprep.subr.mxu0 0.0
    %2687 = vmatpush1.msra.mxu0 0.0
    %2688 = vmatprep.subr.mxu0 0.0
    %2689 = vmatpush1.msra.mxu0 0.0
    %2690 = vmatprep.subr.mxu0 0.0
    %2691 = vmatpush1.msra.mxu0 0.0
    %2692 = vmatprep.subr.mxu0 0.0
    %2693 = vmatpush1.msra.mxu0 0.0
    %2694 = vmatprep.subr.mxu0 0.0
    %2695 = vmatpush1.msra.mxu0 0.0
    %2696 = vmatprep.subr.mxu0 0.0
    %2697 = vmatpush1.msra.mxu0 0.0
    %2698 = vmatprep.subr.mxu0 0.0
    %2699 = vmatpush1.msra.mxu0 0.0
    %2700 = vmatprep.subr.mxu0 0.0
    %2701 = vmatpush1.msra.mxu0 0.0
    %2702 = vmatprep.subr.mxu0 0.0
    %2703 = vmatpush1.msra.mxu0 0.0
    %2704 = vmatprep.subr.mxu0 0.0
    %2705 = vmatpush1.msra.mxu0 0.0
    %2706 = vmatprep.subr.mxu0 0.0
    %2707 = vmatpush1.msra.mxu0 0.0
    %2708 = vmatprep.subr.mxu0 0.0
    %2709 = vmatpush1.msra.mxu0 0.0
    %2710 = vmatprep.subr.mxu0 0.0
    %2711 = vmatpush1.msra.mxu0 0.0
    %2712 = vmatprep.subr.mxu0 0.0
    %2713 = vmatpush1.msra.mxu0 0.0
    %2714 = vmatprep.subr.mxu0 0.0
    %2715 = vmatpush1.msra.mxu0 0.0
    %2716 = vmatprep.subr.mxu0 0.0
    %2717 = vmatpush1.msra.mxu0 0.0
    %2718 = vmatprep.subr.mxu0 0.0
    %2719 = vmatpush1.msra.mxu0 0.0
    %2720 = vmatprep.subr.mxu0 0.0
    %2721 = vmatpush1.msra.mxu0 0.0
    %2722 = vmatprep.subr.mxu0 0.0
    %2723 = vmatpush1.msra.mxu0 0.0
    %2724 = vmatprep.subr.mxu0 0.0
    %2725 = vmatpush1.msra.mxu0 0.0
    %2726 = vmatprep.subr.mxu0 0.0
    %2727 = vmatpush1.msra.mxu0 0.0
    %2728 = vmatprep.subr.mxu0 0.0
    %2729 = vmatpush1.msra.mxu0 0.0
    %2730 = vmatprep.subr.mxu0 0.0
    %2731 = vmatpush1.msra.mxu0 0.0
    %2732 = vmatprep.subr.mxu0 0.0
    %2733 = vmatpush1.msra.mxu0 0.0
    %2734 = vmatprep.subr.mxu0 0.0
    %2735 = vmatpush1.msra.mxu0 0.0
    %2736 = vmatprep.subr.mxu0 0.0
    %2737 = vmatpush1.msra.mxu0 0.0
    %2738 = vmatprep.mubr.f32.mxu0 0.0
    %2739 = vmatmul.mubr.f32.gmra.mrb[0].mxu0 %v2672
    %v2740 = vpop.f32.mrb[0].mxu0
    %v2741 = vadd.f32 0.0, %v2740
    %v2742 = vpop.f32.mrb[0].mxu0
    %2743 = vdwg.mxu0
    %v2744 = vadd.f32 %v2670, %v2741
    %v2745 = vtanh.pop %v2744
    %2746 = vst.msk [vmem:[#allocation3 + $0x1e] sm:$0x3] %vm241, %v2745
    %v2747 = vld [vmem:[#allocation3 + $0x18] sm:$0xff]
    %v2748 = vld [vmem:[%s7] sm:$0xff]
    %v2749 = vld [vmem:[%s7 + $0x8] sm:$0xff]
    %v2750 = vld [vmem:[%s7 + $0x10] sm:$0xff]
    %v2751 = vld [vmem:[%s7 + $0x18] sm:$0xff]
    %v2752 = vld [vmem:[%s8] sm:$0x1]
    %v2754 = vlaneseq
    %v2755 = vshrl.u32 %v2754, 7
    %v2756 = vsub.s32 0, %v2755
    %v2757 = vrot.slane %v2752, %v2756
    %v2760 = vsel %vm156, %v2747, 0
    %2762 = vmatprep.subr.mxu0 0.0
    %2763 = vmatpush1.msra.mxu0 %v2748
    %2764 = vmatprep.subr.mxu0 0.0
    %2765 = vmatpush1.msra.mxu0 %v2749
    %2766 = vmatprep.subr.mxu0 0.0
    %2767 = vmatpush1.msra.mxu0 %v2750
    %2768 = vmatprep.subr.mxu0 0.0
    %2769 = vmatpush1.msra.mxu0 %v2751
    %2770 = vmatprep.subr.mxu0 0.0
    %2771 = vmatpush1.msra.mxu0 0.0
    %2772 = vmatprep.subr.mxu0 0.0
    %2773 = vmatpush1.msra.mxu0 0.0
    %2774 = vmatprep.subr.mxu0 0.0
    %2775 = vmatpush1.msra.mxu0 0.0
    %2776 = vmatprep.subr.mxu0 0.0
    %2777 = vmatpush1.msra.mxu0 0.0
    %2778 = vmatprep.subr.mxu0 0.0
    %2779 = vmatpush1.msra.mxu0 0.0
    %2780 = vmatprep.subr.mxu0 0.0
    %2781 = vmatpush1.msra.mxu0 0.0
    %2782 = vmatprep.subr.mxu0 0.0
    %2783 = vmatpush1.msra.mxu0 0.0
    %2784 = vmatprep.subr.mxu0 0.0
    %2785 = vmatpush1.msra.mxu0 0.0
    %2786 = vmatprep.subr.mxu0 0.0
    %2787 = vmatpush1.msra.mxu0 0.0
    %2788 = vmatprep.subr.mxu0 0.0
    %2789 = vmatpush1.msra.mxu0 0.0
    %2790 = vmatprep.subr.mxu0 0.0
    %2791 = vmatpush1.msra.mxu0 0.0
    %2792 = vmatprep.subr.mxu0 0.0
    %2793 = vmatpush1.msra.mxu0 0.0
    %2794 = vmatprep.subr.mxu0 0.0
    %2795 = vmatpush1.msra.mxu0 0.0
    %2796 = vmatprep.subr.mxu0 0.0
    %2797 = vmatpush1.msra.mxu0 0.0
    %2798 = vmatprep.subr.mxu0 0.0
    %2799 = vmatpush1.msra.mxu0 0.0
    %2800 = vmatprep.subr.mxu0 0.0
    %2801 = vmatpush1.msra.mxu0 0.0
    %2802 = vmatprep.subr.mxu0 0.0
    %2803 = vmatpush1.msra.mxu0 0.0
    %2804 = vmatprep.subr.mxu0 0.0
    %2805 = vmatpush1.msra.mxu0 0.0
    %2806 = vmatprep.subr.mxu0 0.0
    %2807 = vmatpush1.msra.mxu0 0.0
    %2808 = vmatprep.subr.mxu0 0.0
    %2809 = vmatpush1.msra.mxu0 0.0
    %2810 = vmatprep.subr.mxu0 0.0
    %2811 = vmatpush1.msra.mxu0 0.0
    %2812 = vmatprep.subr.mxu0 0.0
    %2813 = vmatpush1.msra.mxu0 0.0
    %2814 = vmatprep.subr.mxu0 0.0
    %2815 = vmatpush1.msra.mxu0 0.0
    %2816 = vmatprep.subr.mxu0 0.0
    %2817 = vmatpush1.msra.mxu0 0.0
    %2818 = vmatprep.subr.mxu0 0.0
    %2819 = vmatpush1.msra.mxu0 0.0
    %2820 = vmatprep.subr.mxu0 0.0
    %2821 = vmatpush1.msra.mxu0 0.0
    %2822 = vmatprep.subr.mxu0 0.0
    %2823 = vmatpush1.msra.mxu0 0.0
    %2824 = vmatprep.subr.mxu0 0.0
    %2825 = vmatpush1.msra.mxu0 0.0
    %2826 = vmatprep.mubr.f32.mxu0 0.0
    %2827 = vmatmul.mubr.f32.gmra.mrb[0].mxu0 %v2760
    %v2828 = vpop.f32.mrb[0].mxu0
    %v2829 = vadd.f32 %v2757, %v2828
    %v2830 = vpop.f32.mrb[0].mxu0
    %2831 = vdwg.mxu0
    %vm2832 = vcmask 31744
    %2833 = vst.msk [vmem:[%s9] sm:$0xff] %vm2832, %v2829
    // Predicated region
    $region42: #{tpu_custom_call.1} parent=1 // pred_check
      _
    $region43: #{tpu_custom_call.1} parent=1 // pred_check_branch
      %2835 = sbr.rel (0) target = $region45
    $region44: #{tpu_custom_call.1} parent=1 // pred_region
      _
    $region45: #{tpu_custom_call.1} parent=1 // pred_fallthru
      _
    // Predicated region
    $region46: #{tpu_custom_call.1} parent=1 // pred_check
      _
    $region47: #{tpu_custom_call.1} parent=1 // pred_check_branch
      %2837 = sbr.rel (0) target = $region49
    $region48: #{tpu_custom_call.1} parent=1 // pred_region
      _
    $region49: #{tpu_custom_call.1} parent=1 // pred_fallthru
      _
    %2838 = vsyncpa [#allocation5], 1

</llo_original>
